<compile_context>
chip_gen: v7x
topology: tpu7x:2x2x1
jax: 0.10.0
libtpu: 0.0.40
codegen_flags: <defaults>
</compile_context>

<pallas_src>
import math

import jax
import jax.numpy as jnp
from jax import lax
from jax.experimental import pallas as pl
from jax.experimental.pallas import tpu as pltpu


_LN_EPS = 1e-5          # torch.nn.TransformerEncoderLayer default layer_norm_eps
_NEG_INF = -1e30        # mask value for padded keys (underflows to 0 after exp)


def _round_up(x: int, m: int) -> int:
    return (x + m - 1) // m * m


def _erf_poly(x):
    """Abramowitz & Stegun 7.1.26 erf approximation (|err| < 1.5e-7).

    Matches PyTorch's exact (erf-based) F.gelu to ~1e-7 using only mul/add/exp.
    The divide is kept exact on purpose: an approx vrcp (~2^-12) would dominate
    the polynomial's 1.5e-7 error budget across stacked layers, and the exp()
    already occupies the EUP slot.
    """
    a1, a2, a3, a4, a5 = (0.254829592, -0.284496736, 1.421413741,
                          -1.453152027, 1.061405429)
    p = 0.3275911
    sign = jnp.where(x >= 0.0, 1.0, -1.0)
    ax = jnp.abs(x)
    t = 1.0 / (1.0 + p * ax)
    poly = ((((a5 * t + a4) * t + a3) * t + a2) * t + a1) * t
    return sign * (1.0 - poly * jnp.exp(-ax * ax))


def _gelu_exact(x):
    return 0.5 * x * (1.0 + _erf_poly(x * 0.7071067811865476))


def _layer_norm(x, gamma, beta):
    mu = jnp.mean(x, axis=-1, keepdims=True)
    xc = x - mu
    var = jnp.mean(xc * xc, axis=-1, keepdims=True)
    return xc * lax.rsqrt(var + _LN_EPS) * gamma + beta


def _resident_spec(shape):
    """Constant-block-index BlockSpec, single-buffered (block never changes)."""
    index_map = lambda i, _n=len(shape): (0,) * _n
    try:
        return pl.BlockSpec(shape, index_map, pipeline_mode=pl.Buffered(1))
    except (AttributeError, TypeError):
        # Older jax without pipeline_mode: fall back to default buffering.
        return pl.BlockSpec(shape, index_map)


# --------------------------------------------------------------------------
# Pre-pass: K/V projection of the whole padded sequence + cls attention row.
# --------------------------------------------------------------------------
def _make_prepass_kernel(S, S_pad, D, H):
    dh = D // H
    scale = 1.0 / math.sqrt(dh)

    def kernel(x_ref, wqkv_ref, bqkv_ref, k_ref, v_ref, attn_ref):
        x = x_ref[...]
        k = (jnp.dot(x, wqkv_ref[1], preferred_element_type=jnp.float32)
             + bqkv_ref[1].astype(jnp.float32))
        v = (jnp.dot(x, wqkv_ref[2], preferred_element_type=jnp.float32)
             + bqkv_ref[2].astype(jnp.float32))
        k_ref[...] = k.astype(k_ref.dtype)
        v_ref[...] = v.astype(v_ref.dtype)

        # Head-averaged attention row of the cls token (global row 0).
        # Use 8 query rows (sublane-aligned matmul shapes) and keep row 0.
        q_top = (jnp.dot(x[0:8, :], wqkv_ref[0],
                         preferred_element_type=jnp.float32)
                 + bqkv_ref[0].astype(jnp.float32)) * scale
        if S != S_pad:
            key_valid = lax.broadcasted_iota(jnp.int32, (1, S_pad), 1) < S
        attn_row = jnp.zeros((1, S_pad), jnp.float32)
        for h in range(H):
            cols = slice(h * dh, (h + 1) * dh)
            s_h = lax.dot_general(q_top[:, cols], k[:, cols],
                                  (((1,), (1,)), ((), ())),
                                  preferred_element_type=jnp.float32)
            if S != S_pad:
                s_h = jnp.where(key_valid, s_h, _NEG_INF)
            p = jnp.exp(s_h - jnp.max(s_h, axis=-1, keepdims=True))
            inv_l = 1.0 / jnp.sum(p, axis=-1, keepdims=True)
            attn_row = attn_row + (p * inv_l)[0:1, :]
        attn_ref[...] = (attn_row * (1.0 / H)).astype(attn_ref.dtype)

    return kernel


def _build_prepass_call(S, S_pad, D, H, dtype):
    kernel = _make_prepass_kernel(S, S_pad, D, H)
    itemsize = jnp.dtype(dtype).itemsize
    need = (itemsize * (3 * S_pad * D + 3 * D * D + 3 * D)
            + 4 * (2 * S_pad * D + 8 * D + 9 * S_pad))
    vmem_limit = min(max(2 * need, 8 << 20), 64 << 20)
    return pl.pallas_call(
        kernel,
        out_shape=(jax.ShapeDtypeStruct((S_pad, D), dtype),          # K
                   jax.ShapeDtypeStruct((S_pad, D), dtype),          # V
                   jax.ShapeDtypeStruct((1, S_pad), jnp.float32)),   # cls attn
        compiler_params=pltpu.CompilerParams(vmem_limit_bytes=vmem_limit),
    )


# --------------------------------------------------------------------------
# Main layer kernel: attention body + FFN over query-row tiles.
# --------------------------------------------------------------------------
def _make_layer_kernel(S, S_pad, TQ, D, dff, H):
    dh = D // H
    scale = 1.0 / math.sqrt(dh)
    # Single full-K output projection only when the per-head contexts can be
    # assembled lane-aligned; otherwise fold Wo per head (no in-kernel concat).
    consolidate_out_proj = (dh % 128 == 0)

    def kernel(x_ref, k_ref, v_ref, wq_ref, bq_ref, wo_ref, bo_ref,
               g1_ref, be1_ref, wf1_ref, bf1_ref, wf2_ref, bf2_ref,
               g2_ref, be2_ref, y_ref):
        i = pl.program_id(0)
        kv_dtype = k_ref.dtype

        row0 = pl.multiple_of(i * TQ, TQ)
        x_tile = x_ref[pl.ds(row0, TQ), :]
        x_tile_f32 = x_tile.astype(jnp.float32)

        # Q projection; PyTorch scales q (incl. bias) by 1/sqrt(head_dim).
        q = (jnp.dot(x_tile, wq_ref[...], preferred_element_type=jnp.float32)
             + bq_ref[...].astype(jnp.float32)) * scale
        q_op = q.astype(kv_dtype)      # no-op for f32 inputs

        if S != S_pad:
            key_valid = lax.broadcasted_iota(jnp.int32, (1, S_pad), 1) < S

        wo = wo_ref[...]
        ctx_heads = []
        attn_out = jnp.zeros((TQ, D), jnp.float32)
        for h in range(H):
            cols = slice(h * dh, (h + 1) * dh)
            kh = k_ref[:, cols]                          # (S_pad, dh)
            vh = v_ref[:, cols]                          # (S_pad, dh)
            # q @ k^T as a transposed-RHS contraction (no explicit .T / XLU).
            s_h = lax.dot_general(q_op[:, cols], kh, (((1,), (1,)), ((), ())),
                                  preferred_element_type=jnp.float32)
            if S != S_pad:
                s_h = jnp.where(key_valid, s_h, _NEG_INF)
            m = jnp.max(s_h, axis=-1, keepdims=True)
            p = jnp.exp(s_h - m)
            inv_l = 1.0 / jnp.sum(p, axis=-1, keepdims=True)   # exact, (TQ, 1)
            # Normalize AFTER the value matmul: a (TQ, dh) scale instead of a
            # (TQ, S_pad) divide (identical math, l is per-row).
            ctx_h = jnp.dot(p.astype(kv_dtype), vh,
                            preferred_element_type=jnp.float32) * inv_l
            if consolidate_out_proj:
                ctx_heads.append(ctx_h)
            else:
                # concat_h(ctx_h) @ Wo == sum_h ctx_h @ Wo[h*dh:(h+1)*dh, :]
                attn_out = attn_out + jnp.dot(
                    ctx_h.astype(kv_dtype), wo[cols, :],
                    preferred_element_type=jnp.float32)
        if consolidate_out_proj:
            ctx = jnp.concatenate(ctx_heads, axis=-1).astype(kv_dtype)
            attn_out = jnp.dot(ctx, wo, preferred_element_type=jnp.float32)
        attn_out = attn_out + bo_ref[...].astype(jnp.float32)
        # TODO(synk): attention / residual / FFN dropout are training-time only;
        # this kernel implements the eval forward (dropout == identity).

        # Residual + LayerNorm 1 (module uses the default norm_first=False).
        h1 = _layer_norm(x_tile_f32 + attn_out,
                         g1_ref[...].astype(jnp.float32),
                         be1_ref[...].astype(jnp.float32))

        # Feed-forward block: linear1 -> exact GELU -> linear2.
        ff = (jnp.dot(h1.astype(kv_dtype), wf1_ref[...],
                      preferred_element_type=jnp.float32)
              + bf1_ref[...].astype(jnp.float32))
        ff = _gelu_exact(ff)
        ff = (jnp.dot(ff.astype(kv_dtype), wf2_ref[...],
                      preferred_element_type=jnp.float32)
              + bf2_ref[...].astype(jnp.float32))

        y = _layer_norm(h1 + ff,
                        g2_ref[...].astype(jnp.float32),
                        be2_ref[...].astype(jnp.float32))
        y_ref[...] = y.astype(y_ref.dtype)

    return kernel


def _build_layer_call(S, S_pad, TQ, D, dff, H, dtype):
    n_tiles = S_pad // TQ
    kernel = _make_layer_kernel(S, S_pad, TQ, D, dff, H)

    grid_spec = pltpu.PrefetchScalarGridSpec(
        num_scalar_prefetch=0,
        grid=(n_tiles,),
        in_specs=[
            _resident_spec((S_pad, D)),                       # x (layer input)
            _resident_spec((S_pad, D)),                       # K (pre-pass)
            _resident_spec((S_pad, D)),                       # V (pre-pass)
            _resident_spec((D, D)), _resident_spec((1, D)),   # Wq / bq (in,out)
            _resident_spec((D, D)), _resident_spec((1, D)),   # out_proj W / b
            _resident_spec((1, D)), _resident_spec((1, D)),   # LayerNorm1 g / b
            _resident_spec((D, dff)), _resident_spec((1, dff)),  # FFN linear1
            _resident_spec((dff, D)), _resident_spec((1, D)),     # FFN linear2
            _resident_spec((1, D)), _resident_spec((1, D)),   # LayerNorm2 g / b
        ],
        out_specs=pl.BlockSpec((TQ, D), lambda i: (i, 0)),
    )

    itemsize = jnp.dtype(dtype).itemsize
    # VMEM requirement: single-buffered residents + double-buffered output tile
    # + f32 temporaries; 2x headroom for compiler scratch, capped at 64 MiB so
    # the request stays within v7x physical VMEM.
    resident_bytes = itemsize * (3 * S_pad * D + 2 * D * D + 2 * D * dff
                                 + 9 * D + dff)
    temp_bytes = 4 * (2 * TQ * S_pad + 2 * TQ * dff + 6 * TQ * D)
    need = resident_bytes + 2 * TQ * D * itemsize + temp_bytes
    vmem_limit = min(max(2 * need, 8 << 20), 64 << 20)
    # TODO(synk): stream K/V in key blocks (flash-style online softmax) once
    # 3*S_pad*D*itemsize + weights approaches the v7x 64 MiB budget.

    flops = int(4 * S_pad * D * D              # Q projection + output projection
                + 4 * S_pad * S_pad * D        # scores + context (all heads)
                + 4 * S_pad * D * dff)         # feed-forward
    transcendentals = int(H * S_pad * S_pad + S_pad * dff + 4 * S_pad)
    bytes_accessed = int(itemsize * (4 * S_pad * D
                                     + 2 * D * D + 2 * D * dff + 9 * D + dff))

    call = pl.pallas_call(
        kernel,
        out_shape=jax.ShapeDtypeStruct((S_pad, D), dtype),
        grid_spec=grid_spec,
        compiler_params=pltpu.CompilerParams(
            # No cross-iteration state (K/V and the cls attention row come from
            # the pre-pass), so the query-tile axis can shard across
            # TensorCores (v7x megacore); perf-neutral on v5e/v6e.
            dimension_semantics=("parallel",),
            vmem_limit_bytes=vmem_limit,
        ),
        cost_estimate=pl.CostEstimate(
            flops=flops,
            transcendentals=transcendentals,
            bytes_accessed=bytes_accessed,
        ),
    )

    def apply(x, k, v, p):
        return call(x, k, v,
                    p["w_qkv"][0], p["b_qkv"][0],
                    p["w_o"], p["b_o"],
                    p["ln1_g"], p["ln1_b"],
                    p["w_ff1"], p["b_ff1"], p["w_ff2"], p["b_ff2"],
                    p["ln2_g"], p["ln2_b"])

    return apply


# --------------------------------------------------------------------------
# Forward wrapper.
# --------------------------------------------------------------------------
def transformer_pooling_forward(features, params, num_heads):
    """Pallas forward of TransformerPooling (eval mode).

    features: (N, dim_representation) tile encodings.
    Returns (attention_weights (1, N), pooled_features (1, dim_representation)).
    """
    n_instances, D = features.shape
    assert D % num_heads == 0, "num_heads must divide dim_representation"
    dff = D    # module sets dim_feedforward = dim_representation

    cls = params["cls_token"].astype(features.dtype)
    x = jnp.concatenate([cls, features], axis=0)       # torch.vstack([...])
    S = n_instances + 1

    # Padding / tile policy: short bags run as one 8-aligned tile; longer bags
    # pad only to a multiple of 128 (not 256 -> at most ~127 dead rows) and
    # tile with TQ in {128, 256}.
    if S <= 128:
        S_pad = _round_up(S, 8)
        TQ = S_pad
    else:
        S_pad = _round_up(S, 128)
        TQ = 256 if S_pad % 256 == 0 else 128
    if S_pad != S:
        x = jnp.pad(x, ((0, S_pad - S), (0, 0)))

    # TODO(synk): for tiny D / S (like the __main__ demo) per-layer launch
    # overhead dominates; fuse all layers into one pallas_call (stacked
    # weights + a layer grid axis) or leave such sizes to plain XLA.
    prepass_call = _build_prepass_call(S, S_pad, D, num_heads, x.dtype)
    layer_call = _build_layer_call(S, S_pad, TQ, D, dff, num_heads, x.dtype)

    attn_row = None
    for layer_params in params["layers"]:
        k, v, attn_row = prepass_call(x, layer_params["w_qkv"],
                                      layer_params["b_qkv"])
        x = layer_call(x, k, v, layer_params)

    x = x[:S]
    pooled_features = x[0:1, :]                         # cls token row
    a_row = attn_row[0, :S]                             # (S,)
    attention_weights = a_row[1:][None, :] + a_row[0] / n_instances
    return attention_weights, pooled_features


# --------------------------------------------------------------------------
# Pure-JAX reference + synthetic parameters.
# --------------------------------------------------------------------------
def _reference_forward(features, params, num_heads):
    """Pure-JAX (XLA) reference of PyTorch TransformerPooling.forward (eval)."""
    n, D = features.shape
    H = num_heads
    dh = D // H
    x = jnp.concatenate([params["cls_token"].astype(features.dtype), features],
                        axis=0)
    S = n + 1

    def layer_norm(v, g, b):
        mu = jnp.mean(v, axis=-1, keepdims=True)
        var = jnp.mean((v - mu) ** 2, axis=-1, keepdims=True)
        return (v - mu) / jnp.sqrt(var + _LN_EPS) * g + b

    avg_attn = None
    for p in params["layers"]:
        q = x @ p["w_qkv"][0] + p["b_qkv"][0]
        k = x @ p["w_qkv"][1] + p["b_qkv"][1]
        v = x @ p["w_qkv"][2] + p["b_qkv"][2]
        qh = q.reshape(S, H, dh).transpose(1, 0, 2)
        kh = k.reshape(S, H, dh).transpose(1, 0, 2)
        vh = v.reshape(S, H, dh).transpose(1, 0, 2)
        scores = jnp.einsum("hqd,hkd->hqk", qh, kh) / math.sqrt(dh)
        attn = jax.nn.softmax(scores, axis=-1)                       # (H, S, S)
        ctx = jnp.einsum("hqk,hkd->hqd", attn, vh).transpose(1, 0, 2).reshape(S, D)
        sa = ctx @ p["w_o"] + p["b_o"]
        x = layer_norm(x + sa, p["ln1_g"], p["ln1_b"])
        ff = jax.nn.gelu(x @ p["w_ff1"] + p["b_ff1"], approximate=False)
        ff = ff @ p["w_ff2"] + p["b_ff2"]
        x = layer_norm(x + ff, p["ln2_g"], p["ln2_b"])
        avg_attn = jnp.mean(attn, axis=0)                            # (S, S)

    pooled = x[0:1, :]
    a_row = avg_attn[0]
    attention_weights = a_row[1:][None, :] + a_row[0] / n
    return attention_weights, pooled


def init_params(key, num_layers, num_heads, dim_representation,
                dtype=jnp.float32):
    """Deterministic synthetic parameters (weights stored as (in, out))."""
    del num_heads  # head split happens at runtime
    D = dim_representation
    dff = D
    keys = jax.random.split(key, num_layers + 1)
    cls_token = 0.02 * jax.random.normal(keys[0], (1, D), dtype)
    s = 1.0 / math.sqrt(D)
    layers = []
    for l in range(num_layers):
        ks = jax.random.split(keys[l + 1], 12)
        layers.append(dict(
            w_qkv=s * jax.random.normal(ks[0], (3, D, D), dtype),
            b_qkv=0.02 * jax.random.normal(ks[1], (3, 1, D), dtype),
            w_o=s * jax.random.normal(ks[2], (D, D), dtype),
            b_o=0.02 * jax.random.normal(ks[3], (1, D), dtype),
            ln1_g=1.0 + 0.05 * jax.random.normal(ks[4], (1, D), dtype),
            ln1_b=0.05 * jax.random.normal(ks[5], (1, D), dtype),
            w_ff1=s * jax.random.normal(ks[6], (D, dff), dtype),
            b_ff1=0.02 * jax.random.normal(ks[7], (1, dff), dtype),
            w_ff2=s * jax.random.normal(ks[8], (dff, D), dtype),
            b_ff2=0.02 * jax.random.normal(ks[9], (1, D), dtype),
            ln2_g=1.0 + 0.05 * jax.random.normal(ks[10], (1, D), dtype),
            ln2_b=0.05 * jax.random.normal(ks[11], (1, D), dtype),
        ))
    return dict(cls_token=cls_token, layers=layers)


if __name__ == "__main__":
    # Small shapes consistent with the module:
    #   num_layers=2, num_heads=4, dim_representation=32, bag of N=8 tiles.
    num_layers = 2
    num_heads = 4
    dim_representation = 32
    num_instances = 8

    key = jax.random.PRNGKey(0)
    k_feat, k_par = jax.random.split(key)
    features = jax.random.normal(k_feat, (num_instances, dim_representation),
                                 dtype=jnp.float32)
    params = init_params(k_par, num_layers, num_heads, dim_representation)

    fwd = jax.jit(lambda f, p: transformer_pooling_forward(f, p, num_heads))
    attn_w, pooled = fwd(features, params)
    jax.block_until_ready((attn_w, pooled))

    ref_attn, ref_pooled = _reference_forward(features, params, num_heads)

    assert attn_w.shape == (1, num_instances), attn_w.shape
    assert pooled.shape == (1, dim_representation), pooled.shape
    assert jnp.allclose(attn_w, ref_attn, atol=1e-4, rtol=1e-4), \
        float(jnp.max(jnp.abs(attn_w - ref_attn)))
    assert jnp.allclose(pooled, ref_pooled, atol=1e-4, rtol=1e-4), \
        float(jnp.max(jnp.abs(pooled - ref_pooled)))

    print("KERNEL_OK")
</pallas_src>

<mosaic_0001>
module attributes {stable_mosaic.version = 11 : i64} {
  func.func @kernel(%arg0: memref<16x32xf32, #tpu.memory_space<vmem>>, %arg1: memref<3x32x32xf32, #tpu.memory_space<vmem>>, %arg2: memref<3x1x32xf32, #tpu.memory_space<vmem>>, %arg3: memref<16x32xf32, #tpu.memory_space<vmem>>, %arg4: memref<16x32xf32, #tpu.memory_space<vmem>>, %arg5: memref<1x16xf32, #tpu.memory_space<vmem>>) attributes {dimension_semantics = [], scalar_prefetch = 0 : i64, scratch_operands = 0 : i64, tpu.core_type = #tpu.core_type<tc>} {
    %c0 = arith.constant 0 : index
    %c0_0 = arith.constant 0 : index
    %0 = vector.load %arg0[%c0, %c0_0] : memref<16x32xf32, #tpu.memory_space<vmem>>, vector<16x32xf32>
    %c1 = arith.constant 1 : index
    %c0_1 = arith.constant 0 : index
    %c0_2 = arith.constant 0 : index
    %1 = vector.load %arg1[%c1, %c0_1, %c0_2] : memref<3x32x32xf32, #tpu.memory_space<vmem>>, vector<1x32x32xf32>
    %2 = vector.shape_cast %1 : vector<1x32x32xf32> to vector<32x32xf32>
    %cst = arith.constant dense<0.000000e+00> : vector<16x32xf32>
    %3 = tpu.matmul %0, %2, %cst {dimension_numbers = #tpu.dot_dimension_numbers<[1], [0], [0], [1], [0, 0, 1, 1], [], []>} : vector<16x32xf32>, vector<32x32xf32>, vector<16x32xf32> -> vector<16x32xf32>
    %c1_3 = arith.constant 1 : index
    %c0_4 = arith.constant 0 : index
    %c0_5 = arith.constant 0 : index
    %4 = vector.load %arg2[%c1_3, %c0_4, %c0_5] : memref<3x1x32xf32, #tpu.memory_space<vmem>>, vector<1x1x32xf32>
    %5 = vector.shape_cast %4 : vector<1x1x32xf32> to vector<1x32xf32>
    %6 = vector.broadcast %5 : vector<1x32xf32> to vector<16x32xf32>
    %7 = arith.addf %3, %6 : vector<16x32xf32>
    %c2 = arith.constant 2 : index
    %c0_6 = arith.constant 0 : index
    %c0_7 = arith.constant 0 : index
    %8 = vector.load %arg1[%c2, %c0_6, %c0_7] : memref<3x32x32xf32, #tpu.memory_space<vmem>>, vector<1x32x32xf32>
    %9 = vector.shape_cast %8 : vector<1x32x32xf32> to vector<32x32xf32>
    %cst_8 = arith.constant dense<0.000000e+00> : vector<16x32xf32>
    %10 = tpu.matmul %0, %9, %cst_8 {dimension_numbers = #tpu.dot_dimension_numbers<[1], [0], [0], [1], [0, 0, 1, 1], [], []>} : vector<16x32xf32>, vector<32x32xf32>, vector<16x32xf32> -> vector<16x32xf32>
    %c2_9 = arith.constant 2 : index
    %c0_10 = arith.constant 0 : index
    %c0_11 = arith.constant 0 : index
    %11 = vector.load %arg2[%c2_9, %c0_10, %c0_11] : memref<3x1x32xf32, #tpu.memory_space<vmem>>, vector<1x1x32xf32>
    %12 = vector.shape_cast %11 : vector<1x1x32xf32> to vector<1x32xf32>
    %13 = vector.broadcast %12 : vector<1x32xf32> to vector<16x32xf32>
    %14 = arith.addf %10, %13 : vector<16x32xf32>
    %c0_12 = arith.constant 0 : index
    %c0_13 = arith.constant 0 : index
    %15 = vector.load %arg3[%c0_12, %c0_13] : memref<16x32xf32, #tpu.memory_space<vmem>>, vector<16x32xf32>
    tpu.vector_store %arg3[%c0_12, %c0_13], %7 {strides = array<i32>} : memref<16x32xf32, #tpu.memory_space<vmem>>, vector<16x32xf32>,
    %c0_14 = arith.constant 0 : index
    %c0_15 = arith.constant 0 : index
    %16 = vector.load %arg4[%c0_14, %c0_15] : memref<16x32xf32, #tpu.memory_space<vmem>>, vector<16x32xf32>
    tpu.vector_store %arg4[%c0_14, %c0_15], %14 {strides = array<i32>} : memref<16x32xf32, #tpu.memory_space<vmem>>, vector<16x32xf32>,
    %17 = vector.extract_strided_slice %0 {offsets = [0, 0], sizes = [8, 32], strides = [1, 1]} : vector<16x32xf32> to vector<8x32xf32>
    %c0_16 = arith.constant 0 : index
    %c0_17 = arith.constant 0 : index
    %c0_18 = arith.constant 0 : index
    %18 = vector.load %arg1[%c0_16, %c0_17, %c0_18] : memref<3x32x32xf32, #tpu.memory_space<vmem>>, vector<1x32x32xf32>
    %19 = vector.shape_cast %18 : vector<1x32x32xf32> to vector<32x32xf32>
    %cst_19 = arith.constant dense<0.000000e+00> : vector<8x32xf32>
    %20 = tpu.matmul %17, %19, %cst_19 {dimension_numbers = #tpu.dot_dimension_numbers<[1], [0], [0], [1], [0, 0, 1, 1], [], []>} : vector<8x32xf32>, vector<32x32xf32>, vector<8x32xf32> -> vector<8x32xf32>
    %c0_20 = arith.constant 0 : index
    %c0_21 = arith.constant 0 : index
    %c0_22 = arith.constant 0 : index
    %21 = vector.load %arg2[%c0_20, %c0_21, %c0_22] : memref<3x1x32xf32, #tpu.memory_space<vmem>>, vector<1x1x32xf32>
    %22 = vector.shape_cast %21 : vector<1x1x32xf32> to vector<1x32xf32>
    %23 = vector.broadcast %22 : vector<1x32xf32> to vector<8x32xf32>
    %24 = arith.addf %20, %23 : vector<8x32xf32>
    %cst_23 = arith.constant 0.353553385 : f32
    %25 = vector.broadcast %cst_23 : f32 to vector<8x32xf32>
    %26 = arith.mulf %24, %25 : vector<8x32xf32>
    %27 = tpu.iota {dimensions = array<i32: 1>} : vector<1x16xi32>
    %c9_i32 = arith.constant 9 : i32
    %28 = vector.broadcast %c9_i32 : i32 to vector<1x16xi32>
    %29 = arith.cmpi slt, %27, %28 : vector<1x16xi32>
    %cst_24 = arith.constant 0.000000e+00 : f32
    %30 = vector.broadcast %cst_24 : f32 to vector<1x16xf32>
    %31 = vector.extract_strided_slice %26 {offsets = [0, 0], sizes = [8, 8], strides = [1, 1]} : vector<8x32xf32> to vector<8x8xf32>
    %32 = vector.extract_strided_slice %7 {offsets = [0, 0], sizes = [16, 8], strides = [1, 1]} : vector<16x32xf32> to vector<16x8xf32>
    %cst_25 = arith.constant dense<0.000000e+00> : vector<8x16xf32>
    %33 = tpu.matmul %31, %32, %cst_25 {dimension_numbers = #tpu.dot_dimension_numbers<[1], [1], [0], [0], [0, 0, 1, 0], [], []>} : vector<8x8xf32>, vector<16x8xf32>, vector<8x16xf32> -> vector<8x16xf32>
    %cst_26 = arith.constant -1.000000e+30 : f32
    %34 = vector.shape_cast %29 : vector<1x16xi1> to vector<1x16xi1>
    %35 = vector.broadcast %34 : vector<1x16xi1> to vector<8x16xi1>
    %36 = vector.broadcast %cst_26 : f32 to vector<8x16xf32>
    %37 = arith.select %35, %33, %36 : vector<8x16xi1>, vector<8x16xf32>
    %cst_27 = arith.constant dense<0xFF800000> : vector<8xf32>
    %38 = vector.multi_reduction <maximumf>, %37, %cst_27 [1] : vector<8x16xf32> to vector<8xf32>
    %39 = vector.shape_cast %38 : vector<8xf32> to vector<8x1xf32>
    %40 = vector.broadcast %39 : vector<8x1xf32> to vector<8x16xf32>
    %41 = arith.subf %37, %40 : vector<8x16xf32>
    %42 = math.exp %41 : vector<8x16xf32>
    %cst_28 = arith.constant dense<0.000000e+00> : vector<8xf32>
    %43 = vector.multi_reduction <add>, %42, %cst_28 [1] : vector<8x16xf32> to vector<8xf32>
    %44 = vector.shape_cast %43 : vector<8xf32> to vector<8x1xf32>
    %cst_29 = arith.constant 1.000000e+00 : f32
    %45 = vector.broadcast %cst_29 : f32 to vector<8x1xf32>
    %46 = arith.divf %45, %44 : vector<8x1xf32>
    %47 = vector.broadcast %46 : vector<8x1xf32> to vector<8x16xf32>
    %48 = arith.mulf %42, %47 : vector<8x16xf32>
    %49 = vector.extract_strided_slice %48 {offsets = [0, 0], sizes = [1, 16], strides = [1, 1]} : vector<8x16xf32> to vector<1x16xf32>
    %50 = arith.addf %30, %49 : vector<1x16xf32>
    %51 = vector.extract_strided_slice %26 {offsets = [0, 8], sizes = [8, 8], strides = [1, 1]} : vector<8x32xf32> to vector<8x8xf32>
    %52 = vector.extract_strided_slice %7 {offsets = [0, 8], sizes = [16, 8], strides = [1, 1]} : vector<16x32xf32> to vector<16x8xf32>
    %cst_30 = arith.constant dense<0.000000e+00> : vector<8x16xf32>
    %53 = tpu.matmul %51, %52, %cst_30 {dimension_numbers = #tpu.dot_dimension_numbers<[1], [1], [0], [0], [0, 0, 1, 0], [], []>} : vector<8x8xf32>, vector<16x8xf32>, vector<8x16xf32> -> vector<8x16xf32>
    %cst_31 = arith.constant -1.000000e+30 : f32
    %54 = vector.shape_cast %29 : vector<1x16xi1> to vector<1x16xi1>
    %55 = vector.broadcast %54 : vector<1x16xi1> to vector<8x16xi1>
    %56 = vector.broadcast %cst_31 : f32 to vector<8x16xf32>
    %57 = arith.select %55, %53, %56 : vector<8x16xi1>, vector<8x16xf32>
    %cst_32 = arith.constant dense<0xFF800000> : vector<8xf32>
    %58 = vector.multi_reduction <maximumf>, %57, %cst_32 [1] : vector<8x16xf32> to vector<8xf32>
    %59 = vector.shape_cast %58 : vector<8xf32> to vector<8x1xf32>
    %60 = vector.broadcast %59 : vector<8x1xf32> to vector<8x16xf32>
    %61 = arith.subf %57, %60 : vector<8x16xf32>
    %62 = math.exp %61 : vector<8x16xf32>
    %cst_33 = arith.constant dense<0.000000e+00> : vector<8xf32>
    %63 = vector.multi_reduction <add>, %62, %cst_33 [1] : vector<8x16xf32> to vector<8xf32>
    %64 = vector.shape_cast %63 : vector<8xf32> to vector<8x1xf32>
    %cst_34 = arith.constant 1.000000e+00 : f32
    %65 = vector.broadcast %cst_34 : f32 to vector<8x1xf32>
    %66 = arith.divf %65, %64 : vector<8x1xf32>
    %67 = vector.broadcast %66 : vector<8x1xf32> to vector<8x16xf32>
    %68 = arith.mulf %62, %67 : vector<8x16xf32>
    %69 = vector.extract_strided_slice %68 {offsets = [0, 0], sizes = [1, 16], strides = [1, 1]} : vector<8x16xf32> to vector<1x16xf32>
    %70 = arith.addf %50, %69 : vector<1x16xf32>
    %71 = vector.extract_strided_slice %26 {offsets = [0, 16], sizes = [8, 8], strides = [1, 1]} : vector<8x32xf32> to vector<8x8xf32>
    %72 = vector.extract_strided_slice %7 {offsets = [0, 16], sizes = [16, 8], strides = [1, 1]} : vector<16x32xf32> to vector<16x8xf32>
    %cst_35 = arith.constant dense<0.000000e+00> : vector<8x16xf32>
    %73 = tpu.matmul %71, %72, %cst_35 {dimension_numbers = #tpu.dot_dimension_numbers<[1], [1], [0], [0], [0, 0, 1, 0], [], []>} : vector<8x8xf32>, vector<16x8xf32>, vector<8x16xf32> -> vector<8x16xf32>
    %cst_36 = arith.constant -1.000000e+30 : f32
    %74 = vector.shape_cast %29 : vector<1x16xi1> to vector<1x16xi1>
    %75 = vector.broadcast %74 : vector<1x16xi1> to vector<8x16xi1>
    %76 = vector.broadcast %cst_36 : f32 to vector<8x16xf32>
    %77 = arith.select %75, %73, %76 : vector<8x16xi1>, vector<8x16xf32>
    %cst_37 = arith.constant dense<0xFF800000> : vector<8xf32>
    %78 = vector.multi_reduction <maximumf>, %77, %cst_37 [1] : vector<8x16xf32> to vector<8xf32>
    %79 = vector.shape_cast %78 : vector<8xf32> to vector<8x1xf32>
    %80 = vector.broadcast %79 : vector<8x1xf32> to vector<8x16xf32>
    %81 = arith.subf %77, %80 : vector<8x16xf32>
    %82 = math.exp %81 : vector<8x16xf32>
    %cst_38 = arith.constant dense<0.000000e+00> : vector<8xf32>
    %83 = vector.multi_reduction <add>, %82, %cst_38 [1] : vector<8x16xf32> to vector<8xf32>
    %84 = vector.shape_cast %83 : vector<8xf32> to vector<8x1xf32>
    %cst_39 = arith.constant 1.000000e+00 : f32
    %85 = vector.broadcast %cst_39 : f32 to vector<8x1xf32>
    %86 = arith.divf %85, %84 : vector<8x1xf32>
    %87 = vector.broadcast %86 : vector<8x1xf32> to vector<8x16xf32>
    %88 = arith.mulf %82, %87 : vector<8x16xf32>
    %89 = vector.extract_strided_slice %88 {offsets = [0, 0], sizes = [1, 16], strides = [1, 1]} : vector<8x16xf32> to vector<1x16xf32>
    %90 = arith.addf %70, %89 : vector<1x16xf32>
    %91 = vector.extract_strided_slice %26 {offsets = [0, 24], sizes = [8, 8], strides = [1, 1]} : vector<8x32xf32> to vector<8x8xf32>
    %92 = vector.extract_strided_slice %7 {offsets = [0, 24], sizes = [16, 8], strides = [1, 1]} : vector<16x32xf32> to vector<16x8xf32>
    %cst_40 = arith.constant dense<0.000000e+00> : vector<8x16xf32>
    %93 = tpu.matmul %91, %92, %cst_40 {dimension_numbers = #tpu.dot_dimension_numbers<[1], [1], [0], [0], [0, 0, 1, 0], [], []>} : vector<8x8xf32>, vector<16x8xf32>, vector<8x16xf32> -> vector<8x16xf32>
    %cst_41 = arith.constant -1.000000e+30 : f32
    %94 = vector.shape_cast %29 : vector<1x16xi1> to vector<1x16xi1>
    %95 = vector.broadcast %94 : vector<1x16xi1> to vector<8x16xi1>
    %96 = vector.broadcast %cst_41 : f32 to vector<8x16xf32>
    %97 = arith.select %95, %93, %96 : vector<8x16xi1>, vector<8x16xf32>
    %cst_42 = arith.constant dense<0xFF800000> : vector<8xf32>
    %98 = vector.multi_reduction <maximumf>, %97, %cst_42 [1] : vector<8x16xf32> to vector<8xf32>
    %99 = vector.shape_cast %98 : vector<8xf32> to vector<8x1xf32>
    %100 = vector.broadcast %99 : vector<8x1xf32> to vector<8x16xf32>
    %101 = arith.subf %97, %100 : vector<8x16xf32>
    %102 = math.exp %101 : vector<8x16xf32>
    %cst_43 = arith.constant dense<0.000000e+00> : vector<8xf32>
    %103 = vector.multi_reduction <add>, %102, %cst_43 [1] : vector<8x16xf32> to vector<8xf32>
    %104 = vector.shape_cast %103 : vector<8xf32> to vector<8x1xf32>
    %cst_44 = arith.constant 1.000000e+00 : f32
    %105 = vector.broadcast %cst_44 : f32 to vector<8x1xf32>
    %106 = arith.divf %105, %104 : vector<8x1xf32>
    %107 = vector.broadcast %106 : vector<8x1xf32> to vector<8x16xf32>
    %108 = arith.mulf %102, %107 : vector<8x16xf32>
    %109 = vector.extract_strided_slice %108 {offsets = [0, 0], sizes = [1, 16], strides = [1, 1]} : vector<8x16xf32> to vector<1x16xf32>
    %110 = arith.addf %90, %109 : vector<1x16xf32>
    %cst_45 = arith.constant 2.500000e-01 : f32
    %111 = vector.broadcast %cst_45 : f32 to vector<1x16xf32>
    %112 = arith.mulf %110, %111 : vector<1x16xf32>
    %c0_46 = arith.constant 0 : index
    %c0_47 = arith.constant 0 : index
    %113 = vector.load %arg5[%c0_46, %c0_47] : memref<1x16xf32, #tpu.memory_space<vmem>>, vector<1x16xf32>
    tpu.vector_store %arg5[%c0_46, %c0_47], %112 {strides = array<i32>} : memref<1x16xf32, #tpu.memory_space<vmem>>, vector<1x16xf32>,
    return
  }
}

module attributes {stable_mosaic.version = 11 : i64} {
  func.func @kernel(%arg0: memref<16x32xf32, #tpu.memory_space<vmem>>, %arg1: memref<3x32x32xf32, #tpu.memory_space<vmem>>, %arg2: memref<3x1x32xf32, #tpu.memory_space<vmem>>, %arg3: memref<16x32xf32, #tpu.memory_space<vmem>>, %arg4: memref<16x32xf32, #tpu.memory_space<vmem>>, %arg5: memref<1x16xf32, #tpu.memory_space<vmem>>) attributes {dimension_semantics = [], scalar_prefetch = 0 : i64, scratch_operands = 0 : i64, tpu.core_type = #tpu.core_type<tc>} {
    %c0 = arith.constant 0 : index
    %c0_0 = arith.constant 0 : index
    %0 = vector.load %arg0[%c0, %c0_0] : memref<16x32xf32, #tpu.memory_space<vmem>>, vector<16x32xf32>
    %c1 = arith.constant 1 : index
    %c0_1 = arith.constant 0 : index
    %c0_2 = arith.constant 0 : index
    %1 = vector.load %arg1[%c1, %c0_1, %c0_2] : memref<3x32x32xf32, #tpu.memory_space<vmem>>, vector<1x32x32xf32>
    %2 = vector.shape_cast %1 : vector<1x32x32xf32> to vector<32x32xf32>
    %cst = arith.constant dense<0.000000e+00> : vector<16x32xf32>
    %3 = tpu.matmul %0, %2, %cst {dimension_numbers = #tpu.dot_dimension_numbers<[1], [0], [0], [1], [0, 0, 1, 1], [], []>} : vector<16x32xf32>, vector<32x32xf32>, vector<16x32xf32> -> vector<16x32xf32>
    %c1_3 = arith.constant 1 : index
    %c0_4 = arith.constant 0 : index
    %c0_5 = arith.constant 0 : index
    %4 = vector.load %arg2[%c1_3, %c0_4, %c0_5] : memref<3x1x32xf32, #tpu.memory_space<vmem>>, vector<1x1x32xf32>
    %5 = vector.shape_cast %4 : vector<1x1x32xf32> to vector<1x32xf32>
    %6 = vector.broadcast %5 : vector<1x32xf32> to vector<16x32xf32>
    %7 = arith.addf %3, %6 : vector<16x32xf32>
    %c2 = arith.constant 2 : index
    %c0_6 = arith.constant 0 : index
    %c0_7 = arith.constant 0 : index
    %8 = vector.load %arg1[%c2, %c0_6, %c0_7] : memref<3x32x32xf32, #tpu.memory_space<vmem>>, vector<1x32x32xf32>
    %9 = vector.shape_cast %8 : vector<1x32x32xf32> to vector<32x32xf32>
    %cst_8 = arith.constant dense<0.000000e+00> : vector<16x32xf32>
    %10 = tpu.matmul %0, %9, %cst_8 {dimension_numbers = #tpu.dot_dimension_numbers<[1], [0], [0], [1], [0, 0, 1, 1], [], []>} : vector<16x32xf32>, vector<32x32xf32>, vector<16x32xf32> -> vector<16x32xf32>
    %c2_9 = arith.constant 2 : index
    %c0_10 = arith.constant 0 : index
    %c0_11 = arith.constant 0 : index
    %11 = vector.load %arg2[%c2_9, %c0_10, %c0_11] : memref<3x1x32xf32, #tpu.memory_space<vmem>>, vector<1x1x32xf32>
    %12 = vector.shape_cast %11 : vector<1x1x32xf32> to vector<1x32xf32>
    %13 = vector.broadcast %12 : vector<1x32xf32> to vector<16x32xf32>
    %14 = arith.addf %10, %13 : vector<16x32xf32>
    %c0_12 = arith.constant 0 : index
    %c0_13 = arith.constant 0 : index
    %15 = vector.load %arg3[%c0_12, %c0_13] : memref<16x32xf32, #tpu.memory_space<vmem>>, vector<16x32xf32>
    tpu.vector_store %arg3[%c0_12, %c0_13], %7 {strides = array<i32>} : memref<16x32xf32, #tpu.memory_space<vmem>>, vector<16x32xf32>,
    %c0_14 = arith.constant 0 : index
    %c0_15 = arith.constant 0 : index
    %16 = vector.load %arg4[%c0_14, %c0_15] : memref<16x32xf32, #tpu.memory_space<vmem>>, vector<16x32xf32>
    tpu.vector_store %arg4[%c0_14, %c0_15], %14 {strides = array<i32>} : memref<16x32xf32, #tpu.memory_space<vmem>>, vector<16x32xf32>,
    %17 = vector.extract_strided_slice %0 {offsets = [0, 0], sizes = [8, 32], strides = [1, 1]} : vector<16x32xf32> to vector<8x32xf32>
    %c0_16 = arith.constant 0 : index
    %c0_17 = arith.constant 0 : index
    %c0_18 = arith.constant 0 : index
    %18 = vector.load %arg1[%c0_16, %c0_17, %c0_18] : memref<3x32x32xf32, #tpu.memory_space<vmem>>, vector<1x32x32xf32>
    %19 = vector.shape_cast %18 : vector<1x32x32xf32> to vector<32x32xf32>
    %cst_19 = arith.constant dense<0.000000e+00> : vector<8x32xf32>
    %20 = tpu.matmul %17, %19, %cst_19 {dimension_numbers = #tpu.dot_dimension_numbers<[1], [0], [0], [1], [0, 0, 1, 1], [], []>} : vector<8x32xf32>, vector<32x32xf32>, vector<8x32xf32> -> vector<8x32xf32>
    %c0_20 = arith.constant 0 : index
    %c0_21 = arith.constant 0 : index
    %c0_22 = arith.constant 0 : index
    %21 = vector.load %arg2[%c0_20, %c0_21, %c0_22] : memref<3x1x32xf32, #tpu.memory_space<vmem>>, vector<1x1x32xf32>
    %22 = vector.shape_cast %21 : vector<1x1x32xf32> to vector<1x32xf32>
    %23 = vector.broadcast %22 : vector<1x32xf32> to vector<8x32xf32>
    %24 = arith.addf %20, %23 : vector<8x32xf32>
    %cst_23 = arith.constant 0.353553385 : f32
    %25 = vector.broadcast %cst_23 : f32 to vector<8x32xf32>
    %26 = arith.mulf %24, %25 : vector<8x32xf32>
    %27 = tpu.iota {dimensions = array<i32: 1>} : vector<1x16xi32>
    %c9_i32 = arith.constant 9 : i32
    %28 = vector.broadcast %c9_i32 : i32 to vector<1x16xi32>
    %29 = arith.cmpi slt, %27, %28 : vector<1x16xi32>
    %cst_24 = arith.constant 0.000000e+00 : f32
    %30 = vector.broadcast %cst_24 : f32 to vector<1x16xf32>
    %31 = vector.extract_strided_slice %26 {offsets = [0, 0], sizes = [8, 8], strides = [1, 1]} : vector<8x32xf32> to vector<8x8xf32>
    %32 = vector.extract_strided_slice %7 {offsets = [0, 0], sizes = [16, 8], strides = [1, 1]} : vector<16x32xf32> to vector<16x8xf32>
    %cst_25 = arith.constant dense<0.000000e+00> : vector<8x16xf32>
    %33 = tpu.matmul %31, %32, %cst_25 {dimension_numbers = #tpu.dot_dimension_numbers<[1], [1], [0], [0], [0, 0, 1, 0], [], []>} : vector<8x8xf32>, vector<16x8xf32>, vector<8x16xf32> -> vector<8x16xf32>
    %cst_26 = arith.constant -1.000000e+30 : f32
    %34 = vector.shape_cast %29 : vector<1x16xi1> to vector<1x16xi1>
    %35 = vector.broadcast %34 : vector<1x16xi1> to vector<8x16xi1>
    %36 = vector.broadcast %cst_26 : f32 to vector<8x16xf32>
    %37 = arith.select %35, %33, %36 : vector<8x16xi1>, vector<8x16xf32>
    %cst_27 = arith.constant dense<0xFF800000> : vector<8xf32>
    %38 = vector.multi_reduction <maximumf>, %37, %cst_27 [1] : vector<8x16xf32> to vector<8xf32>
    %39 = vector.shape_cast %38 : vector<8xf32> to vector<8x1xf32>
    %40 = vector.broadcast %39 : vector<8x1xf32> to vector<8x16xf32>
    %41 = arith.subf %37, %40 : vector<8x16xf32>
    %42 = math.exp %41 : vector<8x16xf32>
    %cst_28 = arith.constant dense<0.000000e+00> : vector<8xf32>
    %43 = vector.multi_reduction <add>, %42, %cst_28 [1] : vector<8x16xf32> to vector<8xf32>
    %44 = vector.shape_cast %43 : vector<8xf32> to vector<8x1xf32>
    %cst_29 = arith.constant 1.000000e+00 : f32
    %45 = vector.broadcast %cst_29 : f32 to vector<8x1xf32>
    %46 = arith.divf %45, %44 : vector<8x1xf32>
    %47 = vector.broadcast %46 : vector<8x1xf32> to vector<8x16xf32>
    %48 = arith.mulf %42, %47 : vector<8x16xf32>
    %49 = vector.extract_strided_slice %48 {offsets = [0, 0], sizes = [1, 16], strides = [1, 1]} : vector<8x16xf32> to vector<1x16xf32>
    %50 = arith.addf %30, %49 : vector<1x16xf32>
    %51 = vector.extract_strided_slice %26 {offsets = [0, 8], sizes = [8, 8], strides = [1, 1]} : vector<8x32xf32> to vector<8x8xf32>
    %52 = vector.extract_strided_slice %7 {offsets = [0, 8], sizes = [16, 8], strides = [1, 1]} : vector<16x32xf32> to vector<16x8xf32>
    %cst_30 = arith.constant dense<0.000000e+00> : vector<8x16xf32>
    %53 = tpu.matmul %51, %52, %cst_30 {dimension_numbers = #tpu.dot_dimension_numbers<[1], [1], [0], [0], [0, 0, 1, 0], [], []>} : vector<8x8xf32>, vector<16x8xf32>, vector<8x16xf32> -> vector<8x16xf32>
    %cst_31 = arith.constant -1.000000e+30 : f32
    %54 = vector.shape_cast %29 : vector<1x16xi1> to vector<1x16xi1>
    %55 = vector.broadcast %54 : vector<1x16xi1> to vector<8x16xi1>
    %56 = vector.broadcast %cst_31 : f32 to vector<8x16xf32>
    %57 = arith.select %55, %53, %56 : vector<8x16xi1>, vector<8x16xf32>
    %cst_32 = arith.constant dense<0xFF800000> : vector<8xf32>
    %58 = vector.multi_reduction <maximumf>, %57, %cst_32 [1] : vector<8x16xf32> to vector<8xf32>
    %59 = vector.shape_cast %58 : vector<8xf32> to vector<8x1xf32>
    %60 = vector.broadcast %59 : vector<8x1xf32> to vector<8x16xf32>
    %61 = arith.subf %57, %60 : vector<8x16xf32>
    %62 = math.exp %61 : vector<8x16xf32>
    %cst_33 = arith.constant dense<0.000000e+00> : vector<8xf32>
    %63 = vector.multi_reduction <add>, %62, %cst_33 [1] : vector<8x16xf32> to vector<8xf32>
    %64 = vector.shape_cast %63 : vector<8xf32> to vector<8x1xf32>
    %cst_34 = arith.constant 1.000000e+00 : f32
    %65 = vector.broadcast %cst_34 : f32 to vector<8x1xf32>
    %66 = arith.divf %65, %64 : vector<8x1xf32>
    %67 = vector.broadcast %66 : vector<8x1xf32> to vector<8x16xf32>
    %68 = arith.mulf %62, %67 : vector<8x16xf32>
    %69 = vector.extract_strided_slice %68 {offsets = [0, 0], sizes = [1, 16], strides = [1, 1]} : vector<8x16xf32> to vector<1x16xf32>
    %70 = arith.addf %50, %69 : vector<1x16xf32>
    %71 = vector.extract_strided_slice %26 {offsets = [0, 16], sizes = [8, 8], strides = [1, 1]} : vector<8x32xf32> to vector<8x8xf32>
    %72 = vector.extract_strided_slice %7 {offsets = [0, 16], sizes = [16, 8], strides = [1, 1]} : vector<16x32xf32> to vector<16x8xf32>
    %cst_35 = arith.constant dense<0.000000e+00> : vector<8x16xf32>
    %73 = tpu.matmul %71, %72, %cst_35 {dimension_numbers = #tpu.dot_dimension_numbers<[1], [1], [0], [0], [0, 0, 1, 0], [], []>} : vector<8x8xf32>, vector<16x8xf32>, vector<8x16xf32> -> vector<8x16xf32>
    %cst_36 = arith.constant -1.000000e+30 : f32
    %74 = vector.shape_cast %29 : vector<1x16xi1> to vector<1x16xi1>
    %75 = vector.broadcast %74 : vector<1x16xi1> to vector<8x16xi1>
    %76 = vector.broadcast %cst_36 : f32 to vector<8x16xf32>
    %77 = arith.select %75, %73, %76 : vector<8x16xi1>, vector<8x16xf32>
    %cst_37 = arith.constant dense<0xFF800000> : vector<8xf32>
    %78 = vector.multi_reduction <maximumf>, %77, %cst_37 [1] : vector<8x16xf32> to vector<8xf32>
    %79 = vector.shape_cast %78 : vector<8xf32> to vector<8x1xf32>
    %80 = vector.broadcast %79 : vector<8x1xf32> to vector<8x16xf32>
    %81 = arith.subf %77, %80 : vector<8x16xf32>
    %82 = math.exp %81 : vector<8x16xf32>
    %cst_38 = arith.constant dense<0.000000e+00> : vector<8xf32>
    %83 = vector.multi_reduction <add>, %82, %cst_38 [1] : vector<8x16xf32> to vector<8xf32>
    %84 = vector.shape_cast %83 : vector<8xf32> to vector<8x1xf32>
    %cst_39 = arith.constant 1.000000e+00 : f32
    %85 = vector.broadcast %cst_39 : f32 to vector<8x1xf32>
    %86 = arith.divf %85, %84 : vector<8x1xf32>
    %87 = vector.broadcast %86 : vector<8x1xf32> to vector<8x16xf32>
    %88 = arith.mulf %82, %87 : vector<8x16xf32>
    %89 = vector.extract_strided_slice %88 {offsets = [0, 0], sizes = [1, 16], strides = [1, 1]} : vector<8x16xf32> to vector<1x16xf32>
    %90 = arith.addf %70, %89 : vector<1x16xf32>
    %91 = vector.extract_strided_slice %26 {offsets = [0, 24], sizes = [8, 8], strides = [1, 1]} : vector<8x32xf32> to vector<8x8xf32>
    %92 = vector.extract_strided_slice %7 {offsets = [0, 24], sizes = [16, 8], strides = [1, 1]} : vector<16x32xf32> to vector<16x8xf32>
    %cst_40 = arith.constant dense<0.000000e+00> : vector<8x16xf32>
    %93 = tpu.matmul %91, %92, %cst_40 {dimension_numbers = #tpu.dot_dimension_numbers<[1], [1], [0], [0], [0, 0, 1, 0], [], []>} : vector<8x8xf32>, vector<16x8xf32>, vector<8x16xf32> -> vector<8x16xf32>
    %cst_41 = arith.constant -1.000000e+30 : f32
    %94 = vector.shape_cast %29 : vector<1x16xi1> to vector<1x16xi1>
    %95 = vector.broadcast %94 : vector<1x16xi1> to vector<8x16xi1>
    %96 = vector.broadcast %cst_41 : f32 to vector<8x16xf32>
    %97 = arith.select %95, %93, %96 : vector<8x16xi1>, vector<8x16xf32>
    %cst_42 = arith.constant dense<0xFF800000> : vector<8xf32>
    %98 = vector.multi_reduction <maximumf>, %97, %cst_42 [1] : vector<8x16xf32> to vector<8xf32>
    %99 = vector.shape_cast %98 : vector<8xf32> to vector<8x1xf32>
    %100 = vector.broadcast %99 : vector<8x1xf32> to vector<8x16xf32>
    %101 = arith.subf %97, %100 : vector<8x16xf32>
    %102 = math.exp %101 : vector<8x16xf32>
    %cst_43 = arith.constant dense<0.000000e+00> : vector<8xf32>
    %103 = vector.multi_reduction <add>, %102, %cst_43 [1] : vector<8x16xf32> to vector<8xf32>
    %104 = vector.shape_cast %103 : vector<8xf32> to vector<8x1xf32>
    %cst_44 = arith.constant 1.000000e+00 : f32
    %105 = vector.broadcast %cst_44 : f32 to vector<8x1xf32>
    %106 = arith.divf %105, %104 : vector<8x1xf32>
    %107 = vector.broadcast %106 : vector<8x1xf32> to vector<8x16xf32>
    %108 = arith.mulf %102, %107 : vector<8x16xf32>
    %109 = vector.extract_strided_slice %108 {offsets = [0, 0], sizes = [1, 16], strides = [1, 1]} : vector<8x16xf32> to vector<1x16xf32>
    %110 = arith.addf %90, %109 : vector<1x16xf32>
    %cst_45 = arith.constant 2.500000e-01 : f32
    %111 = vector.broadcast %cst_45 : f32 to vector<1x16xf32>
    %112 = arith.mulf %110, %111 : vector<1x16xf32>
    %c0_46 = arith.constant 0 : index
    %c0_47 = arith.constant 0 : index
    %113 = vector.load %arg5[%c0_46, %c0_47] : memref<1x16xf32, #tpu.memory_space<vmem>>, vector<1x16xf32>
    tpu.vector_store %arg5[%c0_46, %c0_47], %112 {strides = array<i32>} : memref<1x16xf32, #tpu.memory_space<vmem>>, vector<1x16xf32>,
    return
  }
}

module attributes {stable_mosaic.version = 11 : i64} {
  func.func @kernel(%arg0: i32, %arg1: memref<16x32xf32, #tpu.memory_space<vmem>>, %arg2: memref<16x32xf32, #tpu.memory_space<vmem>>, %arg3: memref<16x32xf32, #tpu.memory_space<vmem>>, %arg4: memref<32x32xf32, #tpu.memory_space<vmem>>, %arg5: memref<1x32xf32, #tpu.memory_space<vmem>>, %arg6: memref<32x32xf32, #tpu.memory_space<vmem>>, %arg7: memref<1x32xf32, #tpu.memory_space<vmem>>, %arg8: memref<1x32xf32, #tpu.memory_space<vmem>>, %arg9: memref<1x32xf32, #tpu.memory_space<vmem>>, %arg10: memref<32x32xf32, #tpu.memory_space<vmem>>, %arg11: memref<1x32xf32, #tpu.memory_space<vmem>>, %arg12: memref<32x32xf32, #tpu.memory_space<vmem>>, %arg13: memref<1x32xf32, #tpu.memory_space<vmem>>, %arg14: memref<1x32xf32, #tpu.memory_space<vmem>>, %arg15: memref<1x32xf32, #tpu.memory_space<vmem>>, %arg16: memref<16x32xf32, #tpu.memory_space<vmem>>) attributes {dimension_semantics = [#tpu.dimension_semantics<parallel>], iteration_bounds = array<i64: 1>, scalar_prefetch = 0 : i64, scratch_operands = 0 : i64, tpu.core_type = #tpu.core_type<tc>, window_params = [{pipeline_mode = #tpu.pipeline_mode<synchronous>, transform_indices = @transform_0, window_bounds = array<i64: 16, 32>}, {pipeline_mode = #tpu.pipeline_mode<synchronous>, transform_indices = @transform_1, window_bounds = array<i64: 16, 32>}, {pipeline_mode = #tpu.pipeline_mode<synchronous>, transform_indices = @transform_2, window_bounds = array<i64: 16, 32>}, {pipeline_mode = #tpu.pipeline_mode<synchronous>, transform_indices = @transform_3, window_bounds = array<i64: 32, 32>}, {pipeline_mode = #tpu.pipeline_mode<synchronous>, transform_indices = @transform_4, window_bounds = array<i64: 1, 32>}, {pipeline_mode = #tpu.pipeline_mode<synchronous>, transform_indices = @transform_5, window_bounds = array<i64: 32, 32>}, {pipeline_mode = #tpu.pipeline_mode<synchronous>, transform_indices = @transform_6, window_bounds = array<i64: 1, 32>}, {pipeline_mode = #tpu.pipeline_mode<synchronous>, transform_indices = @transform_7, window_bounds = array<i64: 1, 32>}, {pipeline_mode = #tpu.pipeline_mode<synchronous>, transform_indices = @transform_8, window_bounds = array<i64: 1, 32>}, {pipeline_mode = #tpu.pipeline_mode<synchronous>, transform_indices = @transform_9, window_bounds = array<i64: 32, 32>}, {pipeline_mode = #tpu.pipeline_mode<synchronous>, transform_indices = @transform_10, window_bounds = array<i64: 1, 32>}, {pipeline_mode = #tpu.pipeline_mode<synchronous>, transform_indices = @transform_11, window_bounds = array<i64: 32, 32>}, {pipeline_mode = #tpu.pipeline_mode<synchronous>, transform_indices = @transform_12, window_bounds = array<i64: 1, 32>}, {pipeline_mode = #tpu.pipeline_mode<synchronous>, transform_indices = @transform_13, window_bounds = array<i64: 1, 32>}, {pipeline_mode = #tpu.pipeline_mode<synchronous>, transform_indices = @transform_14, window_bounds = array<i64: 1, 32>}, {transform_indices = @transform_15, window_bounds = array<i64: 16, 32>}]} {
    %c16_i32 = arith.constant 16 : i32
    %0 = arith.muli %arg0, %c16_i32 : i32
    %1 = tpu.assume_multiple %0, 16 : i32
    %2 = arith.index_cast %1 : i32 to index
    %c0 = arith.constant 0 : index
    %3 = vector.load %arg1[%2, %c0] : memref<16x32xf32, #tpu.memory_space<vmem>>, vector<16x32xf32>
    %c0_0 = arith.constant 0 : index
    %c0_1 = arith.constant 0 : index
    %4 = vector.load %arg4[%c0_0, %c0_1] : memref<32x32xf32, #tpu.memory_space<vmem>>, vector<32x32xf32>
    %cst = arith.constant dense<0.000000e+00> : vector<16x32xf32>
    %5 = tpu.matmul %3, %4, %cst {dimension_numbers = #tpu.dot_dimension_numbers<[1], [0], [0], [1], [0, 0, 1, 1], [], []>} : vector<16x32xf32>, vector<32x32xf32>, vector<16x32xf32> -> vector<16x32xf32>
    %c0_2 = arith.constant 0 : index
    %c0_3 = arith.constant 0 : index
    %6 = vector.load %arg5[%c0_2, %c0_3] : memref<1x32xf32, #tpu.memory_space<vmem>>, vector<1x32xf32>
    %7 = vector.broadcast %6 : vector<1x32xf32> to vector<16x32xf32>
    %8 = arith.addf %5, %7 : vector<16x32xf32>
    %cst_4 = arith.constant 0.353553385 : f32
    %9 = vector.broadcast %cst_4 : f32 to vector<16x32xf32>
    %10 = arith.mulf %8, %9 : vector<16x32xf32>
    %11 = tpu.iota {dimensions = array<i32: 1>} : vector<1x16xi32>
    %c9_i32 = arith.constant 9 : i32
    %12 = vector.broadcast %c9_i32 : i32 to vector<1x16xi32>
    %13 = arith.cmpi slt, %11, %12 : vector<1x16xi32>
    %c0_5 = arith.constant 0 : index
    %c0_6 = arith.constant 0 : index
    %14 = vector.load %arg6[%c0_5, %c0_6] : memref<32x32xf32, #tpu.memory_space<vmem>>, vector<32x32xf32>
    %cst_7 = arith.constant 0.000000e+00 : f32
    %15 = vector.broadcast %cst_7 : f32 to vector<16x32xf32>
    %c0_8 = arith.constant 0 : index
    %c0_9 = arith.constant 0 : index
    %16 = vector.load %arg2[%c0_8, %c0_9] : memref<16x32xf32, #tpu.memory_space<vmem>>, vector<16x8xf32>
    %c0_10 = arith.constant 0 : index
    %c0_11 = arith.constant 0 : index
    %17 = vector.load %arg3[%c0_10, %c0_11] : memref<16x32xf32, #tpu.memory_space<vmem>>, vector<16x8xf32>
    %18 = vector.extract_strided_slice %10 {offsets = [0, 0], sizes = [16, 8], strides = [1, 1]} : vector<16x32xf32> to vector<16x8xf32>
    %cst_12 = arith.constant dense<0.000000e+00> : vector<16x16xf32>
    %19 = tpu.matmul %18, %16, %cst_12 {dimension_numbers = #tpu.dot_dimension_numbers<[1], [1], [0], [0], [0, 0, 1, 0], [], []>} : vector<16x8xf32>, vector<16x8xf32>, vector<16x16xf32> -> vector<16x16xf32>
    %cst_13 = arith.constant -1.000000e+30 : f32
    %20 = vector.shape_cast %13 : vector<1x16xi1> to vector<1x16xi1>
    %21 = vector.broadcast %20 : vector<1x16xi1> to vector<16x16xi1>
    %22 = vector.broadcast %cst_13 : f32 to vector<16x16xf32>
    %23 = arith.select %21, %19, %22 : vector<16x16xi1>, vector<16x16xf32>
    %cst_14 = arith.constant dense<0xFF800000> : vector<16xf32>
    %24 = vector.multi_reduction <maximumf>, %23, %cst_14 [1] : vector<16x16xf32> to vector<16xf32>
    %25 = vector.shape_cast %24 : vector<16xf32> to vector<16x1xf32>
    %26 = vector.broadcast %25 : vector<16x1xf32> to vector<16x16xf32>
    %27 = arith.subf %23, %26 : vector<16x16xf32>
    %28 = math.exp %27 : vector<16x16xf32>
    %cst_15 = arith.constant dense<0.000000e+00> : vector<16xf32>
    %29 = vector.multi_reduction <add>, %28, %cst_15 [1] : vector<16x16xf32> to vector<16xf32>
    %30 = vector.shape_cast %29 : vector<16xf32> to vector<16x1xf32>
    %cst_16 = arith.constant 1.000000e+00 : f32
    %31 = vector.broadcast %cst_16 : f32 to vector<16x1xf32>
    %32 = arith.divf %31, %30 : vector<16x1xf32>
    %cst_17 = arith.constant dense<0.000000e+00> : vector<16x8xf32>
    %33 = tpu.matmul %28, %17, %cst_17 {dimension_numbers = #tpu.dot_dimension_numbers<[1], [0], [0], [1], [0, 0, 1, 1], [], []>} : vector<16x16xf32>, vector<16x8xf32>, vector<16x8xf32> -> vector<16x8xf32>
    %34 = vector.broadcast %32 : vector<16x1xf32> to vector<16x8xf32>
    %35 = arith.mulf %33, %34 : vector<16x8xf32>
    %36 = vector.extract_strided_slice %14 {offsets = [0, 0], sizes = [8, 32], strides = [1, 1]} : vector<32x32xf32> to vector<8x32xf32>
    %cst_18 = arith.constant dense<0.000000e+00> : vector<16x32xf32>
    %37 = tpu.matmul %35, %36, %cst_18 {dimension_numbers = #tpu.dot_dimension_numbers<[1], [0], [0], [1], [0, 0, 1, 1], [], []>} : vector<16x8xf32>, vector<8x32xf32>, vector<16x32xf32> -> vector<16x32xf32>
    %38 = arith.addf %15, %37 : vector<16x32xf32>
    %c0_19 = arith.constant 0 : index
    %c8 = arith.constant 8 : index
    %39 = vector.load %arg2[%c0_19, %c8] : memref<16x32xf32, #tpu.memory_space<vmem>>, vector<16x8xf32>
    %c0_20 = arith.constant 0 : index
    %c8_21 = arith.constant 8 : index
    %40 = vector.load %arg3[%c0_20, %c8_21] : memref<16x32xf32, #tpu.memory_space<vmem>>, vector<16x8xf32>
    %41 = vector.extract_strided_slice %10 {offsets = [0, 8], sizes = [16, 8], strides = [1, 1]} : vector<16x32xf32> to vector<16x8xf32>
    %cst_22 = arith.constant dense<0.000000e+00> : vector<16x16xf32>
    %42 = tpu.matmul %41, %39, %cst_22 {dimension_numbers = #tpu.dot_dimension_numbers<[1], [1], [0], [0], [0, 0, 1, 0], [], []>} : vector<16x8xf32>, vector<16x8xf32>, vector<16x16xf32> -> vector<16x16xf32>
    %cst_23 = arith.constant -1.000000e+30 : f32
    %43 = vector.shape_cast %13 : vector<1x16xi1> to vector<1x16xi1>
    %44 = vector.broadcast %43 : vector<1x16xi1> to vector<16x16xi1>
    %45 = vector.broadcast %cst_23 : f32 to vector<16x16xf32>
    %46 = arith.select %44, %42, %45 : vector<16x16xi1>, vector<16x16xf32>
    %cst_24 = arith.constant dense<0xFF800000> : vector<16xf32>
    %47 = vector.multi_reduction <maximumf>, %46, %cst_24 [1] : vector<16x16xf32> to vector<16xf32>
    %48 = vector.shape_cast %47 : vector<16xf32> to vector<16x1xf32>
    %49 = vector.broadcast %48 : vector<16x1xf32> to vector<16x16xf32>
    %50 = arith.subf %46, %49 : vector<16x16xf32>
    %51 = math.exp %50 : vector<16x16xf32>
    %cst_25 = arith.constant dense<0.000000e+00> : vector<16xf32>
    %52 = vector.multi_reduction <add>, %51, %cst_25 [1] : vector<16x16xf32> to vector<16xf32>
    %53 = vector.shape_cast %52 : vector<16xf32> to vector<16x1xf32>
    %cst_26 = arith.constant 1.000000e+00 : f32
    %54 = vector.broadcast %cst_26 : f32 to vector<16x1xf32>
    %55 = arith.divf %54, %53 : vector<16x1xf32>
    %cst_27 = arith.constant dense<0.000000e+00> : vector<16x8xf32>
    %56 = tpu.matmul %51, %40, %cst_27 {dimension_numbers = #tpu.dot_dimension_numbers<[1], [0], [0], [1], [0, 0, 1, 1], [], []>} : vector<16x16xf32>, vector<16x8xf32>, vector<16x8xf32> -> vector<16x8xf32>
    %57 = vector.broadcast %55 : vector<16x1xf32> to vector<16x8xf32>
    %58 = arith.mulf %56, %57 : vector<16x8xf32>
    %59 = vector.extract_strided_slice %14 {offsets = [8, 0], sizes = [8, 32], strides = [1, 1]} : vector<32x32xf32> to vector<8x32xf32>
    %cst_28 = arith.constant dense<0.000000e+00> : vector<16x32xf32>
    %60 = tpu.matmul %58, %59, %cst_28 {dimension_numbers = #tpu.dot_dimension_numbers<[1], [0], [0], [1], [0, 0, 1, 1], [], []>} : vector<16x8xf32>, vector<8x32xf32>, vector<16x32xf32> -> vector<16x32xf32>
    %61 = arith.addf %38, %60 : vector<16x32xf32>
    %c0_29 = arith.constant 0 : index
    %c16 = arith.constant 16 : index
    %62 = vector.load %arg2[%c0_29, %c16] : memref<16x32xf32, #tpu.memory_space<vmem>>, vector<16x8xf32>
    %c0_30 = arith.constant 0 : index
    %c16_31 = arith.constant 16 : index
    %63 = vector.load %arg3[%c0_30, %c16_31] : memref<16x32xf32, #tpu.memory_space<vmem>>, vector<16x8xf32>
    %64 = vector.extract_strided_slice %10 {offsets = [0, 16], sizes = [16, 8], strides = [1, 1]} : vector<16x32xf32> to vector<16x8xf32>
    %cst_32 = arith.constant dense<0.000000e+00> : vector<16x16xf32>
    %65 = tpu.matmul %64, %62, %cst_32 {dimension_numbers = #tpu.dot_dimension_numbers<[1], [1], [0], [0], [0, 0, 1, 0], [], []>} : vector<16x8xf32>, vector<16x8xf32>, vector<16x16xf32> -> vector<16x16xf32>
    %cst_33 = arith.constant -1.000000e+30 : f32
    %66 = vector.shape_cast %13 : vector<1x16xi1> to vector<1x16xi1>
    %67 = vector.broadcast %66 : vector<1x16xi1> to vector<16x16xi1>
    %68 = vector.broadcast %cst_33 : f32 to vector<16x16xf32>
    %69 = arith.select %67, %65, %68 : vector<16x16xi1>, vector<16x16xf32>
    %cst_34 = arith.constant dense<0xFF800000> : vector<16xf32>
    %70 = vector.multi_reduction <maximumf>, %69, %cst_34 [1] : vector<16x16xf32> to vector<16xf32>
    %71 = vector.shape_cast %70 : vector<16xf32> to vector<16x1xf32>
    %72 = vector.broadcast %71 : vector<16x1xf32> to vector<16x16xf32>
    %73 = arith.subf %69, %72 : vector<16x16xf32>
    %74 = math.exp %73 : vector<16x16xf32>
    %cst_35 = arith.constant dense<0.000000e+00> : vector<16xf32>
    %75 = vector.multi_reduction <add>, %74, %cst_35 [1] : vector<16x16xf32> to vector<16xf32>
    %76 = vector.shape_cast %75 : vector<16xf32> to vector<16x1xf32>
    %cst_36 = arith.constant 1.000000e+00 : f32
    %77 = vector.broadcast %cst_36 : f32 to vector<16x1xf32>
    %78 = arith.divf %77, %76 : vector<16x1xf32>
    %cst_37 = arith.constant dense<0.000000e+00> : vector<16x8xf32>
    %79 = tpu.matmul %74, %63, %cst_37 {dimension_numbers = #tpu.dot_dimension_numbers<[1], [0], [0], [1], [0, 0, 1, 1], [], []>} : vector<16x16xf32>, vector<16x8xf32>, vector<16x8xf32> -> vector<16x8xf32>
    %80 = vector.broadcast %78 : vector<16x1xf32> to vector<16x8xf32>
    %81 = arith.mulf %79, %80 : vector<16x8xf32>
    %82 = vector.extract_strided_slice %14 {offsets = [16, 0], sizes = [8, 32], strides = [1, 1]} : vector<32x32xf32> to vector<8x32xf32>
    %cst_38 = arith.constant dense<0.000000e+00> : vector<16x32xf32>
    %83 = tpu.matmul %81, %82, %cst_38 {dimension_numbers = #tpu.dot_dimension_numbers<[1], [0], [0], [1], [0, 0, 1, 1], [], []>} : vector<16x8xf32>, vector<8x32xf32>, vector<16x32xf32> -> vector<16x32xf32>
    %84 = arith.addf %61, %83 : vector<16x32xf32>
    %c0_39 = arith.constant 0 : index
    %c24 = arith.constant 24 : index
    %85 = vector.load %arg2[%c0_39, %c24] : memref<16x32xf32, #tpu.memory_space<vmem>>, vector<16x8xf32>
    %c0_40 = arith.constant 0 : index
    %c24_41 = arith.constant 24 : index
    %86 = vector.load %arg3[%c0_40, %c24_41] : memref<16x32xf32, #tpu.memory_space<vmem>>, vector<16x8xf32>
    %87 = vector.extract_strided_slice %10 {offsets = [0, 24], sizes = [16, 8], strides = [1, 1]} : vector<16x32xf32> to vector<16x8xf32>
    %cst_42 = arith.constant dense<0.000000e+00> : vector<16x16xf32>
    %88 = tpu.matmul %87, %85, %cst_42 {dimension_numbers = #tpu.dot_dimension_numbers<[1], [1], [0], [0], [0, 0, 1, 0], [], []>} : vector<16x8xf32>, vector<16x8xf32>, vector<16x16xf32> -> vector<16x16xf32>
    %cst_43 = arith.constant -1.000000e+30 : f32
    %89 = vector.shape_cast %13 : vector<1x16xi1> to vector<1x16xi1>
    %90 = vector.broadcast %89 : vector<1x16xi1> to vector<16x16xi1>
    %91 = vector.broadcast %cst_43 : f32 to vector<16x16xf32>
    %92 = arith.select %90, %88, %91 : vector<16x16xi1>, vector<16x16xf32>
    %cst_44 = arith.constant dense<0xFF800000> : vector<16xf32>
    %93 = vector.multi_reduction <maximumf>, %92, %cst_44 [1] : vector<16x16xf32> to vector<16xf32>
    %94 = vector.shape_cast %93 : vector<16xf32> to vector<16x1xf32>
    %95 = vector.broadcast %94 : vector<16x1xf32> to vector<16x16xf32>
    %96 = arith.subf %92, %95 : vector<16x16xf32>
    %97 = math.exp %96 : vector<16x16xf32>
    %cst_45 = arith.constant dense<0.000000e+00> : vector<16xf32>
    %98 = vector.multi_reduction <add>, %97, %cst_45 [1] : vector<16x16xf32> to vector<16xf32>
    %99 = vector.shape_cast %98 : vector<16xf32> to vector<16x1xf32>
    %cst_46 = arith.constant 1.000000e+00 : f32
    %100 = vector.broadcast %cst_46 : f32 to vector<16x1xf32>
    %101 = arith.divf %100, %99 : vector<16x1xf32>
    %cst_47 = arith.constant dense<0.000000e+00> : vector<16x8xf32>
    %102 = tpu.matmul %97, %86, %cst_47 {dimension_numbers = #tpu.dot_dimension_numbers<[1], [0], [0], [1], [0, 0, 1, 1], [], []>} : vector<16x16xf32>, vector<16x8xf32>, vector<16x8xf32> -> vector<16x8xf32>
    %103 = vector.broadcast %101 : vector<16x1xf32> to vector<16x8xf32>
    %104 = arith.mulf %102, %103 : vector<16x8xf32>
    %105 = vector.extract_strided_slice %14 {offsets = [24, 0], sizes = [8, 32], strides = [1, 1]} : vector<32x32xf32> to vector<8x32xf32>
    %cst_48 = arith.constant dense<0.000000e+00> : vector<16x32xf32>
    %106 = tpu.matmul %104, %105, %cst_48 {dimension_numbers = #tpu.dot_dimension_numbers<[1], [0], [0], [1], [0, 0, 1, 1], [], []>} : vector<16x8xf32>, vector<8x32xf32>, vector<16x32xf32> -> vector<16x32xf32>
    %107 = arith.addf %84, %106 : vector<16x32xf32>
    %c0_49 = arith.constant 0 : index
    %c0_50 = arith.constant 0 : index
    %108 = vector.load %arg7[%c0_49, %c0_50] : memref<1x32xf32, #tpu.memory_space<vmem>>, vector<1x32xf32>
    %109 = vector.broadcast %108 : vector<1x32xf32> to vector<16x32xf32>
    %110 = arith.addf %107, %109 : vector<16x32xf32>
    %111 = arith.addf %3, %110 : vector<16x32xf32>
    %c0_51 = arith.constant 0 : index
    %c0_52 = arith.constant 0 : index
    %112 = vector.load %arg8[%c0_51, %c0_52] : memref<1x32xf32, #tpu.memory_space<vmem>>, vector<1x32xf32>
    %c0_53 = arith.constant 0 : index
    %c0_54 = arith.constant 0 : index
    %113 = vector.load %arg9[%c0_53, %c0_54] : memref<1x32xf32, #tpu.memory_space<vmem>>, vector<1x32xf32>
    %cst_55 = arith.constant dense<0.000000e+00> : vector<16xf32>
    %114 = vector.multi_reduction <add>, %111, %cst_55 [1] : vector<16x32xf32> to vector<16xf32>
    %115 = vector.shape_cast %114 : vector<16xf32> to vector<16x1xf32>
    %cst_56 = arith.constant 3.200000e+01 : f32
    %116 = vector.broadcast %cst_56 : f32 to vector<16x1xf32>
    %117 = arith.divf %115, %116 : vector<16x1xf32>
    %118 = vector.broadcast %117 : vector<16x1xf32> to vector<16x32xf32>
    %119 = arith.subf %111, %118 : vector<16x32xf32>
    %120 = arith.mulf %119, %119 : vector<16x32xf32>
    %cst_57 = arith.constant dense<0.000000e+00> : vector<16xf32>
    %121 = vector.multi_reduction <add>, %120, %cst_57 [1] : vector<16x32xf32> to vector<16xf32>
    %122 = vector.shape_cast %121 : vector<16xf32> to vector<16x1xf32>
    %cst_58 = arith.constant 3.200000e+01 : f32
    %123 = vector.broadcast %cst_58 : f32 to vector<16x1xf32>
    %124 = arith.divf %122, %123 : vector<16x1xf32>
    %cst_59 = arith.constant 9.99999974E-6 : f32
    %125 = vector.broadcast %cst_59 : f32 to vector<16x1xf32>
    %126 = arith.addf %124, %125 : vector<16x1xf32>
    %127 = math.rsqrt %126 : vector<16x1xf32>
    %128 = vector.broadcast %127 : vector<16x1xf32> to vector<16x32xf32>
    %129 = arith.mulf %119, %128 : vector<16x32xf32>
    %130 = vector.broadcast %112 : vector<1x32xf32> to vector<16x32xf32>
    %131 = arith.mulf %129, %130 : vector<16x32xf32>
    %132 = vector.broadcast %113 : vector<1x32xf32> to vector<16x32xf32>
    %133 = arith.addf %131, %132 : vector<16x32xf32>
    %c0_60 = arith.constant 0 : index
    %c0_61 = arith.constant 0 : index
    %134 = vector.load %arg10[%c0_60, %c0_61] : memref<32x32xf32, #tpu.memory_space<vmem>>, vector<32x32xf32>
    %cst_62 = arith.constant dense<0.000000e+00> : vector<16x32xf32>
    %135 = tpu.matmul %133, %134, %cst_62 {dimension_numbers = #tpu.dot_dimension_numbers<[1], [0], [0], [1], [0, 0, 1, 1], [], []>} : vector<16x32xf32>, vector<32x32xf32>, vector<16x32xf32> -> vector<16x32xf32>
    %c0_63 = arith.constant 0 : index
    %c0_64 = arith.constant 0 : index
    %136 = vector.load %arg11[%c0_63, %c0_64] : memref<1x32xf32, #tpu.memory_space<vmem>>, vector<1x32xf32>
    %137 = vector.broadcast %136 : vector<1x32xf32> to vector<16x32xf32>
    %138 = arith.addf %135, %137 : vector<16x32xf32>
    %cst_65 = arith.constant 5.000000e-01 : f32
    %139 = vector.broadcast %cst_65 : f32 to vector<16x32xf32>
    %140 = arith.mulf %139, %138 : vector<16x32xf32>
    %cst_66 = arith.constant 0.707106769 : f32
    %141 = vector.broadcast %cst_66 : f32 to vector<16x32xf32>
    %142 = arith.mulf %138, %141 : vector<16x32xf32>
    %cst_67 = arith.constant 0.000000e+00 : f32
    %143 = vector.broadcast %cst_67 : f32 to vector<16x32xf32>
    %144 = arith.cmpf oge, %142, %143 : vector<16x32xf32>
    %cst_68 = arith.constant 1.000000e+00 : f32
    %cst_69 = arith.constant -1.000000e+00 : f32
    %145 = vector.broadcast %cst_68 : f32 to vector<16x32xf32>
    %146 = vector.broadcast %cst_69 : f32 to vector<16x32xf32>
    %147 = arith.select %144, %145, %146 : vector<16x32xi1>, vector<16x32xf32>
    %148 = math.absf %142 : vector<16x32xf32>
    %cst_70 = arith.constant 0.327591091 : f32
    %149 = vector.broadcast %cst_70 : f32 to vector<16x32xf32>
    %150 = arith.mulf %149, %148 : vector<16x32xf32>
    %cst_71 = arith.constant 1.000000e+00 : f32
    %151 = vector.broadcast %cst_71 : f32 to vector<16x32xf32>
    %152 = arith.addf %151, %150 : vector<16x32xf32>
    %cst_72 = arith.constant 1.000000e+00 : f32
    %153 = vector.broadcast %cst_72 : f32 to vector<16x32xf32>
    %154 = arith.divf %153, %152 : vector<16x32xf32>
    %cst_73 = arith.constant 1.06140542 : f32
    %155 = vector.broadcast %cst_73 : f32 to vector<16x32xf32>
    %156 = arith.mulf %155, %154 : vector<16x32xf32>
    %cst_74 = arith.constant -1.45315206 : f32
    %157 = vector.broadcast %cst_74 : f32 to vector<16x32xf32>
    %158 = arith.addf %156, %157 : vector<16x32xf32>
    %159 = arith.mulf %158, %154 : vector<16x32xf32>
    %cst_75 = arith.constant 1.42141378 : f32
    %160 = vector.broadcast %cst_75 : f32 to vector<16x32xf32>
    %161 = arith.addf %159, %160 : vector<16x32xf32>
    %162 = arith.mulf %161, %154 : vector<16x32xf32>
    %cst_76 = arith.constant -0.284496725 : f32
    %163 = vector.broadcast %cst_76 : f32 to vector<16x32xf32>
    %164 = arith.addf %162, %163 : vector<16x32xf32>
    %165 = arith.mulf %164, %154 : vector<16x32xf32>
    %cst_77 = arith.constant 0.254829586 : f32
    %166 = vector.broadcast %cst_77 : f32 to vector<16x32xf32>
    %167 = arith.addf %165, %166 : vector<16x32xf32>
    %168 = arith.mulf %167, %154 : vector<16x32xf32>
    %cst_78 = arith.constant 0.000000e+00 : f32
    %169 = vector.broadcast %cst_78 : f32 to vector<16x32xf32>
    %170 = arith.subf %169, %148 : vector<16x32xf32>
    %171 = arith.mulf %170, %148 : vector<16x32xf32>
    %172 = math.exp %171 : vector<16x32xf32>
    %173 = arith.mulf %168, %172 : vector<16x32xf32>
    %cst_79 = arith.constant 1.000000e+00 : f32
    %174 = vector.broadcast %cst_79 : f32 to vector<16x32xf32>
    %175 = arith.subf %174, %173 : vector<16x32xf32>
    %176 = arith.mulf %147, %175 : vector<16x32xf32>
    %cst_80 = arith.constant 1.000000e+00 : f32
    %177 = vector.broadcast %cst_80 : f32 to vector<16x32xf32>
    %178 = arith.addf %177, %176 : vector<16x32xf32>
    %179 = arith.mulf %140, %178 : vector<16x32xf32>
    %c0_81 = arith.constant 0 : index
    %c0_82 = arith.constant 0 : index
    %180 = vector.load %arg12[%c0_81, %c0_82] : memref<32x32xf32, #tpu.memory_space<vmem>>, vector<32x32xf32>
    %cst_83 = arith.constant dense<0.000000e+00> : vector<16x32xf32>
    %181 = tpu.matmul %179, %180, %cst_83 {dimension_numbers = #tpu.dot_dimension_numbers<[1], [0], [0], [1], [0, 0, 1, 1], [], []>} : vector<16x32xf32>, vector<32x32xf32>, vector<16x32xf32> -> vector<16x32xf32>
    %c0_84 = arith.constant 0 : index
    %c0_85 = arith.constant 0 : index
    %182 = vector.load %arg13[%c0_84, %c0_85] : memref<1x32xf32, #tpu.memory_space<vmem>>, vector<1x32xf32>
    %183 = vector.broadcast %182 : vector<1x32xf32> to vector<16x32xf32>
    %184 = arith.addf %181, %183 : vector<16x32xf32>
    %185 = arith.addf %133, %184 : vector<16x32xf32>
    %c0_86 = arith.constant 0 : index
    %c0_87 = arith.constant 0 : index
    %186 = vector.load %arg14[%c0_86, %c0_87] : memref<1x32xf32, #tpu.memory_space<vmem>>, vector<1x32xf32>
    %c0_88 = arith.constant 0 : index
    %c0_89 = arith.constant 0 : index
    %187 = vector.load %arg15[%c0_88, %c0_89] : memref<1x32xf32, #tpu.memory_space<vmem>>, vector<1x32xf32>
    %cst_90 = arith.constant dense<0.000000e+00> : vector<16xf32>
    %188 = vector.multi_reduction <add>, %185, %cst_90 [1] : vector<16x32xf32> to vector<16xf32>
    %189 = vector.shape_cast %188 : vector<16xf32> to vector<16x1xf32>
    %cst_91 = arith.constant 3.200000e+01 : f32
    %190 = vector.broadcast %cst_91 : f32 to vector<16x1xf32>
    %191 = arith.divf %189, %190 : vector<16x1xf32>
    %192 = vector.broadcast %191 : vector<16x1xf32> to vector<16x32xf32>
    %193 = arith.subf %185, %192 : vector<16x32xf32>
    %194 = arith.mulf %193, %193 : vector<16x32xf32>
    %cst_92 = arith.constant dense<0.000000e+00> : vector<16xf32>
    %195 = vector.multi_reduction <add>, %194, %cst_92 [1] : vector<16x32xf32> to vector<16xf32>
    %196 = vector.shape_cast %195 : vector<16xf32> to vector<16x1xf32>
    %cst_93 = arith.constant 3.200000e+01 : f32
    %197 = vector.broadcast %cst_93 : f32 to vector<16x1xf32>
    %198 = arith.divf %196, %197 : vector<16x1xf32>
    %cst_94 = arith.constant 9.99999974E-6 : f32
    %199 = vector.broadcast %cst_94 : f32 to vector<16x1xf32>
    %200 = arith.addf %198, %199 : vector<16x1xf32>
    %201 = math.rsqrt %200 : vector<16x1xf32>
    %202 = vector.broadcast %201 : vector<16x1xf32> to vector<16x32xf32>
    %203 = arith.mulf %193, %202 : vector<16x32xf32>
    %204 = vector.broadcast %186 : vector<1x32xf32> to vector<16x32xf32>
    %205 = arith.mulf %203, %204 : vector<16x32xf32>
    %206 = vector.broadcast %187 : vector<1x32xf32> to vector<16x32xf32>
    %207 = arith.addf %205, %206 : vector<16x32xf32>
    %c0_95 = arith.constant 0 : index
    %c0_96 = arith.constant 0 : index
    %208 = vector.load %arg16[%c0_95, %c0_96] : memref<16x32xf32, #tpu.memory_space<vmem>>, vector<16x32xf32>
    tpu.vector_store %arg16[%c0_95, %c0_96], %207 {strides = array<i32>} : memref<16x32xf32, #tpu.memory_space<vmem>>, vector<16x32xf32>,
    return
  }
  func.func @transform_0(%arg0: i32) -> (i32, i32) {
    %c0_i32 = arith.constant 0 : i32
    %c0_i32_0 = arith.constant 0 : i32
    %c0_i32_1 = arith.constant 0 : i32
    return %c0_i32, %c0_i32_0 : i32, i32
  }
  func.func @transform_1(%arg0: i32) -> (i32, i32) {
    %c0_i32 = arith.constant 0 : i32
    %c0_i32_0 = arith.constant 0 : i32
    %c0_i32_1 = arith.constant 0 : i32
    return %c0_i32, %c0_i32_0 : i32, i32
  }
  func.func @transform_2(%arg0: i32) -> (i32, i32) {
    %c0_i32 = arith.constant 0 : i32
    %c0_i32_0 = arith.constant 0 : i32
    %c0_i32_1 = arith.constant 0 : i32
    return %c0_i32, %c0_i32_0 : i32, i32
  }
  func.func @transform_3(%arg0: i32) -> (i32, i32) {
    %c0_i32 = arith.constant 0 : i32
    %c0_i32_0 = arith.constant 0 : i32
    %c0_i32_1 = arith.constant 0 : i32
    return %c0_i32, %c0_i32_0 : i32, i32
  }
  func.func @transform_4(%arg0: i32) -> (i32, i32) {
    %c0_i32 = arith.constant 0 : i32
    %c0_i32_0 = arith.constant 0 : i32
    %c0_i32_1 = arith.constant 0 : i32
    return %c0_i32, %c0_i32_0 : i32, i32
  }
  func.func @transform_5(%arg0: i32) -> (i32, i32) {
    %c0_i32 = arith.constant 0 : i32
    %c0_i32_0 = arith.constant 0 : i32
    %c0_i32_1 = arith.constant 0 : i32
    return %c0_i32, %c0_i32_0 : i32, i32
  }
  func.func @transform_6(%arg0: i32) -> (i32, i32) {
    %c0_i32 = arith.constant 0 : i32
    %c0_i32_0 = arith.constant 0 : i32
    %c0_i32_1 = arith.constant 0 : i32
    return %c0_i32, %c0_i32_0 : i32, i32
  }
  func.func @transform_7(%arg0: i32) -> (i32, i32) {
    %c0_i32 = arith.constant 0 : i32
    %c0_i32_0 = arith.constant 0 : i32
    %c0_i32_1 = arith.constant 0 : i32
    return %c0_i32, %c0_i32_0 : i32, i32
  }
  func.func @transform_8(%arg0: i32) -> (i32, i32) {
    %c0_i32 = arith.constant 0 : i32
    %c0_i32_0 = arith.constant 0 : i32
    %c0_i32_1 = arith.constant 0 : i32
    return %c0_i32, %c0_i32_0 : i32, i32
  }
  func.func @transform_9(%arg0: i32) -> (i32, i32) {
    %c0_i32 = arith.constant 0 : i32
    %c0_i32_0 = arith.constant 0 : i32
    %c0_i32_1 = arith.constant 0 : i32
    return %c0_i32, %c0_i32_0 : i32, i32
  }
  func.func @transform_10(%arg0: i32) -> (i32, i32) {
    %c0_i32 = arith.constant 0 : i32
    %c0_i32_0 = arith.constant 0 : i32
    %c0_i32_1 = arith.constant 0 : i32
    return %c0_i32, %c0_i32_0 : i32, i32
  }
  func.func @transform_11(%arg0: i32) -> (i32, i32) {
    %c0_i32 = arith.constant 0 : i32
    %c0_i32_0 = arith.constant 0 : i32
    %c0_i32_1 = arith.constant 0 : i32
    return %c0_i32, %c0_i32_0 : i32, i32
  }
  func.func @transform_12(%arg0: i32) -> (i32, i32) {
    %c0_i32 = arith.constant 0 : i32
    %c0_i32_0 = arith.constant 0 : i32
    %c0_i32_1 = arith.constant 0 : i32
    return %c0_i32, %c0_i32_0 : i32, i32
  }
  func.func @transform_13(%arg0: i32) -> (i32, i32) {
    %c0_i32 = arith.constant 0 : i32
    %c0_i32_0 = arith.constant 0 : i32
    %c0_i32_1 = arith.constant 0 : i32
    return %c0_i32, %c0_i32_0 : i32, i32
  }
  func.func @transform_14(%arg0: i32) -> (i32, i32) {
    %c0_i32 = arith.constant 0 : i32
    %c0_i32_0 = arith.constant 0 : i32
    %c0_i32_1 = arith.constant 0 : i32
    return %c0_i32, %c0_i32_0 : i32, i32
  }
  func.func @transform_15(%arg0: i32) -> (i32, i32) {
    %c0_i32 = arith.constant 0 : i32
    %c0_i32_0 = arith.constant 0 : i32
    return %arg0, %c0_i32 : i32, i32
  }
}

</mosaic_0001>

<llo_original>
// kernel: _lambda_.4
$region0: #{_lambda_.4}
  #allocation0 [shape = 'u32[]', space=smem, size = 0x4, offset = 0x4, fixed_abs, tag = 'smem constant byte address 0x4 - core index']
  #allocation1 [shape = 'u32[144,128]{1,0:T(1,128)}', space=vmem, size = 0x12000, scoped, tag = 'internal scratch']
  %s0 = inlined_call_operand.vmem [shape: f32[16,32], index: 0, kind: input, shape index: {}]
  %s1 = inlined_call_operand.vmem [shape: f32[3,32,32], index: 1, kind: input, shape index: {}]
  %s2 = inlined_call_operand.vmem [shape: f32[3,1,32], index: 2, kind: input, shape index: {}]
  %s3 = inlined_call_operand.vmem [shape: f32[16,32], index: 3, kind: output, shape index: {0}]
  %s4 = inlined_call_operand.vmem [shape: f32[16,32], index: 4, kind: output, shape index: {1}]
  %s5 = inlined_call_operand.hbm [shape: f32[1,16], index: 5, kind: output, shape index: {2}]
  %6 = xla_tuple %s3, %s4, %s5
  %s7 = sld [smem:[#allocation0]]
  $region38: #{_lambda_.4} parent=0
    _
  %s9 = ssub.s32 1, %s7
  %s10 = scalar_select 0, %s9, %s7
  $region1: #{_lambda_.4} parent=0
    #allocation2 [shape = 'u8[512]{0}', space=vmem, size = 0x400, scoped, tag = 'output window, operand 2, single buffered']
    #allocation3 [shape = 's32[1]{0}', space=sflag, size = 0x4, scoped, tag = 'scoped memory for _lambda_.4']
    %11 = vsyncpa [#allocation3], 0
    // Predicated region
    $region2: #{_lambda_.4} parent=1 // pred_check
      _
    $region3: #{_lambda_.4} parent=1 // pred_check_branch
      %13 = sbr.rel (0) target = $region5
    $region4: #{_lambda_.4} parent=1 // pred_region
      _
    $region5: #{_lambda_.4} parent=1 // pred_fallthru
      _
    // Predicated region
    $region6: #{_lambda_.4} parent=1 // pred_check
      _
    $region7: #{_lambda_.4} parent=1 // pred_check_branch
      %15 = sbr.rel (0) target = $region9
    $region8: #{_lambda_.4} parent=1 // pred_region
      _
    $region9: #{_lambda_.4} parent=1 // pred_fallthru
      _
    // Predicated region
    $region10: #{_lambda_.4} parent=1 // pred_check
      _
    $region11: #{_lambda_.4} parent=1 // pred_check_branch
      %17 = sbr.rel (0) target = $region13
    $region12: #{_lambda_.4} parent=1 // pred_region
      _
    $region13: #{_lambda_.4} parent=1 // pred_fallthru
      _
    %v18 = vld [vmem:[%s0] sm:$0xff]
    %v19 = vld [vmem:[%s0 + $0x8] sm:$0xff]
    %s20 = scalar_lea.vmem %s1, 32
    %v21 = vld [vmem:[%s20] sm:$0xff]
    %v22 = vld [vmem:[%s20 + $0x8] sm:$0xff]
    %v23 = vld [vmem:[%s20 + $0x10] sm:$0xff]
    %v24 = vld [vmem:[%s20 + $0x18] sm:$0xff]
    %s25 = scalar_lea.vmem %s2, 1
    %v26 = vld [vmem:[%s25] sm:$0x1]
    %v28 = vlaneseq
    %v29 = vshrl.u32 %v28, 7
    %v30 = vsub.s32 0, %v29
    %v31 = vrot.slane %v26, %v30
    %vm33 = vcmask 261120
    %v35 = vsel %vm33, %v18, 0
    %v38 = vsel %vm33, %v19, 0
    %40 = vmatprep.subr.mxu0 0.0
    %41 = vmatpush1.msra.mxu0 %v21
    %42 = vmatprep.subr.mxu0 0.0
    %43 = vmatpush1.msra.mxu0 %v22
    %44 = vmatprep.subr.mxu0 0.0
    %45 = vmatpush1.msra.mxu0 %v23
    %46 = vmatprep.subr.mxu0 0.0
    %47 = vmatpush1.msra.mxu0 %v24
    %48 = vmatprep.subr.mxu0 0.0
    %49 = vmatpush1.msra.mxu0 0.0
    %50 = vmatprep.subr.mxu0 0.0
    %51 = vmatpush1.msra.mxu0 0.0
    %52 = vmatprep.subr.mxu0 0.0
    %53 = vmatpush1.msra.mxu0 0.0
    %54 = vmatprep.subr.mxu0 0.0
    %55 = vmatpush1.msra.mxu0 0.0
    %56 = vmatprep.subr.mxu0 0.0
    %57 = vmatpush1.msra.mxu0 0.0
    %58 = vmatprep.subr.mxu0 0.0
    %59 = vmatpush1.msra.mxu0 0.0
    %60 = vmatprep.subr.mxu0 0.0
    %61 = vmatpush1.msra.mxu0 0.0
    %62 = vmatprep.subr.mxu0 0.0
    %63 = vmatpush1.msra.mxu0 0.0
    %64 = vmatprep.subr.mxu0 0.0
    %65 = vmatpush1.msra.mxu0 0.0
    %66 = vmatprep.subr.mxu0 0.0
    %67 = vmatpush1.msra.mxu0 0.0
    %68 = vmatprep.subr.mxu0 0.0
    %69 = vmatpush1.msra.mxu0 0.0
    %70 = vmatprep.subr.mxu0 0.0
    %71 = vmatpush1.msra.mxu0 0.0
    %72 = vmatprep.subr.mxu0 0.0
    %73 = vmatpush1.msra.mxu0 0.0
    %74 = vmatprep.subr.mxu0 0.0
    %75 = vmatpush1.msra.mxu0 0.0
    %76 = vmatprep.subr.mxu0 0.0
    %77 = vmatpush1.msra.mxu0 0.0
    %78 = vmatprep.subr.mxu0 0.0
    %79 = vmatpush1.msra.mxu0 0.0
    %80 = vmatprep.subr.mxu0 0.0
    %81 = vmatpush1.msra.mxu0 0.0
    %82 = vmatprep.subr.mxu0 0.0
    %83 = vmatpush1.msra.mxu0 0.0
    %84 = vmatprep.subr.mxu0 0.0
    %85 = vmatpush1.msra.mxu0 0.0
    %86 = vmatprep.subr.mxu0 0.0
    %87 = vmatpush1.msra.mxu0 0.0
    %88 = vmatprep.subr.mxu0 0.0
    %89 = vmatpush1.msra.mxu0 0.0
    %90 = vmatprep.subr.mxu0 0.0
    %91 = vmatpush1.msra.mxu0 0.0
    %92 = vmatprep.subr.mxu0 0.0
    %93 = vmatpush1.msra.mxu0 0.0
    %94 = vmatprep.subr.mxu0 0.0
    %95 = vmatpush1.msra.mxu0 0.0
    %96 = vmatprep.subr.mxu0 0.0
    %97 = vmatpush1.msra.mxu0 0.0
    %98 = vmatprep.subr.mxu0 0.0
    %99 = vmatpush1.msra.mxu0 0.0
    %100 = vmatprep.subr.mxu0 0.0
    %101 = vmatpush1.msra.mxu0 0.0
    %102 = vmatprep.subr.mxu0 0.0
    %103 = vmatpush1.msra.mxu0 0.0
    %104 = vmatprep.mubr.f32.mxu0 0.0
    %105 = vmatmul.mubr.f32.gmra.mrb[0].mxu0 %v35
    %v106 = vpop.f32.mrb[0].mxu0
    %v107 = vadd.f32 %v31, %v106
    %v108 = vpop.f32.mrb[0].mxu0
    %109 = vmatprep.mubr.f32.mxu0 0.0
    %110 = vmatmul.mubr.f32.gmra.mrb[0].mxu0 %v38
    %v111 = vpop.f32.mrb[0].mxu0
    %v112 = vadd.f32 %v31, %v111
    %v113 = vpop.f32.mrb[0].mxu0
    %114 = vdwg.mxu0
    %s115 = scalar_lea.vmem %s1, 64
    %v116 = vld [vmem:[%s115] sm:$0xff]
    %v117 = vld [vmem:[%s115 + $0x8] sm:$0xff]
    %v118 = vld [vmem:[%s115 + $0x10] sm:$0xff]
    %v119 = vld [vmem:[%s115 + $0x18] sm:$0xff]
    %s120 = scalar_lea.vmem %s2, 2
    %v121 = vld [vmem:[%s120] sm:$0x1]
    %v123 = vlaneseq
    %v124 = vshrl.u32 %v123, 7
    %v125 = vsub.s32 0, %v124
    %v126 = vrot.slane %v121, %v125
    %128 = vmatprep.subr.mxu0 0.0
    %129 = vmatpush1.msra.mxu0 %v116
    %130 = vmatprep.subr.mxu0 0.0
    %131 = vmatpush1.msra.mxu0 %v117
    %132 = vmatprep.subr.mxu0 0.0
    %133 = vmatpush1.msra.mxu0 %v118
    %134 = vmatprep.subr.mxu0 0.0
    %135 = vmatpush1.msra.mxu0 %v119
    %136 = vmatprep.subr.mxu0 0.0
    %137 = vmatpush1.msra.mxu0 0.0
    %138 = vmatprep.subr.mxu0 0.0
    %139 = vmatpush1.msra.mxu0 0.0
    %140 = vmatprep.subr.mxu0 0.0
    %141 = vmatpush1.msra.mxu0 0.0
    %142 = vmatprep.subr.mxu0 0.0
    %143 = vmatpush1.msra.mxu0 0.0
    %144 = vmatprep.subr.mxu0 0.0
    %145 = vmatpush1.msra.mxu0 0.0
    %146 = vmatprep.subr.mxu0 0.0
    %147 = vmatpush1.msra.mxu0 0.0
    %148 = vmatprep.subr.mxu0 0.0
    %149 = vmatpush1.msra.mxu0 0.0
    %150 = vmatprep.subr.mxu0 0.0
    %151 = vmatpush1.msra.mxu0 0.0
    %152 = vmatprep.subr.mxu0 0.0
    %153 = vmatpush1.msra.mxu0 0.0
    %154 = vmatprep.subr.mxu0 0.0
    %155 = vmatpush1.msra.mxu0 0.0
    %156 = vmatprep.subr.mxu0 0.0
    %157 = vmatpush1.msra.mxu0 0.0
    %158 = vmatprep.subr.mxu0 0.0
    %159 = vmatpush1.msra.mxu0 0.0
    %160 = vmatprep.subr.mxu0 0.0
    %161 = vmatpush1.msra.mxu0 0.0
    %162 = vmatprep.subr.mxu0 0.0
    %163 = vmatpush1.msra.mxu0 0.0
    %164 = vmatprep.subr.mxu0 0.0
    %165 = vmatpush1.msra.mxu0 0.0
    %166 = vmatprep.subr.mxu0 0.0
    %167 = vmatpush1.msra.mxu0 0.0
    %168 = vmatprep.subr.mxu0 0.0
    %169 = vmatpush1.msra.mxu0 0.0
    %170 = vmatprep.subr.mxu0 0.0
    %171 = vmatpush1.msra.mxu0 0.0
    %172 = vmatprep.subr.mxu0 0.0
    %173 = vmatpush1.msra.mxu0 0.0
    %174 = vmatprep.subr.mxu0 0.0
    %175 = vmatpush1.msra.mxu0 0.0
    %176 = vmatprep.subr.mxu0 0.0
    %177 = vmatpush1.msra.mxu0 0.0
    %178 = vmatprep.subr.mxu0 0.0
    %179 = vmatpush1.msra.mxu0 0.0
    %180 = vmatprep.subr.mxu0 0.0
    %181 = vmatpush1.msra.mxu0 0.0
    %182 = vmatprep.subr.mxu0 0.0
    %183 = vmatpush1.msra.mxu0 0.0
    %184 = vmatprep.subr.mxu0 0.0
    %185 = vmatpush1.msra.mxu0 0.0
    %186 = vmatprep.subr.mxu0 0.0
    %187 = vmatpush1.msra.mxu0 0.0
    %188 = vmatprep.subr.mxu0 0.0
    %189 = vmatpush1.msra.mxu0 0.0
    %190 = vmatprep.subr.mxu0 0.0
    %191 = vmatpush1.msra.mxu0 0.0
    %192 = vmatprep.mubr.f32.mxu0 0.0
    %193 = vmatmul.mubr.f32.gmra.mrb[0].mxu0 %v35
    %v194 = vpop.f32.mrb[0].mxu0
    %v195 = vadd.f32 %v126, %v194
    %v196 = vpop.f32.mrb[0].mxu0
    %197 = vmatprep.mubr.f32.mxu0 0.0
    %198 = vmatmul.mubr.f32.gmra.mrb[0].mxu0 %v38
    %v199 = vpop.f32.mrb[0].mxu0
    %v200 = vadd.f32 %v126, %v199
    %v201 = vpop.f32.mrb[0].mxu0
    %202 = vdwg.mxu0
    %203 = vst.msk [vmem:[%s3] sm:$0xff] %vm33, %v107
    %204 = vst.msk [vmem:[%s3 + $0x8] sm:$0xff] %vm33, %v112
    %205 = vst.msk [vmem:[%s4] sm:$0xff] %vm33, %v195
    %206 = vst.msk [vmem:[%s4 + $0x8] sm:$0xff] %vm33, %v200
    %v207 = vld [vmem:[%s1] sm:$0xff]
    %v208 = vld [vmem:[%s1 + $0x8] sm:$0xff]
    %v209 = vld [vmem:[%s1 + $0x10] sm:$0xff]
    %v210 = vld [vmem:[%s1 + $0x18] sm:$0xff]
    %v211 = vld [vmem:[%s2] sm:$0x1]
    %v213 = vlaneseq
    %v214 = vshrl.u32 %v213, 7
    %v215 = vsub.s32 0, %v214
    %v216 = vrot.slane %v211, %v215
    %218 = vmatprep.subr.mxu0 0.0
    %219 = vmatpush1.msra.mxu0 %v207
    %220 = vmatprep.subr.mxu0 0.0
    %221 = vmatpush1.msra.mxu0 %v208
    %222 = vmatprep.subr.mxu0 0.0
    %223 = vmatpush1.msra.mxu0 %v209
    %224 = vmatprep.subr.mxu0 0.0
    %225 = vmatpush1.msra.mxu0 %v210
    %226 = vmatprep.subr.mxu0 0.0
    %227 = vmatpush1.msra.mxu0 0.0
    %228 = vmatprep.subr.mxu0 0.0
    %229 = vmatpush1.msra.mxu0 0.0
    %230 = vmatprep.subr.mxu0 0.0
    %231 = vmatpush1.msra.mxu0 0.0
    %232 = vmatprep.subr.mxu0 0.0
    %233 = vmatpush1.msra.mxu0 0.0
    %234 = vmatprep.subr.mxu0 0.0
    %235 = vmatpush1.msra.mxu0 0.0
    %236 = vmatprep.subr.mxu0 0.0
    %237 = vmatpush1.msra.mxu0 0.0
    %238 = vmatprep.subr.mxu0 0.0
    %239 = vmatpush1.msra.mxu0 0.0
    %240 = vmatprep.subr.mxu0 0.0
    %241 = vmatpush1.msra.mxu0 0.0
    %242 = vmatprep.subr.mxu0 0.0
    %243 = vmatpush1.msra.mxu0 0.0
    %244 = vmatprep.subr.mxu0 0.0
    %245 = vmatpush1.msra.mxu0 0.0
    %246 = vmatprep.subr.mxu0 0.0
    %247 = vmatpush1.msra.mxu0 0.0
    %248 = vmatprep.subr.mxu0 0.0
    %249 = vmatpush1.msra.mxu0 0.0
    %250 = vmatprep.subr.mxu0 0.0
    %251 = vmatpush1.msra.mxu0 0.0
    %252 = vmatprep.subr.mxu0 0.0
    %253 = vmatpush1.msra.mxu0 0.0
    %254 = vmatprep.subr.mxu0 0.0
    %255 = vmatpush1.msra.mxu0 0.0
    %256 = vmatprep.subr.mxu0 0.0
    %257 = vmatpush1.msra.mxu0 0.0
    %258 = vmatprep.subr.mxu0 0.0
    %259 = vmatpush1.msra.mxu0 0.0
    %260 = vmatprep.subr.mxu0 0.0
    %261 = vmatpush1.msra.mxu0 0.0
    %262 = vmatprep.subr.mxu0 0.0
    %263 = vmatpush1.msra.mxu0 0.0
    %264 = vmatprep.subr.mxu0 0.0
    %265 = vmatpush1.msra.mxu0 0.0
    %266 = vmatprep.subr.mxu0 0.0
    %267 = vmatpush1.msra.mxu0 0.0
    %268 = vmatprep.subr.mxu0 0.0
    %269 = vmatpush1.msra.mxu0 0.0
    %270 = vmatprep.subr.mxu0 0.0
    %271 = vmatpush1.msra.mxu0 0.0
    %272 = vmatprep.subr.mxu0 0.0
    %273 = vmatpush1.msra.mxu0 0.0
    %274 = vmatprep.subr.mxu0 0.0
    %275 = vmatpush1.msra.mxu0 0.0
    %276 = vmatprep.subr.mxu0 0.0
    %277 = vmatpush1.msra.mxu0 0.0
    %278 = vmatprep.subr.mxu0 0.0
    %279 = vmatpush1.msra.mxu0 0.0
    %280 = vmatprep.subr.mxu0 0.0
    %281 = vmatpush1.msra.mxu0 0.0
    %282 = vmatprep.mubr.f32.mxu0 0.0
    %283 = vmatmul.mubr.f32.gmra.mrb[0].mxu0 %v35
    %v284 = vpop.f32.mrb[0].mxu0
    %v285 = vadd.f32 %v216, %v284
    %v286 = vpop.f32.mrb[0].mxu0
    %287 = vdwg.mxu0
    %v288 = vmul.f32 %v285, 0.35355338
    %v289 = vlaneseq
    %v290 = vand.u32 %v289, 127
    %vm291 = vcmp.lt.s32.totalorder %v290, 9
    %vm292 = vcmask 64512
    %v294 = vsel %vm292, %v288, 0
    %v297 = vsel %vm292, %v107, 0
    %v300 = vsel %vm292, %v112, 0
    %302 = vmatprep.subr.mxu0 0.0
    %303 = vmatpush1.xpose.msra.mxu0 %v297
    %304 = vmatprep.subr.mxu0 0.0
    %305 = vmatpush1.xpose.msra.mxu0 %v300
    %306 = vmatprep.subr.mxu0 0.0
    %307 = vmatpush1.xpose.msra.mxu0 0.0
    %308 = vmatprep.subr.mxu0 0.0
    %309 = vmatpush1.xpose.msra.mxu0 0.0
    %310 = vmatprep.subr.mxu0 0.0
    %311 = vmatpush1.xpose.msra.mxu0 0.0
    %312 = vmatprep.subr.mxu0 0.0
    %313 = vmatpush1.xpose.msra.mxu0 0.0
    %314 = vmatprep.subr.mxu0 0.0
    %315 = vmatpush1.xpose.msra.mxu0 0.0
    %316 = vmatprep.subr.mxu0 0.0
    %317 = vmatpush1.xpose.msra.mxu0 0.0
    %318 = vmatprep.subr.mxu0 0.0
    %319 = vmatpush1.xpose.msra.mxu0 0.0
    %320 = vmatprep.subr.mxu0 0.0
    %321 = vmatpush1.xpose.msra.mxu0 0.0
    %322 = vmatprep.subr.mxu0 0.0
    %323 = vmatpush1.xpose.msra.mxu0 0.0
    %324 = vmatprep.subr.mxu0 0.0
    %325 = vmatpush1.xpose.msra.mxu0 0.0
    %326 = vmatprep.subr.mxu0 0.0
    %327 = vmatpush1.xpose.msra.mxu0 0.0
    %328 = vmatprep.subr.mxu0 0.0
    %329 = vmatpush1.xpose.msra.mxu0 0.0
    %330 = vmatprep.subr.mxu0 0.0
    %331 = vmatpush1.xpose.msra.mxu0 0.0
    %332 = vmatprep.subr.mxu0 0.0
    %333 = vmatpush1.xpose.msra.mxu0 0.0
    %334 = vmatprep.subr.mxu0 0.0
    %335 = vmatpush1.xpose.msra.mxu0 0.0
    %336 = vmatprep.subr.mxu0 0.0
    %337 = vmatpush1.xpose.msra.mxu0 0.0
    %338 = vmatprep.subr.mxu0 0.0
    %339 = vmatpush1.xpose.msra.mxu0 0.0
    %340 = vmatprep.subr.mxu0 0.0
    %341 = vmatpush1.xpose.msra.mxu0 0.0
    %342 = vmatprep.subr.mxu0 0.0
    %343 = vmatpush1.xpose.msra.mxu0 0.0
    %344 = vmatprep.subr.mxu0 0.0
    %345 = vmatpush1.xpose.msra.mxu0 0.0
    %346 = vmatprep.subr.mxu0 0.0
    %347 = vmatpush1.xpose.msra.mxu0 0.0
    %348 = vmatprep.subr.mxu0 0.0
    %349 = vmatpush1.xpose.msra.mxu0 0.0
    %350 = vmatprep.subr.mxu0 0.0
    %351 = vmatpush1.xpose.msra.mxu0 0.0
    %352 = vmatprep.subr.mxu0 0.0
    %353 = vmatpush1.xpose.msra.mxu0 0.0
    %354 = vmatprep.subr.mxu0 0.0
    %355 = vmatpush1.xpose.msra.mxu0 0.0
    %356 = vmatprep.subr.mxu0 0.0
    %357 = vmatpush1.xpose.msra.mxu0 0.0
    %358 = vmatprep.subr.mxu0 0.0
    %359 = vmatpush1.xpose.msra.mxu0 0.0
    %360 = vmatprep.subr.mxu0 0.0
    %361 = vmatpush1.xpose.msra.mxu0 0.0
    %362 = vmatprep.subr.mxu0 0.0
    %363 = vmatpush1.xpose.msra.mxu0 0.0
    %364 = vmatprep.subr.mxu0 0.0
    %365 = vmatpush1.xpose.msra.mxu0 0.0
    %366 = vmatprep.mubr.f32.mxu0 0.0
    %367 = vmatmul.mubr.f32.gmra.mrb[0].mxu0 %v294
    %v368 = vpop.f32.mrb[0].mxu0
    %v369 = vadd.f32 0.0, %v368
    %v370 = vpop.f32.mrb[0].mxu0
    %371 = vdwg.mxu0
    %v372 = vsel %vm291, 1, 0
    %vm373 = vcmp.eq.s32.totalorder %v372, 1
    %v374 = vsel %vm373, %v369, -1e+30
    %vm375 = vcmask 130048
    %v376 = vsel %vm375, %v374, -inf
    %377 = vmax.xlane.f32.xlu0 %v376
    %v378 = vpop.xlane.xlu0 %377
    %v379 = vsub.f32 %v374, %v378
    %v380 = vmul.f32 %v379, 1.442695
    %v381 = vpow.pop %v380
    %v382 = vsel %vm375, %v381, 0.0
    %383 = vadd.xlane.f32.xlu0 %v382
    %v384 = vpop.xlane.xlu0 %383
    %v385 = vrcp.pop %v384
    %v386 = vmul.f32 1.0, %v385
    %v387 = vmul.f32 %v381, %v386
    %v388 = vadd.f32 %v387, 0.0
    %389 = vrot.lane.b32.xlu0 %v288, 120
    %v390 = vpop.permute.xlu0 %389
    %391 = vrot.lane.b32.xlu0 %v107, 120
    %v392 = vpop.permute.xlu0 %391
    %393 = vrot.lane.b32.xlu0 %v112, 120
    %v394 = vpop.permute.xlu0 %393
    %v395 = vsel %vm292, %v390, 0
    %v397 = vsel %vm292, %v392, 0
    %v399 = vsel %vm292, %v394, 0
    %401 = vmatprep.subr.mxu0 0.0
    %402 = vmatpush1.xpose.msra.mxu0 %v397
    %403 = vmatprep.subr.mxu0 0.0
    %404 = vmatpush1.xpose.msra.mxu0 %v399
    %405 = vmatprep.subr.mxu0 0.0
    %406 = vmatpush1.xpose.msra.mxu0 0.0
    %407 = vmatprep.subr.mxu0 0.0
    %408 = vmatpush1.xpose.msra.mxu0 0.0
    %409 = vmatprep.subr.mxu0 0.0
    %410 = vmatpush1.xpose.msra.mxu0 0.0
    %411 = vmatprep.subr.mxu0 0.0
    %412 = vmatpush1.xpose.msra.mxu0 0.0
    %413 = vmatprep.subr.mxu0 0.0
    %414 = vmatpush1.xpose.msra.mxu0 0.0
    %415 = vmatprep.subr.mxu0 0.0
    %416 = vmatpush1.xpose.msra.mxu0 0.0
    %417 = vmatprep.subr.mxu0 0.0
    %418 = vmatpush1.xpose.msra.mxu0 0.0
    %419 = vmatprep.subr.mxu0 0.0
    %420 = vmatpush1.xpose.msra.mxu0 0.0
    %421 = vmatprep.subr.mxu0 0.0
    %422 = vmatpush1.xpose.msra.mxu0 0.0
    %423 = vmatprep.subr.mxu0 0.0
    %424 = vmatpush1.xpose.msra.mxu0 0.0
    %425 = vmatprep.subr.mxu0 0.0
    %426 = vmatpush1.xpose.msra.mxu0 0.0
    %427 = vmatprep.subr.mxu0 0.0
    %428 = vmatpush1.xpose.msra.mxu0 0.0
    %429 = vmatprep.subr.mxu0 0.0
    %430 = vmatpush1.xpose.msra.mxu0 0.0
    %431 = vmatprep.subr.mxu0 0.0
    %432 = vmatpush1.xpose.msra.mxu0 0.0
    %433 = vmatprep.subr.mxu0 0.0
    %434 = vmatpush1.xpose.msra.mxu0 0.0
    %435 = vmatprep.subr.mxu0 0.0
    %436 = vmatpush1.xpose.msra.mxu0 0.0
    %437 = vmatprep.subr.mxu0 0.0
    %438 = vmatpush1.xpose.msra.mxu0 0.0
    %439 = vmatprep.subr.mxu0 0.0
    %440 = vmatpush1.xpose.msra.mxu0 0.0
    %441 = vmatprep.subr.mxu0 0.0
    %442 = vmatpush1.xpose.msra.mxu0 0.0
    %443 = vmatprep.subr.mxu0 0.0
    %444 = vmatpush1.xpose.msra.mxu0 0.0
    %445 = vmatprep.subr.mxu0 0.0
    %446 = vmatpush1.xpose.msra.mxu0 0.0
    %447 = vmatprep.subr.mxu0 0.0
    %448 = vmatpush1.xpose.msra.mxu0 0.0
    %449 = vmatprep.subr.mxu0 0.0
    %450 = vmatpush1.xpose.msra.mxu0 0.0
    %451 = vmatprep.subr.mxu0 0.0
    %452 = vmatpush1.xpose.msra.mxu0 0.0
    %453 = vmatprep.subr.mxu0 0.0
    %454 = vmatpush1.xpose.msra.mxu0 0.0
    %455 = vmatprep.subr.mxu0 0.0
    %456 = vmatpush1.xpose.msra.mxu0 0.0
    %457 = vmatprep.subr.mxu0 0.0
    %458 = vmatpush1.xpose.msra.mxu0 0.0
    %459 = vmatprep.subr.mxu0 0.0
    %460 = vmatpush1.xpose.msra.mxu0 0.0
    %461 = vmatprep.subr.mxu0 0.0
    %462 = vmatpush1.xpose.msra.mxu0 0.0
    %463 = vmatprep.subr.mxu0 0.0
    %464 = vmatpush1.xpose.msra.mxu0 0.0
    %465 = vmatprep.mubr.f32.mxu0 0.0
    %466 = vmatmul.mubr.f32.gmra.mrb[0].mxu0 %v395
    %v467 = vpop.f32.mrb[0].mxu0
    %v468 = vadd.f32 0.0, %v467
    %v469 = vpop.f32.mrb[0].mxu0
    %470 = vdwg.mxu0
    %v471 = vsel %vm373, %v468, -1e+30
    %v472 = vsel %vm375, %v471, -inf
    %473 = vmax.xlane.f32.xlu0 %v472
    %v474 = vpop.xlane.xlu0 %473
    %v475 = vsub.f32 %v471, %v474
    %v476 = vmul.f32 %v475, 1.442695
    %v477 = vpow.pop %v476
    %v478 = vsel %vm375, %v477, 0.0
    %479 = vadd.xlane.f32.xlu0 %v478
    %v480 = vpop.xlane.xlu0 %479
    %v481 = vrcp.pop %v480
    %v482 = vmul.f32 1.0, %v481
    %v483 = vmul.f32 %v477, %v482
    %v484 = vadd.f32 %v388, %v483
    %485 = vrot.lane.b32.xlu0 %v288, 112
    %v486 = vpop.permute.xlu0 %485
    %487 = vrot.lane.b32.xlu0 %v107, 112
    %v488 = vpop.permute.xlu0 %487
    %489 = vrot.lane.b32.xlu0 %v112, 112
    %v490 = vpop.permute.xlu0 %489
    %v491 = vsel %vm292, %v486, 0
    %v493 = vsel %vm292, %v488, 0
    %v495 = vsel %vm292, %v490, 0
    %497 = vmatprep.subr.mxu0 0.0
    %498 = vmatpush1.xpose.msra.mxu0 %v493
    %499 = vmatprep.subr.mxu0 0.0
    %500 = vmatpush1.xpose.msra.mxu0 %v495
    %501 = vmatprep.subr.mxu0 0.0
    %502 = vmatpush1.xpose.msra.mxu0 0.0
    %503 = vmatprep.subr.mxu0 0.0
    %504 = vmatpush1.xpose.msra.mxu0 0.0
    %505 = vmatprep.subr.mxu0 0.0
    %506 = vmatpush1.xpose.msra.mxu0 0.0
    %507 = vmatprep.subr.mxu0 0.0
    %508 = vmatpush1.xpose.msra.mxu0 0.0
    %509 = vmatprep.subr.mxu0 0.0
    %510 = vmatpush1.xpose.msra.mxu0 0.0
    %511 = vmatprep.subr.mxu0 0.0
    %512 = vmatpush1.xpose.msra.mxu0 0.0
    %513 = vmatprep.subr.mxu0 0.0
    %514 = vmatpush1.xpose.msra.mxu0 0.0
    %515 = vmatprep.subr.mxu0 0.0
    %516 = vmatpush1.xpose.msra.mxu0 0.0
    %517 = vmatprep.subr.mxu0 0.0
    %518 = vmatpush1.xpose.msra.mxu0 0.0
    %519 = vmatprep.subr.mxu0 0.0
    %520 = vmatpush1.xpose.msra.mxu0 0.0
    %521 = vmatprep.subr.mxu0 0.0
    %522 = vmatpush1.xpose.msra.mxu0 0.0
    %523 = vmatprep.subr.mxu0 0.0
    %524 = vmatpush1.xpose.msra.mxu0 0.0
    %525 = vmatprep.subr.mxu0 0.0
    %526 = vmatpush1.xpose.msra.mxu0 0.0
    %527 = vmatprep.subr.mxu0 0.0
    %528 = vmatpush1.xpose.msra.mxu0 0.0
    %529 = vmatprep.subr.mxu0 0.0
    %530 = vmatpush1.xpose.msra.mxu0 0.0
    %531 = vmatprep.subr.mxu0 0.0
    %532 = vmatpush1.xpose.msra.mxu0 0.0
    %533 = vmatprep.subr.mxu0 0.0
    %534 = vmatpush1.xpose.msra.mxu0 0.0
    %535 = vmatprep.subr.mxu0 0.0
    %536 = vmatpush1.xpose.msra.mxu0 0.0
    %537 = vmatprep.subr.mxu0 0.0
    %538 = vmatpush1.xpose.msra.mxu0 0.0
    %539 = vmatprep.subr.mxu0 0.0
    %540 = vmatpush1.xpose.msra.mxu0 0.0
    %541 = vmatprep.subr.mxu0 0.0
    %542 = vmatpush1.xpose.msra.mxu0 0.0
    %543 = vmatprep.subr.mxu0 0.0
    %544 = vmatpush1.xpose.msra.mxu0 0.0
    %545 = vmatprep.subr.mxu0 0.0
    %546 = vmatpush1.xpose.msra.mxu0 0.0
    %547 = vmatprep.subr.mxu0 0.0
    %548 = vmatpush1.xpose.msra.mxu0 0.0
    %549 = vmatprep.subr.mxu0 0.0
    %550 = vmatpush1.xpose.msra.mxu0 0.0
    %551 = vmatprep.subr.mxu0 0.0
    %552 = vmatpush1.xpose.msra.mxu0 0.0
    %553 = vmatprep.subr.mxu0 0.0
    %554 = vmatpush1.xpose.msra.mxu0 0.0
    %555 = vmatprep.subr.mxu0 0.0
    %556 = vmatpush1.xpose.msra.mxu0 0.0
    %557 = vmatprep.subr.mxu0 0.0
    %558 = vmatpush1.xpose.msra.mxu0 0.0
    %559 = vmatprep.subr.mxu0 0.0
    %560 = vmatpush1.xpose.msra.mxu0 0.0
    %561 = vmatprep.mubr.f32.mxu0 0.0
    %562 = vmatmul.mubr.f32.gmra.mrb[0].mxu0 %v491
    %v563 = vpop.f32.mrb[0].mxu0
    %v564 = vadd.f32 0.0, %v563
    %v565 = vpop.f32.mrb[0].mxu0
    %566 = vdwg.mxu0
    %v567 = vsel %vm373, %v564, -1e+30
    %v568 = vsel %vm375, %v567, -inf
    %569 = vmax.xlane.f32.xlu0 %v568
    %v570 = vpop.xlane.xlu0 %569
    %v571 = vsub.f32 %v567, %v570
    %v572 = vmul.f32 %v571, 1.442695
    %v573 = vpow.pop %v572
    %v574 = vsel %vm375, %v573, 0.0
    %575 = vadd.xlane.f32.xlu0 %v574
    %v576 = vpop.xlane.xlu0 %575
    %v577 = vrcp.pop %v576
    %v578 = vmul.f32 1.0, %v577
    %v579 = vmul.f32 %v573, %v578
    %v580 = vadd.f32 %v484, %v579
    %581 = vrot.lane.b32.xlu0 %v288, 104
    %v582 = vpop.permute.xlu0 %581
    %583 = vrot.lane.b32.xlu0 %v107, 104
    %v584 = vpop.permute.xlu0 %583
    %585 = vrot.lane.b32.xlu0 %v112, 104
    %v586 = vpop.permute.xlu0 %585
    %v587 = vsel %vm292, %v582, 0
    %v589 = vsel %vm292, %v584, 0
    %v591 = vsel %vm292, %v586, 0
    %593 = vmatprep.subr.mxu0 0.0
    %594 = vmatpush1.xpose.msra.mxu0 %v589
    %595 = vmatprep.subr.mxu0 0.0
    %596 = vmatpush1.xpose.msra.mxu0 %v591
    %597 = vmatprep.subr.mxu0 0.0
    %598 = vmatpush1.xpose.msra.mxu0 0.0
    %599 = vmatprep.subr.mxu0 0.0
    %600 = vmatpush1.xpose.msra.mxu0 0.0
    %601 = vmatprep.subr.mxu0 0.0
    %602 = vmatpush1.xpose.msra.mxu0 0.0
    %603 = vmatprep.subr.mxu0 0.0
    %604 = vmatpush1.xpose.msra.mxu0 0.0
    %605 = vmatprep.subr.mxu0 0.0
    %606 = vmatpush1.xpose.msra.mxu0 0.0
    %607 = vmatprep.subr.mxu0 0.0
    %608 = vmatpush1.xpose.msra.mxu0 0.0
    %609 = vmatprep.subr.mxu0 0.0
    %610 = vmatpush1.xpose.msra.mxu0 0.0
    %611 = vmatprep.subr.mxu0 0.0
    %612 = vmatpush1.xpose.msra.mxu0 0.0
    %613 = vmatprep.subr.mxu0 0.0
    %614 = vmatpush1.xpose.msra.mxu0 0.0
    %615 = vmatprep.subr.mxu0 0.0
    %616 = vmatpush1.xpose.msra.mxu0 0.0
    %617 = vmatprep.subr.mxu0 0.0
    %618 = vmatpush1.xpose.msra.mxu0 0.0
    %619 = vmatprep.subr.mxu0 0.0
    %620 = vmatpush1.xpose.msra.mxu0 0.0
    %621 = vmatprep.subr.mxu0 0.0
    %622 = vmatpush1.xpose.msra.mxu0 0.0
    %623 = vmatprep.subr.mxu0 0.0
    %624 = vmatpush1.xpose.msra.mxu0 0.0
    %625 = vmatprep.subr.mxu0 0.0
    %626 = vmatpush1.xpose.msra.mxu0 0.0
    %627 = vmatprep.subr.mxu0 0.0
    %628 = vmatpush1.xpose.msra.mxu0 0.0
    %629 = vmatprep.subr.mxu0 0.0
    %630 = vmatpush1.xpose.msra.mxu0 0.0
    %631 = vmatprep.subr.mxu0 0.0
    %632 = vmatpush1.xpose.msra.mxu0 0.0
    %633 = vmatprep.subr.mxu0 0.0
    %634 = vmatpush1.xpose.msra.mxu0 0.0
    %635 = vmatprep.subr.mxu0 0.0
    %636 = vmatpush1.xpose.msra.mxu0 0.0
    %637 = vmatprep.subr.mxu0 0.0
    %638 = vmatpush1.xpose.msra.mxu0 0.0
    %639 = vmatprep.subr.mxu0 0.0
    %640 = vmatpush1.xpose.msra.mxu0 0.0
    %641 = vmatprep.subr.mxu0 0.0
    %642 = vmatpush1.xpose.msra.mxu0 0.0
    %643 = vmatprep.subr.mxu0 0.0
    %644 = vmatpush1.xpose.msra.mxu0 0.0
    %645 = vmatprep.subr.mxu0 0.0
    %646 = vmatpush1.xpose.msra.mxu0 0.0
    %647 = vmatprep.subr.mxu0 0.0
    %648 = vmatpush1.xpose.msra.mxu0 0.0
    %649 = vmatprep.subr.mxu0 0.0
    %650 = vmatpush1.xpose.msra.mxu0 0.0
    %651 = vmatprep.subr.mxu0 0.0
    %652 = vmatpush1.xpose.msra.mxu0 0.0
    %653 = vmatprep.subr.mxu0 0.0
    %654 = vmatpush1.xpose.msra.mxu0 0.0
    %655 = vmatprep.subr.mxu0 0.0
    %656 = vmatpush1.xpose.msra.mxu0 0.0
    %657 = vmatprep.mubr.f32.mxu0 0.0
    %658 = vmatmul.mubr.f32.gmra.mrb[0].mxu0 %v587
    %v659 = vpop.f32.mrb[0].mxu0
    %v660 = vadd.f32 0.0, %v659
    %v661 = vpop.f32.mrb[0].mxu0
    %662 = vdwg.mxu0
    %v663 = vsel %vm373, %v660, -1e+30
    %v664 = vsel %vm375, %v663, -inf
    %665 = vmax.xlane.f32.xlu0 %v664
    %v666 = vpop.xlane.xlu0 %665
    %v667 = vsub.f32 %v663, %v666
    %v668 = vmul.f32 %v667, 1.442695
    %v669 = vpow.pop %v668
    %v670 = vsel %vm375, %v669, 0.0
    %671 = vadd.xlane.f32.xlu0 %v670
    %v672 = vpop.xlane.xlu0 %671
    %v673 = vrcp.pop %v672
    %v674 = vmul.f32 1.0, %v673
    %v675 = vmul.f32 %v669, %v674
    %v676 = vadd.f32 %v580, %v675
    %v677 = vmul.f32 %v676, 0.25
    %vm678 = vcmask 122880
    %679 = vst.msk [vmem:[#allocation2] sm:$0x1] %vm678, %v677
    // Predicated region
    $region14: #{_lambda_.4} parent=1 // pred_check
      _
    $region15: #{_lambda_.4} parent=1 // pred_check_branch
      %681 = sbr.rel (0) target = $region17
    $region16: #{_lambda_.4} parent=1 // pred_region
      _
    $region17: #{_lambda_.4} parent=1 // pred_fallthru
      _
    // Predicated region
    $region18: #{_lambda_.4} parent=1 // pred_check
      _
    $region19: #{_lambda_.4} parent=1 // pred_check_branch
      %683 = sbr.rel (0) target = $region21
    $region20: #{_lambda_.4} parent=1 // pred_region
      _
    $region21: #{_lambda_.4} parent=1 // pred_fallthru
      _
    // Predicated region
    $region22: #{_lambda_.4} parent=1 // pred_check
      _
    $region23: #{_lambda_.4} parent=1 // pred_check_branch
      %685 = sbr.rel (0) target = $region25
    $region24: #{_lambda_.4} parent=1 // pred_region
      %s687 = ssub.s32 16, 16
      %688 = vsyncadd [#allocation3], %s687
      %s690 = sshll.u32 [#allocation2], 4
      %s691 = int_to_ptr.vmem [resolvable:$true] %s690
      %693 = dma.vmem_to_hbm [thread:$0]  %s691, 16, %s5, [#allocation3]
    $region25: #{_lambda_.4} parent=1 // pred_fallthru
      _
    // Predicated region
    $region26: #{_lambda_.4} parent=1 // pred_check
      _
    $region27: #{_lambda_.4} parent=1 // pred_check_branch
      %695 = sbr.rel (0) target = $region29
    $region28: #{_lambda_.4} parent=1 // pred_region
      _
    $region29: #{_lambda_.4} parent=1 // pred_fallthru
      _
    // Predicated region
    $region30: #{_lambda_.4} parent=1 // pred_check
      _
    $region31: #{_lambda_.4} parent=1 // pred_check_branch
      %697 = sbr.rel (0) target = $region33
    $region32: #{_lambda_.4} parent=1 // pred_region
      _
    $region33: #{_lambda_.4} parent=1 // pred_fallthru
      _
    // Predicated region
    $region34: #{_lambda_.4} parent=1 // pred_check
      _
    $region35: #{_lambda_.4} parent=1 // pred_check_branch
      %699 = sbr.rel (0) target = $region37
    $region36: #{_lambda_.4} parent=1 // pred_region
      %700 = dma.done [#allocation3], 16
    $region37: #{_lambda_.4} parent=1 // pred_fallthru
      _
    %701 = vsyncpa [#allocation3], 1

// kernel: _lambda_.6
$region0: #{_lambda_.6}
  #allocation0 [shape = 'u32[]', space=smem, size = 0x4, offset = 0x4, fixed_abs, tag = 'smem constant byte address 0x4 - core index']
  #allocation1 [shape = 'u32[144,128]{1,0:T(1,128)}', space=vmem, size = 0x12000, scoped, tag = 'internal scratch']
  %s0 = inlined_call_operand.vmem [shape: f32[16,32], index: 0, kind: input, shape index: {}]
  %s1 = inlined_call_operand.vmem [shape: f32[3,32,32], index: 1, kind: input, shape index: {}]
  %s2 = inlined_call_operand.vmem [shape: f32[3,1,32], index: 2, kind: input, shape index: {}]
  %s3 = inlined_call_operand.vmem [shape: f32[16,32], index: 3, kind: output, shape index: {0}]
  %s4 = inlined_call_operand.vmem [shape: f32[16,32], index: 4, kind: output, shape index: {1}]
  %s5 = inlined_call_operand.vmem [shape: f32[1,16], index: 5, kind: output, shape index: {2}]
  %6 = xla_tuple %s3, %s4, %s5
  %s7 = sld [smem:[#allocation0]]
  $region38: #{_lambda_.6} parent=0
    _
  %s9 = ssub.s32 1, %s7
  %s10 = scalar_select 0, %s9, %s7
  // Predicated region
  $region2: #{_lambda_.6} parent=0 // pred_check
    _
  $region3: #{_lambda_.6} parent=0 // pred_check_branch
    %12 = sbr.rel (0) target = $region5
  $region4: #{_lambda_.6} parent=0 // pred_region
    _
  $region5: #{_lambda_.6} parent=0 // pred_fallthru
    _
  // Predicated region
  $region6: #{_lambda_.6} parent=0 // pred_check
    _
  $region7: #{_lambda_.6} parent=0 // pred_check_branch
    %14 = sbr.rel (0) target = $region9
  $region8: #{_lambda_.6} parent=0 // pred_region
    _
  $region9: #{_lambda_.6} parent=0 // pred_fallthru
    _
  // Predicated region
  $region10: #{_lambda_.6} parent=0 // pred_check
    _
  $region11: #{_lambda_.6} parent=0 // pred_check_branch
    %16 = sbr.rel (0) target = $region13
  $region12: #{_lambda_.6} parent=0 // pred_region
    _
  $region13: #{_lambda_.6} parent=0 // pred_fallthru
    _
  %v17 = vld [vmem:[%s0] sm:$0xff]
  %v18 = vld [vmem:[%s0 + $0x8] sm:$0xff]
  %s19 = scalar_lea.vmem %s1, 32
  %v20 = vld [vmem:[%s19] sm:$0xff]
  %v21 = vld [vmem:[%s19 + $0x8] sm:$0xff]
  %v22 = vld [vmem:[%s19 + $0x10] sm:$0xff]
  %v23 = vld [vmem:[%s19 + $0x18] sm:$0xff]
  %s24 = scalar_lea.vmem %s2, 1
  %v25 = vld [vmem:[%s24] sm:$0x1]
  %v27 = vlaneseq
  %v28 = vshrl.u32 %v27, 7
  %v29 = vsub.s32 0, %v28
  %v30 = vrot.slane %v25, %v29
  %vm32 = vcmask 261120
  %v34 = vsel %vm32, %v17, 0
  %v37 = vsel %vm32, %v18, 0
  %39 = vmatprep.subr.mxu0 0.0
  %40 = vmatpush1.msra.mxu0 %v20
  %41 = vmatprep.subr.mxu0 0.0
  %42 = vmatpush1.msra.mxu0 %v21
  %43 = vmatprep.subr.mxu0 0.0
  %44 = vmatpush1.msra.mxu0 %v22
  %45 = vmatprep.subr.mxu0 0.0
  %46 = vmatpush1.msra.mxu0 %v23
  %47 = vmatprep.subr.mxu0 0.0
  %48 = vmatpush1.msra.mxu0 0.0
  %49 = vmatprep.subr.mxu0 0.0
  %50 = vmatpush1.msra.mxu0 0.0
  %51 = vmatprep.subr.mxu0 0.0
  %52 = vmatpush1.msra.mxu0 0.0
  %53 = vmatprep.subr.mxu0 0.0
  %54 = vmatpush1.msra.mxu0 0.0
  %55 = vmatprep.subr.mxu0 0.0
  %56 = vmatpush1.msra.mxu0 0.0
  %57 = vmatprep.subr.mxu0 0.0
  %58 = vmatpush1.msra.mxu0 0.0
  %59 = vmatprep.subr.mxu0 0.0
  %60 = vmatpush1.msra.mxu0 0.0
  %61 = vmatprep.subr.mxu0 0.0
  %62 = vmatpush1.msra.mxu0 0.0
  %63 = vmatprep.subr.mxu0 0.0
  %64 = vmatpush1.msra.mxu0 0.0
  %65 = vmatprep.subr.mxu0 0.0
  %66 = vmatpush1.msra.mxu0 0.0
  %67 = vmatprep.subr.mxu0 0.0
  %68 = vmatpush1.msra.mxu0 0.0
  %69 = vmatprep.subr.mxu0 0.0
  %70 = vmatpush1.msra.mxu0 0.0
  %71 = vmatprep.subr.mxu0 0.0
  %72 = vmatpush1.msra.mxu0 0.0
  %73 = vmatprep.subr.mxu0 0.0
  %74 = vmatpush1.msra.mxu0 0.0
  %75 = vmatprep.subr.mxu0 0.0
  %76 = vmatpush1.msra.mxu0 0.0
  %77 = vmatprep.subr.mxu0 0.0
  %78 = vmatpush1.msra.mxu0 0.0
  %79 = vmatprep.subr.mxu0 0.0
  %80 = vmatpush1.msra.mxu0 0.0
  %81 = vmatprep.subr.mxu0 0.0
  %82 = vmatpush1.msra.mxu0 0.0
  %83 = vmatprep.subr.mxu0 0.0
  %84 = vmatpush1.msra.mxu0 0.0
  %85 = vmatprep.subr.mxu0 0.0
  %86 = vmatpush1.msra.mxu0 0.0
  %87 = vmatprep.subr.mxu0 0.0
  %88 = vmatpush1.msra.mxu0 0.0
  %89 = vmatprep.subr.mxu0 0.0
  %90 = vmatpush1.msra.mxu0 0.0
  %91 = vmatprep.subr.mxu0 0.0
  %92 = vmatpush1.msra.mxu0 0.0
  %93 = vmatprep.subr.mxu0 0.0
  %94 = vmatpush1.msra.mxu0 0.0
  %95 = vmatprep.subr.mxu0 0.0
  %96 = vmatpush1.msra.mxu0 0.0
  %97 = vmatprep.subr.mxu0 0.0
  %98 = vmatpush1.msra.mxu0 0.0
  %99 = vmatprep.subr.mxu0 0.0
  %100 = vmatpush1.msra.mxu0 0.0
  %101 = vmatprep.subr.mxu0 0.0
  %102 = vmatpush1.msra.mxu0 0.0
  %103 = vmatprep.mubr.f32.mxu0 0.0
  %104 = vmatmul.mubr.f32.gmra.mrb[0].mxu0 %v34
  %v105 = vpop.f32.mrb[0].mxu0
  %v106 = vadd.f32 %v30, %v105
  %v107 = vpop.f32.mrb[0].mxu0
  %108 = vmatprep.mubr.f32.mxu0 0.0
  %109 = vmatmul.mubr.f32.gmra.mrb[0].mxu0 %v37
  %v110 = vpop.f32.mrb[0].mxu0
  %v111 = vadd.f32 %v30, %v110
  %v112 = vpop.f32.mrb[0].mxu0
  %113 = vdwg.mxu0
  %s114 = scalar_lea.vmem %s1, 64
  %v115 = vld [vmem:[%s114] sm:$0xff]
  %v116 = vld [vmem:[%s114 + $0x8] sm:$0xff]
  %v117 = vld [vmem:[%s114 + $0x10] sm:$0xff]
  %v118 = vld [vmem:[%s114 + $0x18] sm:$0xff]
  %s119 = scalar_lea.vmem %s2, 2
  %v120 = vld [vmem:[%s119] sm:$0x1]
  %v122 = vlaneseq
  %v123 = vshrl.u32 %v122, 7
  %v124 = vsub.s32 0, %v123
  %v125 = vrot.slane %v120, %v124
  %127 = vmatprep.subr.mxu0 0.0
  %128 = vmatpush1.msra.mxu0 %v115
  %129 = vmatprep.subr.mxu0 0.0
  %130 = vmatpush1.msra.mxu0 %v116
  %131 = vmatprep.subr.mxu0 0.0
  %132 = vmatpush1.msra.mxu0 %v117
  %133 = vmatprep.subr.mxu0 0.0
  %134 = vmatpush1.msra.mxu0 %v118
  %135 = vmatprep.subr.mxu0 0.0
  %136 = vmatpush1.msra.mxu0 0.0
  %137 = vmatprep.subr.mxu0 0.0
  %138 = vmatpush1.msra.mxu0 0.0
  %139 = vmatprep.subr.mxu0 0.0
  %140 = vmatpush1.msra.mxu0 0.0
  %141 = vmatprep.subr.mxu0 0.0
  %142 = vmatpush1.msra.mxu0 0.0
  %143 = vmatprep.subr.mxu0 0.0
  %144 = vmatpush1.msra.mxu0 0.0
  %145 = vmatprep.subr.mxu0 0.0
  %146 = vmatpush1.msra.mxu0 0.0
  %147 = vmatprep.subr.mxu0 0.0
  %148 = vmatpush1.msra.mxu0 0.0
  %149 = vmatprep.subr.mxu0 0.0
  %150 = vmatpush1.msra.mxu0 0.0
  %151 = vmatprep.subr.mxu0 0.0
  %152 = vmatpush1.msra.mxu0 0.0
  %153 = vmatprep.subr.mxu0 0.0
  %154 = vmatpush1.msra.mxu0 0.0
  %155 = vmatprep.subr.mxu0 0.0
  %156 = vmatpush1.msra.mxu0 0.0
  %157 = vmatprep.subr.mxu0 0.0
  %158 = vmatpush1.msra.mxu0 0.0
  %159 = vmatprep.subr.mxu0 0.0
  %160 = vmatpush1.msra.mxu0 0.0
  %161 = vmatprep.subr.mxu0 0.0
  %162 = vmatpush1.msra.mxu0 0.0
  %163 = vmatprep.subr.mxu0 0.0
  %164 = vmatpush1.msra.mxu0 0.0
  %165 = vmatprep.subr.mxu0 0.0
  %166 = vmatpush1.msra.mxu0 0.0
  %167 = vmatprep.subr.mxu0 0.0
  %168 = vmatpush1.msra.mxu0 0.0
  %169 = vmatprep.subr.mxu0 0.0
  %170 = vmatpush1.msra.mxu0 0.0
  %171 = vmatprep.subr.mxu0 0.0
  %172 = vmatpush1.msra.mxu0 0.0
  %173 = vmatprep.subr.mxu0 0.0
  %174 = vmatpush1.msra.mxu0 0.0
  %175 = vmatprep.subr.mxu0 0.0
  %176 = vmatpush1.msra.mxu0 0.0
  %177 = vmatprep.subr.mxu0 0.0
  %178 = vmatpush1.msra.mxu0 0.0
  %179 = vmatprep.subr.mxu0 0.0
  %180 = vmatpush1.msra.mxu0 0.0
  %181 = vmatprep.subr.mxu0 0.0
  %182 = vmatpush1.msra.mxu0 0.0
  %183 = vmatprep.subr.mxu0 0.0
  %184 = vmatpush1.msra.mxu0 0.0
  %185 = vmatprep.subr.mxu0 0.0
  %186 = vmatpush1.msra.mxu0 0.0
  %187 = vmatprep.subr.mxu0 0.0
  %188 = vmatpush1.msra.mxu0 0.0
  %189 = vmatprep.subr.mxu0 0.0
  %190 = vmatpush1.msra.mxu0 0.0
  %191 = vmatprep.mubr.f32.mxu0 0.0
  %192 = vmatmul.mubr.f32.gmra.mrb[0].mxu0 %v34
  %v193 = vpop.f32.mrb[0].mxu0
  %v194 = vadd.f32 %v125, %v193
  %v195 = vpop.f32.mrb[0].mxu0
  %196 = vmatprep.mubr.f32.mxu0 0.0
  %197 = vmatmul.mubr.f32.gmra.mrb[0].mxu0 %v37
  %v198 = vpop.f32.mrb[0].mxu0
  %v199 = vadd.f32 %v125, %v198
  %v200 = vpop.f32.mrb[0].mxu0
  %201 = vdwg.mxu0
  %202 = vst.msk [vmem:[%s3] sm:$0xff] %vm32, %v106
  %203 = vst.msk [vmem:[%s3 + $0x8] sm:$0xff] %vm32, %v111
  %204 = vst.msk [vmem:[%s4] sm:$0xff] %vm32, %v194
  %205 = vst.msk [vmem:[%s4 + $0x8] sm:$0xff] %vm32, %v199
  %v206 = vld [vmem:[%s1] sm:$0xff]
  %v207 = vld [vmem:[%s1 + $0x8] sm:$0xff]
  %v208 = vld [vmem:[%s1 + $0x10] sm:$0xff]
  %v209 = vld [vmem:[%s1 + $0x18] sm:$0xff]
  %v210 = vld [vmem:[%s2] sm:$0x1]
  %v212 = vlaneseq
  %v213 = vshrl.u32 %v212, 7
  %v214 = vsub.s32 0, %v213
  %v215 = vrot.slane %v210, %v214
  %217 = vmatprep.subr.mxu0 0.0
  %218 = vmatpush1.msra.mxu0 %v206
  %219 = vmatprep.subr.mxu0 0.0
  %220 = vmatpush1.msra.mxu0 %v207
  %221 = vmatprep.subr.mxu0 0.0
  %222 = vmatpush1.msra.mxu0 %v208
  %223 = vmatprep.subr.mxu0 0.0
  %224 = vmatpush1.msra.mxu0 %v209
  %225 = vmatprep.subr.mxu0 0.0
  %226 = vmatpush1.msra.mxu0 0.0
  %227 = vmatprep.subr.mxu0 0.0
  %228 = vmatpush1.msra.mxu0 0.0
  %229 = vmatprep.subr.mxu0 0.0
  %230 = vmatpush1.msra.mxu0 0.0
  %231 = vmatprep.subr.mxu0 0.0
  %232 = vmatpush1.msra.mxu0 0.0
  %233 = vmatprep.subr.mxu0 0.0
  %234 = vmatpush1.msra.mxu0 0.0
  %235 = vmatprep.subr.mxu0 0.0
  %236 = vmatpush1.msra.mxu0 0.0
  %237 = vmatprep.subr.mxu0 0.0
  %238 = vmatpush1.msra.mxu0 0.0
  %239 = vmatprep.subr.mxu0 0.0
  %240 = vmatpush1.msra.mxu0 0.0
  %241 = vmatprep.subr.mxu0 0.0
  %242 = vmatpush1.msra.mxu0 0.0
  %243 = vmatprep.subr.mxu0 0.0
  %244 = vmatpush1.msra.mxu0 0.0
  %245 = vmatprep.subr.mxu0 0.0
  %246 = vmatpush1.msra.mxu0 0.0
  %247 = vmatprep.subr.mxu0 0.0
  %248 = vmatpush1.msra.mxu0 0.0
  %249 = vmatprep.subr.mxu0 0.0
  %250 = vmatpush1.msra.mxu0 0.0
  %251 = vmatprep.subr.mxu0 0.0
  %252 = vmatpush1.msra.mxu0 0.0
  %253 = vmatprep.subr.mxu0 0.0
  %254 = vmatpush1.msra.mxu0 0.0
  %255 = vmatprep.subr.mxu0 0.0
  %256 = vmatpush1.msra.mxu0 0.0
  %257 = vmatprep.subr.mxu0 0.0
  %258 = vmatpush1.msra.mxu0 0.0
  %259 = vmatprep.subr.mxu0 0.0
  %260 = vmatpush1.msra.mxu0 0.0
  %261 = vmatprep.subr.mxu0 0.0
  %262 = vmatpush1.msra.mxu0 0.0
  %263 = vmatprep.subr.mxu0 0.0
  %264 = vmatpush1.msra.mxu0 0.0
  %265 = vmatprep.subr.mxu0 0.0
  %266 = vmatpush1.msra.mxu0 0.0
  %267 = vmatprep.subr.mxu0 0.0
  %268 = vmatpush1.msra.mxu0 0.0
  %269 = vmatprep.subr.mxu0 0.0
  %270 = vmatpush1.msra.mxu0 0.0
  %271 = vmatprep.subr.mxu0 0.0
  %272 = vmatpush1.msra.mxu0 0.0
  %273 = vmatprep.subr.mxu0 0.0
  %274 = vmatpush1.msra.mxu0 0.0
  %275 = vmatprep.subr.mxu0 0.0
  %276 = vmatpush1.msra.mxu0 0.0
  %277 = vmatprep.subr.mxu0 0.0
  %278 = vmatpush1.msra.mxu0 0.0
  %279 = vmatprep.subr.mxu0 0.0
  %280 = vmatpush1.msra.mxu0 0.0
  %281 = vmatprep.mubr.f32.mxu0 0.0
  %282 = vmatmul.mubr.f32.gmra.mrb[0].mxu0 %v34
  %v283 = vpop.f32.mrb[0].mxu0
  %v284 = vadd.f32 %v215, %v283
  %v285 = vpop.f32.mrb[0].mxu0
  %286 = vdwg.mxu0
  %v287 = vmul.f32 %v284, 0.35355338
  %v288 = vlaneseq
  %v289 = vand.u32 %v288, 127
  %vm290 = vcmp.lt.s32.totalorder %v289, 9
  %vm291 = vcmask 64512
  %v293 = vsel %vm291, %v287, 0
  %v296 = vsel %vm291, %v106, 0
  %v299 = vsel %vm291, %v111, 0
  %301 = vmatprep.subr.mxu0 0.0
  %302 = vmatpush1.xpose.msra.mxu0 %v296
  %303 = vmatprep.subr.mxu0 0.0
  %304 = vmatpush1.xpose.msra.mxu0 %v299
  %305 = vmatprep.subr.mxu0 0.0
  %306 = vmatpush1.xpose.msra.mxu0 0.0
  %307 = vmatprep.subr.mxu0 0.0
  %308 = vmatpush1.xpose.msra.mxu0 0.0
  %309 = vmatprep.subr.mxu0 0.0
  %310 = vmatpush1.xpose.msra.mxu0 0.0
  %311 = vmatprep.subr.mxu0 0.0
  %312 = vmatpush1.xpose.msra.mxu0 0.0
  %313 = vmatprep.subr.mxu0 0.0
  %314 = vmatpush1.xpose.msra.mxu0 0.0
  %315 = vmatprep.subr.mxu0 0.0
  %316 = vmatpush1.xpose.msra.mxu0 0.0
  %317 = vmatprep.subr.mxu0 0.0
  %318 = vmatpush1.xpose.msra.mxu0 0.0
  %319 = vmatprep.subr.mxu0 0.0
  %320 = vmatpush1.xpose.msra.mxu0 0.0
  %321 = vmatprep.subr.mxu0 0.0
  %322 = vmatpush1.xpose.msra.mxu0 0.0
  %323 = vmatprep.subr.mxu0 0.0
  %324 = vmatpush1.xpose.msra.mxu0 0.0
  %325 = vmatprep.subr.mxu0 0.0
  %326 = vmatpush1.xpose.msra.mxu0 0.0
  %327 = vmatprep.subr.mxu0 0.0
  %328 = vmatpush1.xpose.msra.mxu0 0.0
  %329 = vmatprep.subr.mxu0 0.0
  %330 = vmatpush1.xpose.msra.mxu0 0.0
  %331 = vmatprep.subr.mxu0 0.0
  %332 = vmatpush1.xpose.msra.mxu0 0.0
  %333 = vmatprep.subr.mxu0 0.0
  %334 = vmatpush1.xpose.msra.mxu0 0.0
  %335 = vmatprep.subr.mxu0 0.0
  %336 = vmatpush1.xpose.msra.mxu0 0.0
  %337 = vmatprep.subr.mxu0 0.0
  %338 = vmatpush1.xpose.msra.mxu0 0.0
  %339 = vmatprep.subr.mxu0 0.0
  %340 = vmatpush1.xpose.msra.mxu0 0.0
  %341 = vmatprep.subr.mxu0 0.0
  %342 = vmatpush1.xpose.msra.mxu0 0.0
  %343 = vmatprep.subr.mxu0 0.0
  %344 = vmatpush1.xpose.msra.mxu0 0.0
  %345 = vmatprep.subr.mxu0 0.0
  %346 = vmatpush1.xpose.msra.mxu0 0.0
  %347 = vmatprep.subr.mxu0 0.0
  %348 = vmatpush1.xpose.msra.mxu0 0.0
  %349 = vmatprep.subr.mxu0 0.0
  %350 = vmatpush1.xpose.msra.mxu0 0.0
  %351 = vmatprep.subr.mxu0 0.0
  %352 = vmatpush1.xpose.msra.mxu0 0.0
  %353 = vmatprep.subr.mxu0 0.0
  %354 = vmatpush1.xpose.msra.mxu0 0.0
  %355 = vmatprep.subr.mxu0 0.0
  %356 = vmatpush1.xpose.msra.mxu0 0.0
  %357 = vmatprep.subr.mxu0 0.0
  %358 = vmatpush1.xpose.msra.mxu0 0.0
  %359 = vmatprep.subr.mxu0 0.0
  %360 = vmatpush1.xpose.msra.mxu0 0.0
  %361 = vmatprep.subr.mxu0 0.0
  %362 = vmatpush1.xpose.msra.mxu0 0.0
  %363 = vmatprep.subr.mxu0 0.0
  %364 = vmatpush1.xpose.msra.mxu0 0.0
  %365 = vmatprep.mubr.f32.mxu0 0.0
  %366 = vmatmul.mubr.f32.gmra.mrb[0].mxu0 %v293
  %v367 = vpop.f32.mrb[0].mxu0
  %v368 = vadd.f32 0.0, %v367
  %v369 = vpop.f32.mrb[0].mxu0
  %370 = vdwg.mxu0
  %v371 = vsel %vm290, 1, 0
  %vm372 = vcmp.eq.s32.totalorder %v371, 1
  %v373 = vsel %vm372, %v368, -1e+30
  %vm374 = vcmask 130048
  %v375 = vsel %vm374, %v373, -inf
  %376 = vmax.xlane.f32.xlu0 %v375
  %v377 = vpop.xlane.xlu0 %376
  %v378 = vsub.f32 %v373, %v377
  %v379 = vmul.f32 %v378, 1.442695
  %v380 = vpow.pop %v379
  %v381 = vsel %vm374, %v380, 0.0
  %382 = vadd.xlane.f32.xlu0 %v381
  %v383 = vpop.xlane.xlu0 %382
  %v384 = vrcp.pop %v383
  %v385 = vmul.f32 1.0, %v384
  %v386 = vmul.f32 %v380, %v385
  %v387 = vadd.f32 %v386, 0.0
  %388 = vrot.lane.b32.xlu0 %v287, 120
  %v389 = vpop.permute.xlu0 %388
  %390 = vrot.lane.b32.xlu0 %v106, 120
  %v391 = vpop.permute.xlu0 %390
  %392 = vrot.lane.b32.xlu0 %v111, 120
  %v393 = vpop.permute.xlu0 %392
  %v394 = vsel %vm291, %v389, 0
  %v396 = vsel %vm291, %v391, 0
  %v398 = vsel %vm291, %v393, 0
  %400 = vmatprep.subr.mxu0 0.0
  %401 = vmatpush1.xpose.msra.mxu0 %v396
  %402 = vmatprep.subr.mxu0 0.0
  %403 = vmatpush1.xpose.msra.mxu0 %v398
  %404 = vmatprep.subr.mxu0 0.0
  %405 = vmatpush1.xpose.msra.mxu0 0.0
  %406 = vmatprep.subr.mxu0 0.0
  %407 = vmatpush1.xpose.msra.mxu0 0.0
  %408 = vmatprep.subr.mxu0 0.0
  %409 = vmatpush1.xpose.msra.mxu0 0.0
  %410 = vmatprep.subr.mxu0 0.0
  %411 = vmatpush1.xpose.msra.mxu0 0.0
  %412 = vmatprep.subr.mxu0 0.0
  %413 = vmatpush1.xpose.msra.mxu0 0.0
  %414 = vmatprep.subr.mxu0 0.0
  %415 = vmatpush1.xpose.msra.mxu0 0.0
  %416 = vmatprep.subr.mxu0 0.0
  %417 = vmatpush1.xpose.msra.mxu0 0.0
  %418 = vmatprep.subr.mxu0 0.0
  %419 = vmatpush1.xpose.msra.mxu0 0.0
  %420 = vmatprep.subr.mxu0 0.0
  %421 = vmatpush1.xpose.msra.mxu0 0.0
  %422 = vmatprep.subr.mxu0 0.0
  %423 = vmatpush1.xpose.msra.mxu0 0.0
  %424 = vmatprep.subr.mxu0 0.0
  %425 = vmatpush1.xpose.msra.mxu0 0.0
  %426 = vmatprep.subr.mxu0 0.0
  %427 = vmatpush1.xpose.msra.mxu0 0.0
  %428 = vmatprep.subr.mxu0 0.0
  %429 = vmatpush1.xpose.msra.mxu0 0.0
  %430 = vmatprep.subr.mxu0 0.0
  %431 = vmatpush1.xpose.msra.mxu0 0.0
  %432 = vmatprep.subr.mxu0 0.0
  %433 = vmatpush1.xpose.msra.mxu0 0.0
  %434 = vmatprep.subr.mxu0 0.0
  %435 = vmatpush1.xpose.msra.mxu0 0.0
  %436 = vmatprep.subr.mxu0 0.0
  %437 = vmatpush1.xpose.msra.mxu0 0.0
  %438 = vmatprep.subr.mxu0 0.0
  %439 = vmatpush1.xpose.msra.mxu0 0.0
  %440 = vmatprep.subr.mxu0 0.0
  %441 = vmatpush1.xpose.msra.mxu0 0.0
  %442 = vmatprep.subr.mxu0 0.0
  %443 = vmatpush1.xpose.msra.mxu0 0.0
  %444 = vmatprep.subr.mxu0 0.0
  %445 = vmatpush1.xpose.msra.mxu0 0.0
  %446 = vmatprep.subr.mxu0 0.0
  %447 = vmatpush1.xpose.msra.mxu0 0.0
  %448 = vmatprep.subr.mxu0 0.0
  %449 = vmatpush1.xpose.msra.mxu0 0.0
  %450 = vmatprep.subr.mxu0 0.0
  %451 = vmatpush1.xpose.msra.mxu0 0.0
  %452 = vmatprep.subr.mxu0 0.0
  %453 = vmatpush1.xpose.msra.mxu0 0.0
  %454 = vmatprep.subr.mxu0 0.0
  %455 = vmatpush1.xpose.msra.mxu0 0.0
  %456 = vmatprep.subr.mxu0 0.0
  %457 = vmatpush1.xpose.msra.mxu0 0.0
  %458 = vmatprep.subr.mxu0 0.0
  %459 = vmatpush1.xpose.msra.mxu0 0.0
  %460 = vmatprep.subr.mxu0 0.0
  %461 = vmatpush1.xpose.msra.mxu0 0.0
  %462 = vmatprep.subr.mxu0 0.0
  %463 = vmatpush1.xpose.msra.mxu0 0.0
  %464 = vmatprep.mubr.f32.mxu0 0.0
  %465 = vmatmul.mubr.f32.gmra.mrb[0].mxu0 %v394
  %v466 = vpop.f32.mrb[0].mxu0
  %v467 = vadd.f32 0.0, %v466
  %v468 = vpop.f32.mrb[0].mxu0
  %469 = vdwg.mxu0
  %v470 = vsel %vm372, %v467, -1e+30
  %v471 = vsel %vm374, %v470, -inf
  %472 = vmax.xlane.f32.xlu0 %v471
  %v473 = vpop.xlane.xlu0 %472
  %v474 = vsub.f32 %v470, %v473
  %v475 = vmul.f32 %v474, 1.442695
  %v476 = vpow.pop %v475
  %v477 = vsel %vm374, %v476, 0.0
  %478 = vadd.xlane.f32.xlu0 %v477
  %v479 = vpop.xlane.xlu0 %478
  %v480 = vrcp.pop %v479
  %v481 = vmul.f32 1.0, %v480
  %v482 = vmul.f32 %v476, %v481
  %v483 = vadd.f32 %v387, %v482
  %484 = vrot.lane.b32.xlu0 %v287, 112
  %v485 = vpop.permute.xlu0 %484
  %486 = vrot.lane.b32.xlu0 %v106, 112
  %v487 = vpop.permute.xlu0 %486
  %488 = vrot.lane.b32.xlu0 %v111, 112
  %v489 = vpop.permute.xlu0 %488
  %v490 = vsel %vm291, %v485, 0
  %v492 = vsel %vm291, %v487, 0
  %v494 = vsel %vm291, %v489, 0
  %496 = vmatprep.subr.mxu0 0.0
  %497 = vmatpush1.xpose.msra.mxu0 %v492
  %498 = vmatprep.subr.mxu0 0.0
  %499 = vmatpush1.xpose.msra.mxu0 %v494
  %500 = vmatprep.subr.mxu0 0.0
  %501 = vmatpush1.xpose.msra.mxu0 0.0
  %502 = vmatprep.subr.mxu0 0.0
  %503 = vmatpush1.xpose.msra.mxu0 0.0
  %504 = vmatprep.subr.mxu0 0.0
  %505 = vmatpush1.xpose.msra.mxu0 0.0
  %506 = vmatprep.subr.mxu0 0.0
  %507 = vmatpush1.xpose.msra.mxu0 0.0
  %508 = vmatprep.subr.mxu0 0.0
  %509 = vmatpush1.xpose.msra.mxu0 0.0
  %510 = vmatprep.subr.mxu0 0.0
  %511 = vmatpush1.xpose.msra.mxu0 0.0
  %512 = vmatprep.subr.mxu0 0.0
  %513 = vmatpush1.xpose.msra.mxu0 0.0
  %514 = vmatprep.subr.mxu0 0.0
  %515 = vmatpush1.xpose.msra.mxu0 0.0
  %516 = vmatprep.subr.mxu0 0.0
  %517 = vmatpush1.xpose.msra.mxu0 0.0
  %518 = vmatprep.subr.mxu0 0.0
  %519 = vmatpush1.xpose.msra.mxu0 0.0
  %520 = vmatprep.subr.mxu0 0.0
  %521 = vmatpush1.xpose.msra.mxu0 0.0
  %522 = vmatprep.subr.mxu0 0.0
  %523 = vmatpush1.xpose.msra.mxu0 0.0
  %524 = vmatprep.subr.mxu0 0.0
  %525 = vmatpush1.xpose.msra.mxu0 0.0
  %526 = vmatprep.subr.mxu0 0.0
  %527 = vmatpush1.xpose.msra.mxu0 0.0
  %528 = vmatprep.subr.mxu0 0.0
  %529 = vmatpush1.xpose.msra.mxu0 0.0
  %530 = vmatprep.subr.mxu0 0.0
  %531 = vmatpush1.xpose.msra.mxu0 0.0
  %532 = vmatprep.subr.mxu0 0.0
  %533 = vmatpush1.xpose.msra.mxu0 0.0
  %534 = vmatprep.subr.mxu0 0.0
  %535 = vmatpush1.xpose.msra.mxu0 0.0
  %536 = vmatprep.subr.mxu0 0.0
  %537 = vmatpush1.xpose.msra.mxu0 0.0
  %538 = vmatprep.subr.mxu0 0.0
  %539 = vmatpush1.xpose.msra.mxu0 0.0
  %540 = vmatprep.subr.mxu0 0.0
  %541 = vmatpush1.xpose.msra.mxu0 0.0
  %542 = vmatprep.subr.mxu0 0.0
  %543 = vmatpush1.xpose.msra.mxu0 0.0
  %544 = vmatprep.subr.mxu0 0.0
  %545 = vmatpush1.xpose.msra.mxu0 0.0
  %546 = vmatprep.subr.mxu0 0.0
  %547 = vmatpush1.xpose.msra.mxu0 0.0
  %548 = vmatprep.subr.mxu0 0.0
  %549 = vmatpush1.xpose.msra.mxu0 0.0
  %550 = vmatprep.subr.mxu0 0.0
  %551 = vmatpush1.xpose.msra.mxu0 0.0
  %552 = vmatprep.subr.mxu0 0.0
  %553 = vmatpush1.xpose.msra.mxu0 0.0
  %554 = vmatprep.subr.mxu0 0.0
  %555 = vmatpush1.xpose.msra.mxu0 0.0
  %556 = vmatprep.subr.mxu0 0.0
  %557 = vmatpush1.xpose.msra.mxu0 0.0
  %558 = vmatprep.subr.mxu0 0.0
  %559 = vmatpush1.xpose.msra.mxu0 0.0
  %560 = vmatprep.mubr.f32.mxu0 0.0
  %561 = vmatmul.mubr.f32.gmra.mrb[0].mxu0 %v490
  %v562 = vpop.f32.mrb[0].mxu0
  %v563 = vadd.f32 0.0, %v562
  %v564 = vpop.f32.mrb[0].mxu0
  %565 = vdwg.mxu0
  %v566 = vsel %vm372, %v563, -1e+30
  %v567 = vsel %vm374, %v566, -inf
  %568 = vmax.xlane.f32.xlu0 %v567
  %v569 = vpop.xlane.xlu0 %568
  %v570 = vsub.f32 %v566, %v569
  %v571 = vmul.f32 %v570, 1.442695
  %v572 = vpow.pop %v571
  %v573 = vsel %vm374, %v572, 0.0
  %574 = vadd.xlane.f32.xlu0 %v573
  %v575 = vpop.xlane.xlu0 %574
  %v576 = vrcp.pop %v575
  %v577 = vmul.f32 1.0, %v576
  %v578 = vmul.f32 %v572, %v577
  %v579 = vadd.f32 %v483, %v578
  %580 = vrot.lane.b32.xlu0 %v287, 104
  %v581 = vpop.permute.xlu0 %580
  %582 = vrot.lane.b32.xlu0 %v106, 104
  %v583 = vpop.permute.xlu0 %582
  %584 = vrot.lane.b32.xlu0 %v111, 104
  %v585 = vpop.permute.xlu0 %584
  %v586 = vsel %vm291, %v581, 0
  %v588 = vsel %vm291, %v583, 0
  %v590 = vsel %vm291, %v585, 0
  %592 = vmatprep.subr.mxu0 0.0
  %593 = vmatpush1.xpose.msra.mxu0 %v588
  %594 = vmatprep.subr.mxu0 0.0
  %595 = vmatpush1.xpose.msra.mxu0 %v590
  %596 = vmatprep.subr.mxu0 0.0
  %597 = vmatpush1.xpose.msra.mxu0 0.0
  %598 = vmatprep.subr.mxu0 0.0
  %599 = vmatpush1.xpose.msra.mxu0 0.0
  %600 = vmatprep.subr.mxu0 0.0
  %601 = vmatpush1.xpose.msra.mxu0 0.0
  %602 = vmatprep.subr.mxu0 0.0
  %603 = vmatpush1.xpose.msra.mxu0 0.0
  %604 = vmatprep.subr.mxu0 0.0
  %605 = vmatpush1.xpose.msra.mxu0 0.0
  %606 = vmatprep.subr.mxu0 0.0
  %607 = vmatpush1.xpose.msra.mxu0 0.0
  %608 = vmatprep.subr.mxu0 0.0
  %609 = vmatpush1.xpose.msra.mxu0 0.0
  %610 = vmatprep.subr.mxu0 0.0
  %611 = vmatpush1.xpose.msra.mxu0 0.0
  %612 = vmatprep.subr.mxu0 0.0
  %613 = vmatpush1.xpose.msra.mxu0 0.0
  %614 = vmatprep.subr.mxu0 0.0
  %615 = vmatpush1.xpose.msra.mxu0 0.0
  %616 = vmatprep.subr.mxu0 0.0
  %617 = vmatpush1.xpose.msra.mxu0 0.0
  %618 = vmatprep.subr.mxu0 0.0
  %619 = vmatpush1.xpose.msra.mxu0 0.0
  %620 = vmatprep.subr.mxu0 0.0
  %621 = vmatpush1.xpose.msra.mxu0 0.0
  %622 = vmatprep.subr.mxu0 0.0
  %623 = vmatpush1.xpose.msra.mxu0 0.0
  %624 = vmatprep.subr.mxu0 0.0
  %625 = vmatpush1.xpose.msra.mxu0 0.0
  %626 = vmatprep.subr.mxu0 0.0
  %627 = vmatpush1.xpose.msra.mxu0 0.0
  %628 = vmatprep.subr.mxu0 0.0
  %629 = vmatpush1.xpose.msra.mxu0 0.0
  %630 = vmatprep.subr.mxu0 0.0
  %631 = vmatpush1.xpose.msra.mxu0 0.0
  %632 = vmatprep.subr.mxu0 0.0
  %633 = vmatpush1.xpose.msra.mxu0 0.0
  %634 = vmatprep.subr.mxu0 0.0
  %635 = vmatpush1.xpose.msra.mxu0 0.0
  %636 = vmatprep.subr.mxu0 0.0
  %637 = vmatpush1.xpose.msra.mxu0 0.0
  %638 = vmatprep.subr.mxu0 0.0
  %639 = vmatpush1.xpose.msra.mxu0 0.0
  %640 = vmatprep.subr.mxu0 0.0
  %641 = vmatpush1.xpose.msra.mxu0 0.0
  %642 = vmatprep.subr.mxu0 0.0
  %643 = vmatpush1.xpose.msra.mxu0 0.0
  %644 = vmatprep.subr.mxu0 0.0
  %645 = vmatpush1.xpose.msra.mxu0 0.0
  %646 = vmatprep.subr.mxu0 0.0
  %647 = vmatpush1.xpose.msra.mxu0 0.0
  %648 = vmatprep.subr.mxu0 0.0
  %649 = vmatpush1.xpose.msra.mxu0 0.0
  %650 = vmatprep.subr.mxu0 0.0
  %651 = vmatpush1.xpose.msra.mxu0 0.0
  %652 = vmatprep.subr.mxu0 0.0
  %653 = vmatpush1.xpose.msra.mxu0 0.0
  %654 = vmatprep.subr.mxu0 0.0
  %655 = vmatpush1.xpose.msra.mxu0 0.0
  %656 = vmatprep.mubr.f32.mxu0 0.0
  %657 = vmatmul.mubr.f32.gmra.mrb[0].mxu0 %v586
  %v658 = vpop.f32.mrb[0].mxu0
  %v659 = vadd.f32 0.0, %v658
  %v660 = vpop.f32.mrb[0].mxu0
  %661 = vdwg.mxu0
  %v662 = vsel %vm372, %v659, -1e+30
  %v663 = vsel %vm374, %v662, -inf
  %664 = vmax.xlane.f32.xlu0 %v663
  %v665 = vpop.xlane.xlu0 %664
  %v666 = vsub.f32 %v662, %v665
  %v667 = vmul.f32 %v666, 1.442695
  %v668 = vpow.pop %v667
  %v669 = vsel %vm374, %v668, 0.0
  %670 = vadd.xlane.f32.xlu0 %v669
  %v671 = vpop.xlane.xlu0 %670
  %v672 = vrcp.pop %v671
  %v673 = vmul.f32 1.0, %v672
  %v674 = vmul.f32 %v668, %v673
  %v675 = vadd.f32 %v579, %v674
  %v676 = vmul.f32 %v675, 0.25
  %vm677 = vcmask 122880
  %678 = vst.msk [vmem:[%s5] sm:$0x1] %vm677, %v676
  // Predicated region
  $region14: #{_lambda_.6} parent=0 // pred_check
    _
  $region15: #{_lambda_.6} parent=0 // pred_check_branch
    %680 = sbr.rel (0) target = $region17
  $region16: #{_lambda_.6} parent=0 // pred_region
    _
  $region17: #{_lambda_.6} parent=0 // pred_fallthru
    _
  // Predicated region
  $region18: #{_lambda_.6} parent=0 // pred_check
    _
  $region19: #{_lambda_.6} parent=0 // pred_check_branch
    %682 = sbr.rel (0) target = $region21
  $region20: #{_lambda_.6} parent=0 // pred_region
    _
  $region21: #{_lambda_.6} parent=0 // pred_fallthru
    _
  // Predicated region
  $region22: #{_lambda_.6} parent=0 // pred_check
    _
  $region23: #{_lambda_.6} parent=0 // pred_check_branch
    %684 = sbr.rel (0) target = $region25
  $region24: #{_lambda_.6} parent=0 // pred_region
    _
  $region25: #{_lambda_.6} parent=0 // pred_fallthru
    _
  // Predicated region
  $region26: #{_lambda_.6} parent=0 // pred_check
    _
  $region27: #{_lambda_.6} parent=0 // pred_check_branch
    %686 = sbr.rel (0) target = $region29
  $region28: #{_lambda_.6} parent=0 // pred_region
    _
  $region29: #{_lambda_.6} parent=0 // pred_fallthru
    _
  // Predicated region
  $region30: #{_lambda_.6} parent=0 // pred_check
    _
  $region31: #{_lambda_.6} parent=0 // pred_check_branch
    %688 = sbr.rel (0) target = $region33
  $region32: #{_lambda_.6} parent=0 // pred_region
    _
  $region33: #{_lambda_.6} parent=0 // pred_fallthru
    _
  // Predicated region
  $region34: #{_lambda_.6} parent=0 // pred_check
    _
  $region35: #{_lambda_.6} parent=0 // pred_check_branch
    %690 = sbr.rel (0) target = $region37
  $region36: #{_lambda_.6} parent=0 // pred_region
    _
  $region37: #{_lambda_.6} parent=0 // pred_fallthru
    _

// kernel: _lambda_.5
$region0: #{_lambda_.5}
  #allocation0 [shape = 'u32[]', space=smem, size = 0x4, offset = 0x4, fixed_abs, tag = 'smem constant byte address 0x4 - core index']
  #allocation1 [shape = 'u32[144,128]{1,0:T(1,128)}', space=vmem, size = 0x12000, scoped, tag = 'internal scratch']
  %s0 = inlined_call_operand.vmem [shape: f32[16,32], index: 0, kind: input, shape index: {}]
  %s1 = inlined_call_operand.vmem [shape: f32[16,32], index: 1, kind: input, shape index: {}]
  %s2 = inlined_call_operand.vmem [shape: f32[16,32], index: 2, kind: input, shape index: {}]
  %s3 = inlined_call_operand.vmem [shape: f32[32,32], index: 3, kind: input, shape index: {}]
  %s4 = inlined_call_operand.vmem [shape: f32[1,32], index: 4, kind: input, shape index: {}]
  %s5 = inlined_call_operand.vmem [shape: f32[32,32], index: 5, kind: input, shape index: {}]
  %s6 = inlined_call_operand.vmem [shape: f32[1,32], index: 6, kind: input, shape index: {}]
  %s7 = inlined_call_operand.vmem [shape: f32[1,32], index: 7, kind: input, shape index: {}]
  %s8 = inlined_call_operand.vmem [shape: f32[1,32], index: 8, kind: input, shape index: {}]
  %s9 = inlined_call_operand.vmem [shape: f32[32,32], index: 9, kind: input, shape index: {}]
  %s10 = inlined_call_operand.vmem [shape: f32[1,32], index: 10, kind: input, shape index: {}]
  %s11 = inlined_call_operand.vmem [shape: f32[32,32], index: 11, kind: input, shape index: {}]
  %s12 = inlined_call_operand.vmem [shape: f32[1,32], index: 12, kind: input, shape index: {}]
  %s13 = inlined_call_operand.vmem [shape: f32[1,32], index: 13, kind: input, shape index: {}]
  %s14 = inlined_call_operand.vmem [shape: f32[1,32], index: 14, kind: input, shape index: {}]
  %s15 = inlined_call_operand.vmem [shape: f32[16,32], index: 15, kind: output, shape index: {}]
  %s16 = sld [smem:[#allocation0]]
  $region70: #{_lambda_.5} parent=0
    _
  %s18 = ssub.s32 1, %s16
  %s19 = scalar_select 0, %s18, %s16
  // Predicated region
  $region2: #{_lambda_.5} parent=0 // pred_check
    _
  $region3: #{_lambda_.5} parent=0 // pred_check_branch
    %21 = sbr.rel (0) target = $region5
  $region4: #{_lambda_.5} parent=0 // pred_region
    _
  $region5: #{_lambda_.5} parent=0 // pred_fallthru
    _
  // Predicated region
  $region6: #{_lambda_.5} parent=0 // pred_check
    _
  $region7: #{_lambda_.5} parent=0 // pred_check_branch
    %23 = sbr.rel (0) target = $region9
  $region8: #{_lambda_.5} parent=0 // pred_region
    _
  $region9: #{_lambda_.5} parent=0 // pred_fallthru
    _
  // Predicated region
  $region10: #{_lambda_.5} parent=0 // pred_check
    _
  $region11: #{_lambda_.5} parent=0 // pred_check_branch
    %25 = sbr.rel (0) target = $region13
  $region12: #{_lambda_.5} parent=0 // pred_region
    _
  $region13: #{_lambda_.5} parent=0 // pred_fallthru
    _
  // Predicated region
  $region14: #{_lambda_.5} parent=0 // pred_check
    _
  $region15: #{_lambda_.5} parent=0 // pred_check_branch
    %27 = sbr.rel (0) target = $region17
  $region16: #{_lambda_.5} parent=0 // pred_region
    _
  $region17: #{_lambda_.5} parent=0 // pred_fallthru
    _
  // Predicated region
  $region18: #{_lambda_.5} parent=0 // pred_check
    _
  $region19: #{_lambda_.5} parent=0 // pred_check_branch
    %29 = sbr.rel (0) target = $region21
  $region20: #{_lambda_.5} parent=0 // pred_region
    _
  $region21: #{_lambda_.5} parent=0 // pred_fallthru
    _
  // Predicated region
  $region22: #{_lambda_.5} parent=0 // pred_check
    _
  $region23: #{_lambda_.5} parent=0 // pred_check_branch
    %31 = sbr.rel (0) target = $region25
  $region24: #{_lambda_.5} parent=0 // pred_region
    _
  $region25: #{_lambda_.5} parent=0 // pred_fallthru
    _
  // Predicated region
  $region26: #{_lambda_.5} parent=0 // pred_check
    _
  $region27: #{_lambda_.5} parent=0 // pred_check_branch
    %33 = sbr.rel (0) target = $region29
  $region28: #{_lambda_.5} parent=0 // pred_region
    _
  $region29: #{_lambda_.5} parent=0 // pred_fallthru
    _
  // Predicated region
  $region30: #{_lambda_.5} parent=0 // pred_check
    _
  $region31: #{_lambda_.5} parent=0 // pred_check_branch
    %35 = sbr.rel (0) target = $region33
  $region32: #{_lambda_.5} parent=0 // pred_region
    _
  $region33: #{_lambda_.5} parent=0 // pred_fallthru
    _
  // Predicated region
  $region34: #{_lambda_.5} parent=0 // pred_check
    _
  $region35: #{_lambda_.5} parent=0 // pred_check_branch
    %37 = sbr.rel (0) target = $region37
  $region36: #{_lambda_.5} parent=0 // pred_region
    _
  $region37: #{_lambda_.5} parent=0 // pred_fallthru
    _
  // Predicated region
  $region38: #{_lambda_.5} parent=0 // pred_check
    _
  $region39: #{_lambda_.5} parent=0 // pred_check_branch
    %39 = sbr.rel (0) target = $region41
  $region40: #{_lambda_.5} parent=0 // pred_region
    _
  $region41: #{_lambda_.5} parent=0 // pred_fallthru
    _
  // Predicated region
  $region42: #{_lambda_.5} parent=0 // pred_check
    _
  $region43: #{_lambda_.5} parent=0 // pred_check_branch
    %41 = sbr.rel (0) target = $region45
  $region44: #{_lambda_.5} parent=0 // pred_region
    _
  $region45: #{_lambda_.5} parent=0 // pred_fallthru
    _
  // Predicated region
  $region46: #{_lambda_.5} parent=0 // pred_check
    _
  $region47: #{_lambda_.5} parent=0 // pred_check_branch
    %43 = sbr.rel (0) target = $region49
  $region48: #{_lambda_.5} parent=0 // pred_region
    _
  $region49: #{_lambda_.5} parent=0 // pred_fallthru
    _
  // Predicated region
  $region50: #{_lambda_.5} parent=0 // pred_check
    _
  $region51: #{_lambda_.5} parent=0 // pred_check_branch
    %45 = sbr.rel (0) target = $region53
  $region52: #{_lambda_.5} parent=0 // pred_region
    _
  $region53: #{_lambda_.5} parent=0 // pred_fallthru
    _
  // Predicated region
  $region54: #{_lambda_.5} parent=0 // pred_check
    _
  $region55: #{_lambda_.5} parent=0 // pred_check_branch
    %47 = sbr.rel (0) target = $region57
  $region56: #{_lambda_.5} parent=0 // pred_region
    _
  $region57: #{_lambda_.5} parent=0 // pred_fallthru
    _
  // Predicated region
  $region58: #{_lambda_.5} parent=0 // pred_check
    _
  $region59: #{_lambda_.5} parent=0 // pred_check_branch
    %49 = sbr.rel (0) target = $region61
  $region60: #{_lambda_.5} parent=0 // pred_region
    _
  $region61: #{_lambda_.5} parent=0 // pred_fallthru
    _
  %s50 = smul.u32 0, 16
  %s51 = scalar_lea.vmem %s0, %s50
  %v52 = vld [vmem:[%s51] sm:$0xff]
  %v53 = vld [vmem:[%s51 + $0x8] sm:$0xff]
  %v54 = vld [vmem:[%s3] sm:$0xff]
  %v55 = vld [vmem:[%s3 + $0x8] sm:$0xff]
  %v56 = vld [vmem:[%s3 + $0x10] sm:$0xff]
  %v57 = vld [vmem:[%s3 + $0x18] sm:$0xff]
  %v58 = vld [vmem:[%s4] sm:$0x1]
  %v60 = vlaneseq
  %v61 = vshrl.u32 %v60, 7
  %v62 = vsub.s32 0, %v61
  %v63 = vrot.slane %v58, %v62
  %vm65 = vcmask 261120
  %v67 = vsel %vm65, %v52, 0
  %v70 = vsel %vm65, %v53, 0
  %72 = vmatprep.subr.mxu0 0.0
  %73 = vmatpush1.msra.mxu0 %v54
  %74 = vmatprep.subr.mxu0 0.0
  %75 = vmatpush1.msra.mxu0 %v55
  %76 = vmatprep.subr.mxu0 0.0
  %77 = vmatpush1.msra.mxu0 %v56
  %78 = vmatprep.subr.mxu0 0.0
  %79 = vmatpush1.msra.mxu0 %v57
  %80 = vmatprep.subr.mxu0 0.0
  %81 = vmatpush1.msra.mxu0 0.0
  %82 = vmatprep.subr.mxu0 0.0
  %83 = vmatpush1.msra.mxu0 0.0
  %84 = vmatprep.subr.mxu0 0.0
  %85 = vmatpush1.msra.mxu0 0.0
  %86 = vmatprep.subr.mxu0 0.0
  %87 = vmatpush1.msra.mxu0 0.0
  %88 = vmatprep.subr.mxu0 0.0
  %89 = vmatpush1.msra.mxu0 0.0
  %90 = vmatprep.subr.mxu0 0.0
  %91 = vmatpush1.msra.mxu0 0.0
  %92 = vmatprep.subr.mxu0 0.0
  %93 = vmatpush1.msra.mxu0 0.0
  %94 = vmatprep.subr.mxu0 0.0
  %95 = vmatpush1.msra.mxu0 0.0
  %96 = vmatprep.subr.mxu0 0.0
  %97 = vmatpush1.msra.mxu0 0.0
  %98 = vmatprep.subr.mxu0 0.0
  %99 = vmatpush1.msra.mxu0 0.0
  %100 = vmatprep.subr.mxu0 0.0
  %101 = vmatpush1.msra.mxu0 0.0
  %102 = vmatprep.subr.mxu0 0.0
  %103 = vmatpush1.msra.mxu0 0.0
  %104 = vmatprep.subr.mxu0 0.0
  %105 = vmatpush1.msra.mxu0 0.0
  %106 = vmatprep.subr.mxu0 0.0
  %107 = vmatpush1.msra.mxu0 0.0
  %108 = vmatprep.subr.mxu0 0.0
  %109 = vmatpush1.msra.mxu0 0.0
  %110 = vmatprep.subr.mxu0 0.0
  %111 = vmatpush1.msra.mxu0 0.0
  %112 = vmatprep.subr.mxu0 0.0
  %113 = vmatpush1.msra.mxu0 0.0
  %114 = vmatprep.subr.mxu0 0.0
  %115 = vmatpush1.msra.mxu0 0.0
  %116 = vmatprep.subr.mxu0 0.0
  %117 = vmatpush1.msra.mxu0 0.0
  %118 = vmatprep.subr.mxu0 0.0
  %119 = vmatpush1.msra.mxu0 0.0
  %120 = vmatprep.subr.mxu0 0.0
  %121 = vmatpush1.msra.mxu0 0.0
  %122 = vmatprep.subr.mxu0 0.0
  %123 = vmatpush1.msra.mxu0 0.0
  %124 = vmatprep.subr.mxu0 0.0
  %125 = vmatpush1.msra.mxu0 0.0
  %126 = vmatprep.subr.mxu0 0.0
  %127 = vmatpush1.msra.mxu0 0.0
  %128 = vmatprep.subr.mxu0 0.0
  %129 = vmatpush1.msra.mxu0 0.0
  %130 = vmatprep.subr.mxu0 0.0
  %131 = vmatpush1.msra.mxu0 0.0
  %132 = vmatprep.subr.mxu0 0.0
  %133 = vmatpush1.msra.mxu0 0.0
  %134 = vmatprep.subr.mxu0 0.0
  %135 = vmatpush1.msra.mxu0 0.0
  %136 = vmatprep.mubr.f32.mxu0 0.0
  %137 = vmatmul.mubr.f32.gmra.mrb[0].mxu0 %v67
  %v138 = vpop.f32.mrb[0].mxu0
  %v139 = vadd.f32 %v63, %v138
  %v140 = vpop.f32.mrb[0].mxu0
  %141 = vmatprep.mubr.f32.mxu0 0.0
  %142 = vmatmul.mubr.f32.gmra.mrb[0].mxu0 %v70
  %v143 = vpop.f32.mrb[0].mxu0
  %v144 = vadd.f32 %v63, %v143
  %v145 = vpop.f32.mrb[0].mxu0
  %146 = vdwg.mxu0
  %v147 = vmul.f32 %v139, 0.35355338
  %v148 = vmul.f32 %v144, 0.35355338
  %v149 = vlaneseq
  %v150 = vand.u32 %v149, 127
  %vm151 = vcmp.lt.s32.totalorder %v150, 9
  %v152 = vld [vmem:[%s5] sm:$0xff]
  %v153 = vld [vmem:[%s5 + $0x8] sm:$0xff]
  %v154 = vld [vmem:[%s5 + $0x10] sm:$0xff]
  %v155 = vld [vmem:[%s5 + $0x18] sm:$0xff]
  %v156 = vld [vmem:[%s1] sm:$0xff]
  %v157 = vld [vmem:[%s1 + $0x8] sm:$0xff]
  %v158 = vld [vmem:[%s2] sm:$0xff]
  %v159 = vld [vmem:[%s2 + $0x8] sm:$0xff]
  %vm160 = vcmask 64512
  %v162 = vsel %vm160, %v147, 0
  %v165 = vsel %vm160, %v148, 0
  %v168 = vsel %vm160, %v156, 0
  %v171 = vsel %vm160, %v157, 0
  %173 = vmatprep.subr.mxu0 0.0
  %174 = vmatpush1.xpose.msra.mxu0 %v168
  %175 = vmatprep.subr.mxu0 0.0
  %176 = vmatpush1.xpose.msra.mxu0 %v171
  %177 = vmatprep.subr.mxu0 0.0
  %178 = vmatpush1.xpose.msra.mxu0 0.0
  %179 = vmatprep.subr.mxu0 0.0
  %180 = vmatpush1.xpose.msra.mxu0 0.0
  %181 = vmatprep.subr.mxu0 0.0
  %182 = vmatpush1.xpose.msra.mxu0 0.0
  %183 = vmatprep.subr.mxu0 0.0
  %184 = vmatpush1.xpose.msra.mxu0 0.0
  %185 = vmatprep.subr.mxu0 0.0
  %186 = vmatpush1.xpose.msra.mxu0 0.0
  %187 = vmatprep.subr.mxu0 0.0
  %188 = vmatpush1.xpose.msra.mxu0 0.0
  %189 = vmatprep.subr.mxu0 0.0
  %190 = vmatpush1.xpose.msra.mxu0 0.0
  %191 = vmatprep.subr.mxu0 0.0
  %192 = vmatpush1.xpose.msra.mxu0 0.0
  %193 = vmatprep.subr.mxu0 0.0
  %194 = vmatpush1.xpose.msra.mxu0 0.0
  %195 = vmatprep.subr.mxu0 0.0
  %196 = vmatpush1.xpose.msra.mxu0 0.0
  %197 = vmatprep.subr.mxu0 0.0
  %198 = vmatpush1.xpose.msra.mxu0 0.0
  %199 = vmatprep.subr.mxu0 0.0
  %200 = vmatpush1.xpose.msra.mxu0 0.0
  %201 = vmatprep.subr.mxu0 0.0
  %202 = vmatpush1.xpose.msra.mxu0 0.0
  %203 = vmatprep.subr.mxu0 0.0
  %204 = vmatpush1.xpose.msra.mxu0 0.0
  %205 = vmatprep.subr.mxu0 0.0
  %206 = vmatpush1.xpose.msra.mxu0 0.0
  %207 = vmatprep.subr.mxu0 0.0
  %208 = vmatpush1.xpose.msra.mxu0 0.0
  %209 = vmatprep.subr.mxu0 0.0
  %210 = vmatpush1.xpose.msra.mxu0 0.0
  %211 = vmatprep.subr.mxu0 0.0
  %212 = vmatpush1.xpose.msra.mxu0 0.0
  %213 = vmatprep.subr.mxu0 0.0
  %214 = vmatpush1.xpose.msra.mxu0 0.0
  %215 = vmatprep.subr.mxu0 0.0
  %216 = vmatpush1.xpose.msra.mxu0 0.0
  %217 = vmatprep.subr.mxu0 0.0
  %218 = vmatpush1.xpose.msra.mxu0 0.0
  %219 = vmatprep.subr.mxu0 0.0
  %220 = vmatpush1.xpose.msra.mxu0 0.0
  %221 = vmatprep.subr.mxu0 0.0
  %222 = vmatpush1.xpose.msra.mxu0 0.0
  %223 = vmatprep.subr.mxu0 0.0
  %224 = vmatpush1.xpose.msra.mxu0 0.0
  %225 = vmatprep.subr.mxu0 0.0
  %226 = vmatpush1.xpose.msra.mxu0 0.0
  %227 = vmatprep.subr.mxu0 0.0
  %228 = vmatpush1.xpose.msra.mxu0 0.0
  %229 = vmatprep.subr.mxu0 0.0
  %230 = vmatpush1.xpose.msra.mxu0 0.0
  %231 = vmatprep.subr.mxu0 0.0
  %232 = vmatpush1.xpose.msra.mxu0 0.0
  %233 = vmatprep.subr.mxu0 0.0
  %234 = vmatpush1.xpose.msra.mxu0 0.0
  %235 = vmatprep.subr.mxu0 0.0
  %236 = vmatpush1.xpose.msra.mxu0 0.0
  %237 = vmatprep.mubr.f32.mxu0 0.0
  %238 = vmatmul.mubr.f32.gmra.mrb[0].mxu0 %v162
  %v239 = vpop.f32.mrb[0].mxu0
  %v240 = vadd.f32 0.0, %v239
  %v241 = vpop.f32.mrb[0].mxu0
  %242 = vmatprep.mubr.f32.mxu0 0.0
  %243 = vmatmul.mubr.f32.gmra.mrb[0].mxu0 %v165
  %v244 = vpop.f32.mrb[0].mxu0
  %v245 = vadd.f32 0.0, %v244
  %v246 = vpop.f32.mrb[0].mxu0
  %247 = vdwg.mxu0
  %v248 = vsel %vm151, 1, 0
  %vm249 = vcmp.eq.s32.totalorder %v248, 1
  %v250 = vsel %vm249, %v240, -1e+30
  %v251 = vsel %vm249, %v245, -1e+30
  %vm252 = vcmask 130048
  %v253 = vsel %vm252, %v250, -inf
  %254 = vmax.xlane.f32.xlu0 %v253
  %v255 = vpop.xlane.xlu0 %254
  %v256 = vsel %vm252, %v251, -inf
  %257 = vmax.xlane.f32.xlu0 %v256
  %v258 = vpop.xlane.xlu0 %257
  %v259 = vsub.f32 %v250, %v255
  %v260 = vsub.f32 %v251, %v258
  %v261 = vmul.f32 %v259, 1.442695
  %v262 = vpow.pop %v261
  %v263 = vmul.f32 %v260, 1.442695
  %v264 = vpow.pop %v263
  %v265 = vsel %vm252, %v262, 0.0
  %266 = vadd.xlane.f32.xlu0 %v265
  %v267 = vpop.xlane.xlu0 %266
  %v268 = vsel %vm252, %v264, 0.0
  %269 = vadd.xlane.f32.xlu0 %v268
  %v270 = vpop.xlane.xlu0 %269
  %v271 = vrcp.pop %v267
  %v272 = vmul.f32 1.0, %v271
  %v273 = vrcp.pop %v270
  %v274 = vmul.f32 1.0, %v273
  %v276 = vsel %vm252, %v262, 0
  %v279 = vsel %vm252, %v264, 0
  %281 = vmatprep.subr.mxu0 0.0
  %282 = vmatpush1.msra.mxu0 %v158
  %283 = vmatprep.subr.mxu0 0.0
  %284 = vmatpush1.msra.mxu0 %v159
  %285 = vmatprep.subr.mxu0 0.0
  %286 = vmatpush1.msra.mxu0 0.0
  %287 = vmatprep.subr.mxu0 0.0
  %288 = vmatpush1.msra.mxu0 0.0
  %289 = vmatprep.subr.mxu0 0.0
  %290 = vmatpush1.msra.mxu0 0.0
  %291 = vmatprep.subr.mxu0 0.0
  %292 = vmatpush1.msra.mxu0 0.0
  %293 = vmatprep.subr.mxu0 0.0
  %294 = vmatpush1.msra.mxu0 0.0
  %295 = vmatprep.subr.mxu0 0.0
  %296 = vmatpush1.msra.mxu0 0.0
  %297 = vmatprep.subr.mxu0 0.0
  %298 = vmatpush1.msra.mxu0 0.0
  %299 = vmatprep.subr.mxu0 0.0
  %300 = vmatpush1.msra.mxu0 0.0
  %301 = vmatprep.subr.mxu0 0.0
  %302 = vmatpush1.msra.mxu0 0.0
  %303 = vmatprep.subr.mxu0 0.0
  %304 = vmatpush1.msra.mxu0 0.0
  %305 = vmatprep.subr.mxu0 0.0
  %306 = vmatpush1.msra.mxu0 0.0
  %307 = vmatprep.subr.mxu0 0.0
  %308 = vmatpush1.msra.mxu0 0.0
  %309 = vmatprep.subr.mxu0 0.0
  %310 = vmatpush1.msra.mxu0 0.0
  %311 = vmatprep.subr.mxu0 0.0
  %312 = vmatpush1.msra.mxu0 0.0
  %313 = vmatprep.subr.mxu0 0.0
  %314 = vmatpush1.msra.mxu0 0.0
  %315 = vmatprep.subr.mxu0 0.0
  %316 = vmatpush1.msra.mxu0 0.0
  %317 = vmatprep.subr.mxu0 0.0
  %318 = vmatpush1.msra.mxu0 0.0
  %319 = vmatprep.subr.mxu0 0.0
  %320 = vmatpush1.msra.mxu0 0.0
  %321 = vmatprep.subr.mxu0 0.0
  %322 = vmatpush1.msra.mxu0 0.0
  %323 = vmatprep.subr.mxu0 0.0
  %324 = vmatpush1.msra.mxu0 0.0
  %325 = vmatprep.subr.mxu0 0.0
  %326 = vmatpush1.msra.mxu0 0.0
  %327 = vmatprep.subr.mxu0 0.0
  %328 = vmatpush1.msra.mxu0 0.0
  %329 = vmatprep.subr.mxu0 0.0
  %330 = vmatpush1.msra.mxu0 0.0
  %331 = vmatprep.subr.mxu0 0.0
  %332 = vmatpush1.msra.mxu0 0.0
  %333 = vmatprep.subr.mxu0 0.0
  %334 = vmatpush1.msra.mxu0 0.0
  %335 = vmatprep.subr.mxu0 0.0
  %336 = vmatpush1.msra.mxu0 0.0
  %337 = vmatprep.subr.mxu0 0.0
  %338 = vmatpush1.msra.mxu0 0.0
  %339 = vmatprep.subr.mxu0 0.0
  %340 = vmatpush1.msra.mxu0 0.0
  %341 = vmatprep.subr.mxu0 0.0
  %342 = vmatpush1.msra.mxu0 0.0
  %343 = vmatprep.subr.mxu0 0.0
  %344 = vmatpush1.msra.mxu0 0.0
  %345 = vmatprep.mubr.f32.mxu0 0.0
  %346 = vmatmul.mubr.f32.gmra.mrb[0].mxu0 %v276
  %v347 = vpop.f32.mrb[0].mxu0
  %v348 = vadd.f32 0.0, %v347
  %v349 = vpop.f32.mrb[0].mxu0
  %350 = vmatprep.mubr.f32.mxu0 0.0
  %351 = vmatmul.mubr.f32.gmra.mrb[0].mxu0 %v279
  %v352 = vpop.f32.mrb[0].mxu0
  %v353 = vadd.f32 0.0, %v352
  %v354 = vpop.f32.mrb[0].mxu0
  %355 = vdwg.mxu0
  %v356 = vmul.f32 %v348, %v272
  %v357 = vmul.f32 %v353, %v274
  %358 = vrot.lane.b32.xlu0 %v147, 120
  %v359 = vpop.permute.xlu0 %358
  %360 = vrot.lane.b32.xlu0 %v148, 120
  %v361 = vpop.permute.xlu0 %360
  %362 = vrot.lane.b32.xlu0 %v156, 120
  %v363 = vpop.permute.xlu0 %362
  %364 = vrot.lane.b32.xlu0 %v157, 120
  %v365 = vpop.permute.xlu0 %364
  %v366 = vsel %vm160, %v359, 0
  %v368 = vsel %vm160, %v361, 0
  %v370 = vsel %vm160, %v363, 0
  %v372 = vsel %vm160, %v365, 0
  %374 = vmatprep.subr.mxu0 0.0
  %375 = vmatpush1.xpose.msra.mxu0 %v370
  %376 = vmatprep.subr.mxu0 0.0
  %377 = vmatpush1.xpose.msra.mxu0 %v372
  %378 = vmatprep.subr.mxu0 0.0
  %379 = vmatpush1.xpose.msra.mxu0 0.0
  %380 = vmatprep.subr.mxu0 0.0
  %381 = vmatpush1.xpose.msra.mxu0 0.0
  %382 = vmatprep.subr.mxu0 0.0
  %383 = vmatpush1.xpose.msra.mxu0 0.0
  %384 = vmatprep.subr.mxu0 0.0
  %385 = vmatpush1.xpose.msra.mxu0 0.0
  %386 = vmatprep.subr.mxu0 0.0
  %387 = vmatpush1.xpose.msra.mxu0 0.0
  %388 = vmatprep.subr.mxu0 0.0
  %389 = vmatpush1.xpose.msra.mxu0 0.0
  %390 = vmatprep.subr.mxu0 0.0
  %391 = vmatpush1.xpose.msra.mxu0 0.0
  %392 = vmatprep.subr.mxu0 0.0
  %393 = vmatpush1.xpose.msra.mxu0 0.0
  %394 = vmatprep.subr.mxu0 0.0
  %395 = vmatpush1.xpose.msra.mxu0 0.0
  %396 = vmatprep.subr.mxu0 0.0
  %397 = vmatpush1.xpose.msra.mxu0 0.0
  %398 = vmatprep.subr.mxu0 0.0
  %399 = vmatpush1.xpose.msra.mxu0 0.0
  %400 = vmatprep.subr.mxu0 0.0
  %401 = vmatpush1.xpose.msra.mxu0 0.0
  %402 = vmatprep.subr.mxu0 0.0
  %403 = vmatpush1.xpose.msra.mxu0 0.0
  %404 = vmatprep.subr.mxu0 0.0
  %405 = vmatpush1.xpose.msra.mxu0 0.0
  %406 = vmatprep.subr.mxu0 0.0
  %407 = vmatpush1.xpose.msra.mxu0 0.0
  %408 = vmatprep.subr.mxu0 0.0
  %409 = vmatpush1.xpose.msra.mxu0 0.0
  %410 = vmatprep.subr.mxu0 0.0
  %411 = vmatpush1.xpose.msra.mxu0 0.0
  %412 = vmatprep.subr.mxu0 0.0
  %413 = vmatpush1.xpose.msra.mxu0 0.0
  %414 = vmatprep.subr.mxu0 0.0
  %415 = vmatpush1.xpose.msra.mxu0 0.0
  %416 = vmatprep.subr.mxu0 0.0
  %417 = vmatpush1.xpose.msra.mxu0 0.0
  %418 = vmatprep.subr.mxu0 0.0
  %419 = vmatpush1.xpose.msra.mxu0 0.0
  %420 = vmatprep.subr.mxu0 0.0
  %421 = vmatpush1.xpose.msra.mxu0 0.0
  %422 = vmatprep.subr.mxu0 0.0
  %423 = vmatpush1.xpose.msra.mxu0 0.0
  %424 = vmatprep.subr.mxu0 0.0
  %425 = vmatpush1.xpose.msra.mxu0 0.0
  %426 = vmatprep.subr.mxu0 0.0
  %427 = vmatpush1.xpose.msra.mxu0 0.0
  %428 = vmatprep.subr.mxu0 0.0
  %429 = vmatpush1.xpose.msra.mxu0 0.0
  %430 = vmatprep.subr.mxu0 0.0
  %431 = vmatpush1.xpose.msra.mxu0 0.0
  %432 = vmatprep.subr.mxu0 0.0
  %433 = vmatpush1.xpose.msra.mxu0 0.0
  %434 = vmatprep.subr.mxu0 0.0
  %435 = vmatpush1.xpose.msra.mxu0 0.0
  %436 = vmatprep.subr.mxu0 0.0
  %437 = vmatpush1.xpose.msra.mxu0 0.0
  %438 = vmatprep.mubr.f32.mxu0 0.0
  %439 = vmatmul.mubr.f32.gmra.mrb[0].mxu0 %v366
  %v440 = vpop.f32.mrb[0].mxu0
  %v441 = vadd.f32 0.0, %v440
  %v442 = vpop.f32.mrb[0].mxu0
  %443 = vmatprep.mubr.f32.mxu0 0.0
  %444 = vmatmul.mubr.f32.gmra.mrb[0].mxu0 %v368
  %v445 = vpop.f32.mrb[0].mxu0
  %v446 = vadd.f32 0.0, %v445
  %v447 = vpop.f32.mrb[0].mxu0
  %448 = vdwg.mxu0
  %v449 = vsel %vm249, %v441, -1e+30
  %v450 = vsel %vm249, %v446, -1e+30
  %v451 = vsel %vm252, %v449, -inf
  %452 = vmax.xlane.f32.xlu0 %v451
  %v453 = vpop.xlane.xlu0 %452
  %v454 = vsel %vm252, %v450, -inf
  %455 = vmax.xlane.f32.xlu0 %v454
  %v456 = vpop.xlane.xlu0 %455
  %v457 = vsub.f32 %v449, %v453
  %v458 = vsub.f32 %v450, %v456
  %v459 = vmul.f32 %v457, 1.442695
  %v460 = vpow.pop %v459
  %v461 = vmul.f32 %v458, 1.442695
  %v462 = vpow.pop %v461
  %v463 = vsel %vm252, %v460, 0.0
  %464 = vadd.xlane.f32.xlu0 %v463
  %v465 = vpop.xlane.xlu0 %464
  %v466 = vsel %vm252, %v462, 0.0
  %467 = vadd.xlane.f32.xlu0 %v466
  %v468 = vpop.xlane.xlu0 %467
  %v469 = vrcp.pop %v465
  %v470 = vmul.f32 1.0, %v469
  %v471 = vrcp.pop %v468
  %v472 = vmul.f32 1.0, %v471
  %475 = vrot.lane.b32.xlu0 %v158, 120
  %v476 = vpop.permute.xlu0 %475
  %477 = vrot.lane.b32.xlu0 %v159, 120
  %v478 = vpop.permute.xlu0 %477
  %v482 = vsel %vm252, %v460, 0
  %v485 = vsel %vm252, %v462, 0
  %487 = vmatprep.subr.mxu0 0.0
  %488 = vmatpush1.msra.mxu0 %v476
  %489 = vmatprep.subr.mxu0 0.0
  %490 = vmatpush1.msra.mxu0 %v478
  %491 = vmatprep.subr.mxu0 0.0
  %492 = vmatpush1.msra.mxu0 0.0
  %493 = vmatprep.subr.mxu0 0.0
  %494 = vmatpush1.msra.mxu0 0.0
  %495 = vmatprep.subr.mxu0 0.0
  %496 = vmatpush1.msra.mxu0 0.0
  %497 = vmatprep.subr.mxu0 0.0
  %498 = vmatpush1.msra.mxu0 0.0
  %499 = vmatprep.subr.mxu0 0.0
  %500 = vmatpush1.msra.mxu0 0.0
  %501 = vmatprep.subr.mxu0 0.0
  %502 = vmatpush1.msra.mxu0 0.0
  %503 = vmatprep.subr.mxu0 0.0
  %504 = vmatpush1.msra.mxu0 0.0
  %505 = vmatprep.subr.mxu0 0.0
  %506 = vmatpush1.msra.mxu0 0.0
  %507 = vmatprep.subr.mxu0 0.0
  %508 = vmatpush1.msra.mxu0 0.0
  %509 = vmatprep.subr.mxu0 0.0
  %510 = vmatpush1.msra.mxu0 0.0
  %511 = vmatprep.subr.mxu0 0.0
  %512 = vmatpush1.msra.mxu0 0.0
  %513 = vmatprep.subr.mxu0 0.0
  %514 = vmatpush1.msra.mxu0 0.0
  %515 = vmatprep.subr.mxu0 0.0
  %516 = vmatpush1.msra.mxu0 0.0
  %517 = vmatprep.subr.mxu0 0.0
  %518 = vmatpush1.msra.mxu0 0.0
  %519 = vmatprep.subr.mxu0 0.0
  %520 = vmatpush1.msra.mxu0 0.0
  %521 = vmatprep.subr.mxu0 0.0
  %522 = vmatpush1.msra.mxu0 0.0
  %523 = vmatprep.subr.mxu0 0.0
  %524 = vmatpush1.msra.mxu0 0.0
  %525 = vmatprep.subr.mxu0 0.0
  %526 = vmatpush1.msra.mxu0 0.0
  %527 = vmatprep.subr.mxu0 0.0
  %528 = vmatpush1.msra.mxu0 0.0
  %529 = vmatprep.subr.mxu0 0.0
  %530 = vmatpush1.msra.mxu0 0.0
  %531 = vmatprep.subr.mxu0 0.0
  %532 = vmatpush1.msra.mxu0 0.0
  %533 = vmatprep.subr.mxu0 0.0
  %534 = vmatpush1.msra.mxu0 0.0
  %535 = vmatprep.subr.mxu0 0.0
  %536 = vmatpush1.msra.mxu0 0.0
  %537 = vmatprep.subr.mxu0 0.0
  %538 = vmatpush1.msra.mxu0 0.0
  %539 = vmatprep.subr.mxu0 0.0
  %540 = vmatpush1.msra.mxu0 0.0
  %541 = vmatprep.subr.mxu0 0.0
  %542 = vmatpush1.msra.mxu0 0.0
  %543 = vmatprep.subr.mxu0 0.0
  %544 = vmatpush1.msra.mxu0 0.0
  %545 = vmatprep.subr.mxu0 0.0
  %546 = vmatpush1.msra.mxu0 0.0
  %547 = vmatprep.subr.mxu0 0.0
  %548 = vmatpush1.msra.mxu0 0.0
  %549 = vmatprep.subr.mxu0 0.0
  %550 = vmatpush1.msra.mxu0 0.0
  %551 = vmatprep.mubr.f32.mxu0 0.0
  %552 = vmatmul.mubr.f32.gmra.mrb[0].mxu0 %v482
  %v553 = vpop.f32.mrb[0].mxu0
  %v554 = vadd.f32 0.0, %v553
  %v555 = vpop.f32.mrb[0].mxu0
  %556 = vmatprep.mubr.f32.mxu0 0.0
  %557 = vmatmul.mubr.f32.gmra.mrb[0].mxu0 %v485
  %v558 = vpop.f32.mrb[0].mxu0
  %v559 = vadd.f32 0.0, %v558
  %v560 = vpop.f32.mrb[0].mxu0
  %561 = vdwg.mxu0
  %v562 = vmul.f32 %v554, %v470
  %v563 = vmul.f32 %v559, %v472
  %v565 = vsel %vm160, %v562, 0
  %v568 = vsel %vm160, %v563, 0
  %570 = vmatprep.subr.mxu0 0.0
  %571 = vmatpush1.msra.mxu0 %v153
  %572 = vmatprep.subr.mxu0 0.0
  %573 = vmatpush1.msra.mxu0 0.0
  %574 = vmatprep.subr.mxu0 0.0
  %575 = vmatpush1.msra.mxu0 0.0
  %576 = vmatprep.subr.mxu0 0.0
  %577 = vmatpush1.msra.mxu0 0.0
  %578 = vmatprep.subr.mxu0 0.0
  %579 = vmatpush1.msra.mxu0 0.0
  %580 = vmatprep.subr.mxu0 0.0
  %581 = vmatpush1.msra.mxu0 0.0
  %582 = vmatprep.subr.mxu0 0.0
  %583 = vmatpush1.msra.mxu0 0.0
  %584 = vmatprep.subr.mxu0 0.0
  %585 = vmatpush1.msra.mxu0 0.0
  %586 = vmatprep.subr.mxu0 0.0
  %587 = vmatpush1.msra.mxu0 0.0
  %588 = vmatprep.subr.mxu0 0.0
  %589 = vmatpush1.msra.mxu0 0.0
  %590 = vmatprep.subr.mxu0 0.0
  %591 = vmatpush1.msra.mxu0 0.0
  %592 = vmatprep.subr.mxu0 0.0
  %593 = vmatpush1.msra.mxu0 0.0
  %594 = vmatprep.subr.mxu0 0.0
  %595 = vmatpush1.msra.mxu0 0.0
  %596 = vmatprep.subr.mxu0 0.0
  %597 = vmatpush1.msra.mxu0 0.0
  %598 = vmatprep.subr.mxu0 0.0
  %599 = vmatpush1.msra.mxu0 0.0
  %600 = vmatprep.subr.mxu0 0.0
  %601 = vmatpush1.msra.mxu0 0.0
  %602 = vmatprep.subr.mxu0 0.0
  %603 = vmatpush1.msra.mxu0 0.0
  %604 = vmatprep.subr.mxu0 0.0
  %605 = vmatpush1.msra.mxu0 0.0
  %606 = vmatprep.subr.mxu0 0.0
  %607 = vmatpush1.msra.mxu0 0.0
  %608 = vmatprep.subr.mxu0 0.0
  %609 = vmatpush1.msra.mxu0 0.0
  %610 = vmatprep.subr.mxu0 0.0
  %611 = vmatpush1.msra.mxu0 0.0
  %612 = vmatprep.subr.mxu0 0.0
  %613 = vmatpush1.msra.mxu0 0.0
  %614 = vmatprep.subr.mxu0 0.0
  %615 = vmatpush1.msra.mxu0 0.0
  %616 = vmatprep.subr.mxu0 0.0
  %617 = vmatpush1.msra.mxu0 0.0
  %618 = vmatprep.subr.mxu0 0.0
  %619 = vmatpush1.msra.mxu0 0.0
  %620 = vmatprep.subr.mxu0 0.0
  %621 = vmatpush1.msra.mxu0 0.0
  %622 = vmatprep.subr.mxu0 0.0
  %623 = vmatpush1.msra.mxu0 0.0
  %624 = vmatprep.subr.mxu0 0.0
  %625 = vmatpush1.msra.mxu0 0.0
  %626 = vmatprep.subr.mxu0 0.0
  %627 = vmatpush1.msra.mxu0 0.0
  %628 = vmatprep.subr.mxu0 0.0
  %629 = vmatpush1.msra.mxu0 0.0
  %630 = vmatprep.subr.mxu0 0.0
  %631 = vmatpush1.msra.mxu0 0.0
  %632 = vmatprep.subr.mxu0 0.0
  %633 = vmatpush1.msra.mxu0 0.0
  %634 = vmatprep.mubr.f32.mxu0 0.0
  %635 = vmatmul.mubr.f32.gmra.mrb[0].mxu0 %v565
  %v636 = vpop.f32.mrb[0].mxu0
  %v637 = vadd.f32 0.0, %v636
  %v638 = vpop.f32.mrb[0].mxu0
  %639 = vmatprep.mubr.f32.mxu0 0.0
  %640 = vmatmul.mubr.f32.gmra.mrb[0].mxu0 %v568
  %v641 = vpop.f32.mrb[0].mxu0
  %v642 = vadd.f32 0.0, %v641
  %v643 = vpop.f32.mrb[0].mxu0
  %644 = vdwg.mxu0
  %v646 = vsel %vm160, %v356, 0
  %v649 = vsel %vm160, %v357, 0
  %651 = vmatprep.subr.mxu0 0.0
  %652 = vmatpush1.msra.mxu0 %v152
  %653 = vmatprep.subr.mxu0 0.0
  %654 = vmatpush1.msra.mxu0 0.0
  %655 = vmatprep.subr.mxu0 0.0
  %656 = vmatpush1.msra.mxu0 0.0
  %657 = vmatprep.subr.mxu0 0.0
  %658 = vmatpush1.msra.mxu0 0.0
  %659 = vmatprep.subr.mxu0 0.0
  %660 = vmatpush1.msra.mxu0 0.0
  %661 = vmatprep.subr.mxu0 0.0
  %662 = vmatpush1.msra.mxu0 0.0
  %663 = vmatprep.subr.mxu0 0.0
  %664 = vmatpush1.msra.mxu0 0.0
  %665 = vmatprep.subr.mxu0 0.0
  %666 = vmatpush1.msra.mxu0 0.0
  %667 = vmatprep.subr.mxu0 0.0
  %668 = vmatpush1.msra.mxu0 0.0
  %669 = vmatprep.subr.mxu0 0.0
  %670 = vmatpush1.msra.mxu0 0.0
  %671 = vmatprep.subr.mxu0 0.0
  %672 = vmatpush1.msra.mxu0 0.0
  %673 = vmatprep.subr.mxu0 0.0
  %674 = vmatpush1.msra.mxu0 0.0
  %675 = vmatprep.subr.mxu0 0.0
  %676 = vmatpush1.msra.mxu0 0.0
  %677 = vmatprep.subr.mxu0 0.0
  %678 = vmatpush1.msra.mxu0 0.0
  %679 = vmatprep.subr.mxu0 0.0
  %680 = vmatpush1.msra.mxu0 0.0
  %681 = vmatprep.subr.mxu0 0.0
  %682 = vmatpush1.msra.mxu0 0.0
  %683 = vmatprep.subr.mxu0 0.0
  %684 = vmatpush1.msra.mxu0 0.0
  %685 = vmatprep.subr.mxu0 0.0
  %686 = vmatpush1.msra.mxu0 0.0
  %687 = vmatprep.subr.mxu0 0.0
  %688 = vmatpush1.msra.mxu0 0.0
  %689 = vmatprep.subr.mxu0 0.0
  %690 = vmatpush1.msra.mxu0 0.0
  %691 = vmatprep.subr.mxu0 0.0
  %692 = vmatpush1.msra.mxu0 0.0
  %693 = vmatprep.subr.mxu0 0.0
  %694 = vmatpush1.msra.mxu0 0.0
  %695 = vmatprep.subr.mxu0 0.0
  %696 = vmatpush1.msra.mxu0 0.0
  %697 = vmatprep.subr.mxu0 0.0
  %698 = vmatpush1.msra.mxu0 0.0
  %699 = vmatprep.subr.mxu0 0.0
  %700 = vmatpush1.msra.mxu0 0.0
  %701 = vmatprep.subr.mxu0 0.0
  %702 = vmatpush1.msra.mxu0 0.0
  %703 = vmatprep.subr.mxu0 0.0
  %704 = vmatpush1.msra.mxu0 0.0
  %705 = vmatprep.subr.mxu0 0.0
  %706 = vmatpush1.msra.mxu0 0.0
  %707 = vmatprep.subr.mxu0 0.0
  %708 = vmatpush1.msra.mxu0 0.0
  %709 = vmatprep.subr.mxu0 0.0
  %710 = vmatpush1.msra.mxu0 0.0
  %711 = vmatprep.subr.mxu0 0.0
  %712 = vmatpush1.msra.mxu0 0.0
  %713 = vmatprep.subr.mxu0 0.0
  %714 = vmatpush1.msra.mxu0 0.0
  %715 = vmatprep.mubr.f32.mxu0 0.0
  %716 = vmatmul.mubr.f32.gmra.mrb[0].mxu0 %v646
  %v717 = vpop.f32.mrb[0].mxu0
  %v718 = vadd.f32 %v637, %v717
  %v719 = vpop.f32.mrb[0].mxu0
  %720 = vmatprep.mubr.f32.mxu0 0.0
  %721 = vmatmul.mubr.f32.gmra.mrb[0].mxu0 %v649
  %v722 = vpop.f32.mrb[0].mxu0
  %v723 = vadd.f32 %v642, %v722
  %v724 = vpop.f32.mrb[0].mxu0
  %725 = vdwg.mxu0
  %726 = vrot.lane.b32.xlu0 %v147, 112
  %v727 = vpop.permute.xlu0 %726
  %728 = vrot.lane.b32.xlu0 %v148, 112
  %v729 = vpop.permute.xlu0 %728
  %730 = vrot.lane.b32.xlu0 %v156, 112
  %v731 = vpop.permute.xlu0 %730
  %732 = vrot.lane.b32.xlu0 %v157, 112
  %v733 = vpop.permute.xlu0 %732
  %v734 = vsel %vm160, %v727, 0
  %v736 = vsel %vm160, %v729, 0
  %v738 = vsel %vm160, %v731, 0
  %v740 = vsel %vm160, %v733, 0
  %742 = vmatprep.subr.mxu0 0.0
  %743 = vmatpush1.xpose.msra.mxu0 %v738
  %744 = vmatprep.subr.mxu0 0.0
  %745 = vmatpush1.xpose.msra.mxu0 %v740
  %746 = vmatprep.subr.mxu0 0.0
  %747 = vmatpush1.xpose.msra.mxu0 0.0
  %748 = vmatprep.subr.mxu0 0.0
  %749 = vmatpush1.xpose.msra.mxu0 0.0
  %750 = vmatprep.subr.mxu0 0.0
  %751 = vmatpush1.xpose.msra.mxu0 0.0
  %752 = vmatprep.subr.mxu0 0.0
  %753 = vmatpush1.xpose.msra.mxu0 0.0
  %754 = vmatprep.subr.mxu0 0.0
  %755 = vmatpush1.xpose.msra.mxu0 0.0
  %756 = vmatprep.subr.mxu0 0.0
  %757 = vmatpush1.xpose.msra.mxu0 0.0
  %758 = vmatprep.subr.mxu0 0.0
  %759 = vmatpush1.xpose.msra.mxu0 0.0
  %760 = vmatprep.subr.mxu0 0.0
  %761 = vmatpush1.xpose.msra.mxu0 0.0
  %762 = vmatprep.subr.mxu0 0.0
  %763 = vmatpush1.xpose.msra.mxu0 0.0
  %764 = vmatprep.subr.mxu0 0.0
  %765 = vmatpush1.xpose.msra.mxu0 0.0
  %766 = vmatprep.subr.mxu0 0.0
  %767 = vmatpush1.xpose.msra.mxu0 0.0
  %768 = vmatprep.subr.mxu0 0.0
  %769 = vmatpush1.xpose.msra.mxu0 0.0
  %770 = vmatprep.subr.mxu0 0.0
  %771 = vmatpush1.xpose.msra.mxu0 0.0
  %772 = vmatprep.subr.mxu0 0.0
  %773 = vmatpush1.xpose.msra.mxu0 0.0
  %774 = vmatprep.subr.mxu0 0.0
  %775 = vmatpush1.xpose.msra.mxu0 0.0
  %776 = vmatprep.subr.mxu0 0.0
  %777 = vmatpush1.xpose.msra.mxu0 0.0
  %778 = vmatprep.subr.mxu0 0.0
  %779 = vmatpush1.xpose.msra.mxu0 0.0
  %780 = vmatprep.subr.mxu0 0.0
  %781 = vmatpush1.xpose.msra.mxu0 0.0
  %782 = vmatprep.subr.mxu0 0.0
  %783 = vmatpush1.xpose.msra.mxu0 0.0
  %784 = vmatprep.subr.mxu0 0.0
  %785 = vmatpush1.xpose.msra.mxu0 0.0
  %786 = vmatprep.subr.mxu0 0.0
  %787 = vmatpush1.xpose.msra.mxu0 0.0
  %788 = vmatprep.subr.mxu0 0.0
  %789 = vmatpush1.xpose.msra.mxu0 0.0
  %790 = vmatprep.subr.mxu0 0.0
  %791 = vmatpush1.xpose.msra.mxu0 0.0
  %792 = vmatprep.subr.mxu0 0.0
  %793 = vmatpush1.xpose.msra.mxu0 0.0
  %794 = vmatprep.subr.mxu0 0.0
  %795 = vmatpush1.xpose.msra.mxu0 0.0
  %796 = vmatprep.subr.mxu0 0.0
  %797 = vmatpush1.xpose.msra.mxu0 0.0
  %798 = vmatprep.subr.mxu0 0.0
  %799 = vmatpush1.xpose.msra.mxu0 0.0
  %800 = vmatprep.subr.mxu0 0.0
  %801 = vmatpush1.xpose.msra.mxu0 0.0
  %802 = vmatprep.subr.mxu0 0.0
  %803 = vmatpush1.xpose.msra.mxu0 0.0
  %804 = vmatprep.subr.mxu0 0.0
  %805 = vmatpush1.xpose.msra.mxu0 0.0
  %806 = vmatprep.mubr.f32.mxu0 0.0
  %807 = vmatmul.mubr.f32.gmra.mrb[0].mxu0 %v734
  %v808 = vpop.f32.mrb[0].mxu0
  %v809 = vadd.f32 0.0, %v808
  %v810 = vpop.f32.mrb[0].mxu0
  %811 = vmatprep.mubr.f32.mxu0 0.0
  %812 = vmatmul.mubr.f32.gmra.mrb[0].mxu0 %v736
  %v813 = vpop.f32.mrb[0].mxu0
  %v814 = vadd.f32 0.0, %v813
  %v815 = vpop.f32.mrb[0].mxu0
  %816 = vdwg.mxu0
  %v817 = vsel %vm249, %v809, -1e+30
  %v818 = vsel %vm249, %v814, -1e+30
  %v819 = vsel %vm252, %v817, -inf
  %820 = vmax.xlane.f32.xlu0 %v819
  %v821 = vpop.xlane.xlu0 %820
  %v822 = vsel %vm252, %v818, -inf
  %823 = vmax.xlane.f32.xlu0 %v822
  %v824 = vpop.xlane.xlu0 %823
  %v825 = vsub.f32 %v817, %v821
  %v826 = vsub.f32 %v818, %v824
  %v827 = vmul.f32 %v825, 1.442695
  %v828 = vpow.pop %v827
  %v829 = vmul.f32 %v826, 1.442695
  %v830 = vpow.pop %v829
  %v831 = vsel %vm252, %v828, 0.0
  %832 = vadd.xlane.f32.xlu0 %v831
  %v833 = vpop.xlane.xlu0 %832
  %v834 = vsel %vm252, %v830, 0.0
  %835 = vadd.xlane.f32.xlu0 %v834
  %v836 = vpop.xlane.xlu0 %835
  %v837 = vrcp.pop %v833
  %v838 = vmul.f32 1.0, %v837
  %v839 = vrcp.pop %v836
  %v840 = vmul.f32 1.0, %v839
  %841 = vrot.lane.b32.xlu0 %v158, 112
  %v842 = vpop.permute.xlu0 %841
  %843 = vrot.lane.b32.xlu0 %v159, 112
  %v844 = vpop.permute.xlu0 %843
  %v848 = vsel %vm252, %v828, 0
  %v851 = vsel %vm252, %v830, 0
  %853 = vmatprep.subr.mxu0 0.0
  %854 = vmatpush1.msra.mxu0 %v842
  %855 = vmatprep.subr.mxu0 0.0
  %856 = vmatpush1.msra.mxu0 %v844
  %857 = vmatprep.subr.mxu0 0.0
  %858 = vmatpush1.msra.mxu0 0.0
  %859 = vmatprep.subr.mxu0 0.0
  %860 = vmatpush1.msra.mxu0 0.0
  %861 = vmatprep.subr.mxu0 0.0
  %862 = vmatpush1.msra.mxu0 0.0
  %863 = vmatprep.subr.mxu0 0.0
  %864 = vmatpush1.msra.mxu0 0.0
  %865 = vmatprep.subr.mxu0 0.0
  %866 = vmatpush1.msra.mxu0 0.0
  %867 = vmatprep.subr.mxu0 0.0
  %868 = vmatpush1.msra.mxu0 0.0
  %869 = vmatprep.subr.mxu0 0.0
  %870 = vmatpush1.msra.mxu0 0.0
  %871 = vmatprep.subr.mxu0 0.0
  %872 = vmatpush1.msra.mxu0 0.0
  %873 = vmatprep.subr.mxu0 0.0
  %874 = vmatpush1.msra.mxu0 0.0
  %875 = vmatprep.subr.mxu0 0.0
  %876 = vmatpush1.msra.mxu0 0.0
  %877 = vmatprep.subr.mxu0 0.0
  %878 = vmatpush1.msra.mxu0 0.0
  %879 = vmatprep.subr.mxu0 0.0
  %880 = vmatpush1.msra.mxu0 0.0
  %881 = vmatprep.subr.mxu0 0.0
  %882 = vmatpush1.msra.mxu0 0.0
  %883 = vmatprep.subr.mxu0 0.0
  %884 = vmatpush1.msra.mxu0 0.0
  %885 = vmatprep.subr.mxu0 0.0
  %886 = vmatpush1.msra.mxu0 0.0
  %887 = vmatprep.subr.mxu0 0.0
  %888 = vmatpush1.msra.mxu0 0.0
  %889 = vmatprep.subr.mxu0 0.0
  %890 = vmatpush1.msra.mxu0 0.0
  %891 = vmatprep.subr.mxu0 0.0
  %892 = vmatpush1.msra.mxu0 0.0
  %893 = vmatprep.subr.mxu0 0.0
  %894 = vmatpush1.msra.mxu0 0.0
  %895 = vmatprep.subr.mxu0 0.0
  %896 = vmatpush1.msra.mxu0 0.0
  %897 = vmatprep.subr.mxu0 0.0
  %898 = vmatpush1.msra.mxu0 0.0
  %899 = vmatprep.subr.mxu0 0.0
  %900 = vmatpush1.msra.mxu0 0.0
  %901 = vmatprep.subr.mxu0 0.0
  %902 = vmatpush1.msra.mxu0 0.0
  %903 = vmatprep.subr.mxu0 0.0
  %904 = vmatpush1.msra.mxu0 0.0
  %905 = vmatprep.subr.mxu0 0.0
  %906 = vmatpush1.msra.mxu0 0.0
  %907 = vmatprep.subr.mxu0 0.0
  %908 = vmatpush1.msra.mxu0 0.0
  %909 = vmatprep.subr.mxu0 0.0
  %910 = vmatpush1.msra.mxu0 0.0
  %911 = vmatprep.subr.mxu0 0.0
  %912 = vmatpush1.msra.mxu0 0.0
  %913 = vmatprep.subr.mxu0 0.0
  %914 = vmatpush1.msra.mxu0 0.0
  %915 = vmatprep.subr.mxu0 0.0
  %916 = vmatpush1.msra.mxu0 0.0
  %917 = vmatprep.mubr.f32.mxu0 0.0
  %918 = vmatmul.mubr.f32.gmra.mrb[0].mxu0 %v848
  %v919 = vpop.f32.mrb[0].mxu0
  %v920 = vadd.f32 0.0, %v919
  %v921 = vpop.f32.mrb[0].mxu0
  %922 = vmatprep.mubr.f32.mxu0 0.0
  %923 = vmatmul.mubr.f32.gmra.mrb[0].mxu0 %v851
  %v924 = vpop.f32.mrb[0].mxu0
  %v925 = vadd.f32 0.0, %v924
  %v926 = vpop.f32.mrb[0].mxu0
  %927 = vdwg.mxu0
  %v928 = vmul.f32 %v920, %v838
  %v929 = vmul.f32 %v925, %v840
  %v931 = vsel %vm160, %v928, 0
  %v934 = vsel %vm160, %v929, 0
  %936 = vmatprep.subr.mxu0 0.0
  %937 = vmatpush1.msra.mxu0 %v154
  %938 = vmatprep.subr.mxu0 0.0
  %939 = vmatpush1.msra.mxu0 0.0
  %940 = vmatprep.subr.mxu0 0.0
  %941 = vmatpush1.msra.mxu0 0.0
  %942 = vmatprep.subr.mxu0 0.0
  %943 = vmatpush1.msra.mxu0 0.0
  %944 = vmatprep.subr.mxu0 0.0
  %945 = vmatpush1.msra.mxu0 0.0
  %946 = vmatprep.subr.mxu0 0.0
  %947 = vmatpush1.msra.mxu0 0.0
  %948 = vmatprep.subr.mxu0 0.0
  %949 = vmatpush1.msra.mxu0 0.0
  %950 = vmatprep.subr.mxu0 0.0
  %951 = vmatpush1.msra.mxu0 0.0
  %952 = vmatprep.subr.mxu0 0.0
  %953 = vmatpush1.msra.mxu0 0.0
  %954 = vmatprep.subr.mxu0 0.0
  %955 = vmatpush1.msra.mxu0 0.0
  %956 = vmatprep.subr.mxu0 0.0
  %957 = vmatpush1.msra.mxu0 0.0
  %958 = vmatprep.subr.mxu0 0.0
  %959 = vmatpush1.msra.mxu0 0.0
  %960 = vmatprep.subr.mxu0 0.0
  %961 = vmatpush1.msra.mxu0 0.0
  %962 = vmatprep.subr.mxu0 0.0
  %963 = vmatpush1.msra.mxu0 0.0
  %964 = vmatprep.subr.mxu0 0.0
  %965 = vmatpush1.msra.mxu0 0.0
  %966 = vmatprep.subr.mxu0 0.0
  %967 = vmatpush1.msra.mxu0 0.0
  %968 = vmatprep.subr.mxu0 0.0
  %969 = vmatpush1.msra.mxu0 0.0
  %970 = vmatprep.subr.mxu0 0.0
  %971 = vmatpush1.msra.mxu0 0.0
  %972 = vmatprep.subr.mxu0 0.0
  %973 = vmatpush1.msra.mxu0 0.0
  %974 = vmatprep.subr.mxu0 0.0
  %975 = vmatpush1.msra.mxu0 0.0
  %976 = vmatprep.subr.mxu0 0.0
  %977 = vmatpush1.msra.mxu0 0.0
  %978 = vmatprep.subr.mxu0 0.0
  %979 = vmatpush1.msra.mxu0 0.0
  %980 = vmatprep.subr.mxu0 0.0
  %981 = vmatpush1.msra.mxu0 0.0
  %982 = vmatprep.subr.mxu0 0.0
  %983 = vmatpush1.msra.mxu0 0.0
  %984 = vmatprep.subr.mxu0 0.0
  %985 = vmatpush1.msra.mxu0 0.0
  %986 = vmatprep.subr.mxu0 0.0
  %987 = vmatpush1.msra.mxu0 0.0
  %988 = vmatprep.subr.mxu0 0.0
  %989 = vmatpush1.msra.mxu0 0.0
  %990 = vmatprep.subr.mxu0 0.0
  %991 = vmatpush1.msra.mxu0 0.0
  %992 = vmatprep.subr.mxu0 0.0
  %993 = vmatpush1.msra.mxu0 0.0
  %994 = vmatprep.subr.mxu0 0.0
  %995 = vmatpush1.msra.mxu0 0.0
  %996 = vmatprep.subr.mxu0 0.0
  %997 = vmatpush1.msra.mxu0 0.0
  %998 = vmatprep.subr.mxu0 0.0
  %999 = vmatpush1.msra.mxu0 0.0
  %1000 = vmatprep.mubr.f32.mxu0 0.0
  %1001 = vmatmul.mubr.f32.gmra.mrb[0].mxu0 %v931
  %v1002 = vpop.f32.mrb[0].mxu0
  %v1003 = vadd.f32 0.0, %v1002
  %v1004 = vpop.f32.mrb[0].mxu0
  %1005 = vmatprep.mubr.f32.mxu0 0.0
  %1006 = vmatmul.mubr.f32.gmra.mrb[0].mxu0 %v934
  %v1007 = vpop.f32.mrb[0].mxu0
  %v1008 = vadd.f32 0.0, %v1007
  %v1009 = vpop.f32.mrb[0].mxu0
  %1010 = vdwg.mxu0
  %v1011 = vadd.f32 %v718, %v1003
  %v1012 = vadd.f32 %v723, %v1008
  %1013 = vrot.lane.b32.xlu0 %v147, 104
  %v1014 = vpop.permute.xlu0 %1013
  %1015 = vrot.lane.b32.xlu0 %v148, 104
  %v1016 = vpop.permute.xlu0 %1015
  %1017 = vrot.lane.b32.xlu0 %v156, 104
  %v1018 = vpop.permute.xlu0 %1017
  %1019 = vrot.lane.b32.xlu0 %v157, 104
  %v1020 = vpop.permute.xlu0 %1019
  %v1021 = vsel %vm160, %v1014, 0
  %v1023 = vsel %vm160, %v1016, 0
  %v1025 = vsel %vm160, %v1018, 0
  %v1027 = vsel %vm160, %v1020, 0
  %1029 = vmatprep.subr.mxu0 0.0
  %1030 = vmatpush1.xpose.msra.mxu0 %v1025
  %1031 = vmatprep.subr.mxu0 0.0
  %1032 = vmatpush1.xpose.msra.mxu0 %v1027
  %1033 = vmatprep.subr.mxu0 0.0
  %1034 = vmatpush1.xpose.msra.mxu0 0.0
  %1035 = vmatprep.subr.mxu0 0.0
  %1036 = vmatpush1.xpose.msra.mxu0 0.0
  %1037 = vmatprep.subr.mxu0 0.0
  %1038 = vmatpush1.xpose.msra.mxu0 0.0
  %1039 = vmatprep.subr.mxu0 0.0
  %1040 = vmatpush1.xpose.msra.mxu0 0.0
  %1041 = vmatprep.subr.mxu0 0.0
  %1042 = vmatpush1.xpose.msra.mxu0 0.0
  %1043 = vmatprep.subr.mxu0 0.0
  %1044 = vmatpush1.xpose.msra.mxu0 0.0
  %1045 = vmatprep.subr.mxu0 0.0
  %1046 = vmatpush1.xpose.msra.mxu0 0.0
  %1047 = vmatprep.subr.mxu0 0.0
  %1048 = vmatpush1.xpose.msra.mxu0 0.0
  %1049 = vmatprep.subr.mxu0 0.0
  %1050 = vmatpush1.xpose.msra.mxu0 0.0
  %1051 = vmatprep.subr.mxu0 0.0
  %1052 = vmatpush1.xpose.msra.mxu0 0.0
  %1053 = vmatprep.subr.mxu0 0.0
  %1054 = vmatpush1.xpose.msra.mxu0 0.0
  %1055 = vmatprep.subr.mxu0 0.0
  %1056 = vmatpush1.xpose.msra.mxu0 0.0
  %1057 = vmatprep.subr.mxu0 0.0
  %1058 = vmatpush1.xpose.msra.mxu0 0.0
  %1059 = vmatprep.subr.mxu0 0.0
  %1060 = vmatpush1.xpose.msra.mxu0 0.0
  %1061 = vmatprep.subr.mxu0 0.0
  %1062 = vmatpush1.xpose.msra.mxu0 0.0
  %1063 = vmatprep.subr.mxu0 0.0
  %1064 = vmatpush1.xpose.msra.mxu0 0.0
  %1065 = vmatprep.subr.mxu0 0.0
  %1066 = vmatpush1.xpose.msra.mxu0 0.0
  %1067 = vmatprep.subr.mxu0 0.0
  %1068 = vmatpush1.xpose.msra.mxu0 0.0
  %1069 = vmatprep.subr.mxu0 0.0
  %1070 = vmatpush1.xpose.msra.mxu0 0.0
  %1071 = vmatprep.subr.mxu0 0.0
  %1072 = vmatpush1.xpose.msra.mxu0 0.0
  %1073 = vmatprep.subr.mxu0 0.0
  %1074 = vmatpush1.xpose.msra.mxu0 0.0
  %1075 = vmatprep.subr.mxu0 0.0
  %1076 = vmatpush1.xpose.msra.mxu0 0.0
  %1077 = vmatprep.subr.mxu0 0.0
  %1078 = vmatpush1.xpose.msra.mxu0 0.0
  %1079 = vmatprep.subr.mxu0 0.0
  %1080 = vmatpush1.xpose.msra.mxu0 0.0
  %1081 = vmatprep.subr.mxu0 0.0
  %1082 = vmatpush1.xpose.msra.mxu0 0.0
  %1083 = vmatprep.subr.mxu0 0.0
  %1084 = vmatpush1.xpose.msra.mxu0 0.0
  %1085 = vmatprep.subr.mxu0 0.0
  %1086 = vmatpush1.xpose.msra.mxu0 0.0
  %1087 = vmatprep.subr.mxu0 0.0
  %1088 = vmatpush1.xpose.msra.mxu0 0.0
  %1089 = vmatprep.subr.mxu0 0.0
  %1090 = vmatpush1.xpose.msra.mxu0 0.0
  %1091 = vmatprep.subr.mxu0 0.0
  %1092 = vmatpush1.xpose.msra.mxu0 0.0
  %1093 = vmatprep.mubr.f32.mxu0 0.0
  %1094 = vmatmul.mubr.f32.gmra.mrb[0].mxu0 %v1021
  %v1095 = vpop.f32.mrb[0].mxu0
  %v1096 = vadd.f32 0.0, %v1095
  %v1097 = vpop.f32.mrb[0].mxu0
  %1098 = vmatprep.mubr.f32.mxu0 0.0
  %1099 = vmatmul.mubr.f32.gmra.mrb[0].mxu0 %v1023
  %v1100 = vpop.f32.mrb[0].mxu0
  %v1101 = vadd.f32 0.0, %v1100
  %v1102 = vpop.f32.mrb[0].mxu0
  %1103 = vdwg.mxu0
  %v1104 = vsel %vm249, %v1096, -1e+30
  %v1105 = vsel %vm249, %v1101, -1e+30
  %v1106 = vsel %vm252, %v1104, -inf
  %1107 = vmax.xlane.f32.xlu0 %v1106
  %v1108 = vpop.xlane.xlu0 %1107
  %v1109 = vsel %vm252, %v1105, -inf
  %1110 = vmax.xlane.f32.xlu0 %v1109
  %v1111 = vpop.xlane.xlu0 %1110
  %v1112 = vsub.f32 %v1104, %v1108
  %v1113 = vsub.f32 %v1105, %v1111
  %v1114 = vmul.f32 %v1112, 1.442695
  %v1115 = vpow.pop %v1114
  %v1116 = vmul.f32 %v1113, 1.442695
  %v1117 = vpow.pop %v1116
  %v1118 = vsel %vm252, %v1115, 0.0
  %1119 = vadd.xlane.f32.xlu0 %v1118
  %v1120 = vpop.xlane.xlu0 %1119
  %v1121 = vsel %vm252, %v1117, 0.0
  %1122 = vadd.xlane.f32.xlu0 %v1121
  %v1123 = vpop.xlane.xlu0 %1122
  %v1124 = vrcp.pop %v1120
  %v1125 = vmul.f32 1.0, %v1124
  %v1126 = vrcp.pop %v1123
  %v1127 = vmul.f32 1.0, %v1126
  %1128 = vrot.lane.b32.xlu0 %v158, 104
  %v1129 = vpop.permute.xlu0 %1128
  %1130 = vrot.lane.b32.xlu0 %v159, 104
  %v1131 = vpop.permute.xlu0 %1130
  %v1135 = vsel %vm252, %v1115, 0
  %v1138 = vsel %vm252, %v1117, 0
  %1140 = vmatprep.subr.mxu0 0.0
  %1141 = vmatpush1.msra.mxu0 %v1129
  %1142 = vmatprep.subr.mxu0 0.0
  %1143 = vmatpush1.msra.mxu0 %v1131
  %1144 = vmatprep.subr.mxu0 0.0
  %1145 = vmatpush1.msra.mxu0 0.0
  %1146 = vmatprep.subr.mxu0 0.0
  %1147 = vmatpush1.msra.mxu0 0.0
  %1148 = vmatprep.subr.mxu0 0.0
  %1149 = vmatpush1.msra.mxu0 0.0
  %1150 = vmatprep.subr.mxu0 0.0
  %1151 = vmatpush1.msra.mxu0 0.0
  %1152 = vmatprep.subr.mxu0 0.0
  %1153 = vmatpush1.msra.mxu0 0.0
  %1154 = vmatprep.subr.mxu0 0.0
  %1155 = vmatpush1.msra.mxu0 0.0
  %1156 = vmatprep.subr.mxu0 0.0
  %1157 = vmatpush1.msra.mxu0 0.0
  %1158 = vmatprep.subr.mxu0 0.0
  %1159 = vmatpush1.msra.mxu0 0.0
  %1160 = vmatprep.subr.mxu0 0.0
  %1161 = vmatpush1.msra.mxu0 0.0
  %1162 = vmatprep.subr.mxu0 0.0
  %1163 = vmatpush1.msra.mxu0 0.0
  %1164 = vmatprep.subr.mxu0 0.0
  %1165 = vmatpush1.msra.mxu0 0.0
  %1166 = vmatprep.subr.mxu0 0.0
  %1167 = vmatpush1.msra.mxu0 0.0
  %1168 = vmatprep.subr.mxu0 0.0
  %1169 = vmatpush1.msra.mxu0 0.0
  %1170 = vmatprep.subr.mxu0 0.0
  %1171 = vmatpush1.msra.mxu0 0.0
  %1172 = vmatprep.subr.mxu0 0.0
  %1173 = vmatpush1.msra.mxu0 0.0
  %1174 = vmatprep.subr.mxu0 0.0
  %1175 = vmatpush1.msra.mxu0 0.0
  %1176 = vmatprep.subr.mxu0 0.0
  %1177 = vmatpush1.msra.mxu0 0.0
  %1178 = vmatprep.subr.mxu0 0.0
  %1179 = vmatpush1.msra.mxu0 0.0
  %1180 = vmatprep.subr.mxu0 0.0
  %1181 = vmatpush1.msra.mxu0 0.0
  %1182 = vmatprep.subr.mxu0 0.0
  %1183 = vmatpush1.msra.mxu0 0.0
  %1184 = vmatprep.subr.mxu0 0.0
  %1185 = vmatpush1.msra.mxu0 0.0
  %1186 = vmatprep.subr.mxu0 0.0
  %1187 = vmatpush1.msra.mxu0 0.0
  %1188 = vmatprep.subr.mxu0 0.0
  %1189 = vmatpush1.msra.mxu0 0.0
  %1190 = vmatprep.subr.mxu0 0.0
  %1191 = vmatpush1.msra.mxu0 0.0
  %1192 = vmatprep.subr.mxu0 0.0
  %1193 = vmatpush1.msra.mxu0 0.0
  %1194 = vmatprep.subr.mxu0 0.0
  %1195 = vmatpush1.msra.mxu0 0.0
  %1196 = vmatprep.subr.mxu0 0.0
  %1197 = vmatpush1.msra.mxu0 0.0
  %1198 = vmatprep.subr.mxu0 0.0
  %1199 = vmatpush1.msra.mxu0 0.0
  %1200 = vmatprep.subr.mxu0 0.0
  %1201 = vmatpush1.msra.mxu0 0.0
  %1202 = vmatprep.subr.mxu0 0.0
  %1203 = vmatpush1.msra.mxu0 0.0
  %1204 = vmatprep.mubr.f32.mxu0 0.0
  %1205 = vmatmul.mubr.f32.gmra.mrb[0].mxu0 %v1135
  %v1206 = vpop.f32.mrb[0].mxu0
  %v1207 = vadd.f32 0.0, %v1206
  %v1208 = vpop.f32.mrb[0].mxu0
  %1209 = vmatprep.mubr.f32.mxu0 0.0
  %1210 = vmatmul.mubr.f32.gmra.mrb[0].mxu0 %v1138
  %v1211 = vpop.f32.mrb[0].mxu0
  %v1212 = vadd.f32 0.0, %v1211
  %v1213 = vpop.f32.mrb[0].mxu0
  %1214 = vdwg.mxu0
  %v1215 = vmul.f32 %v1207, %v1125
  %v1216 = vmul.f32 %v1212, %v1127
  %v1218 = vsel %vm160, %v1215, 0
  %v1221 = vsel %vm160, %v1216, 0
  %1223 = vmatprep.subr.mxu0 0.0
  %1224 = vmatpush1.msra.mxu0 %v155
  %1225 = vmatprep.subr.mxu0 0.0
  %1226 = vmatpush1.msra.mxu0 0.0
  %1227 = vmatprep.subr.mxu0 0.0
  %1228 = vmatpush1.msra.mxu0 0.0
  %1229 = vmatprep.subr.mxu0 0.0
  %1230 = vmatpush1.msra.mxu0 0.0
  %1231 = vmatprep.subr.mxu0 0.0
  %1232 = vmatpush1.msra.mxu0 0.0
  %1233 = vmatprep.subr.mxu0 0.0
  %1234 = vmatpush1.msra.mxu0 0.0
  %1235 = vmatprep.subr.mxu0 0.0
  %1236 = vmatpush1.msra.mxu0 0.0
  %1237 = vmatprep.subr.mxu0 0.0
  %1238 = vmatpush1.msra.mxu0 0.0
  %1239 = vmatprep.subr.mxu0 0.0
  %1240 = vmatpush1.msra.mxu0 0.0
  %1241 = vmatprep.subr.mxu0 0.0
  %1242 = vmatpush1.msra.mxu0 0.0
  %1243 = vmatprep.subr.mxu0 0.0
  %1244 = vmatpush1.msra.mxu0 0.0
  %1245 = vmatprep.subr.mxu0 0.0
  %1246 = vmatpush1.msra.mxu0 0.0
  %1247 = vmatprep.subr.mxu0 0.0
  %1248 = vmatpush1.msra.mxu0 0.0
  %1249 = vmatprep.subr.mxu0 0.0
  %1250 = vmatpush1.msra.mxu0 0.0
  %1251 = vmatprep.subr.mxu0 0.0
  %1252 = vmatpush1.msra.mxu0 0.0
  %1253 = vmatprep.subr.mxu0 0.0
  %1254 = vmatpush1.msra.mxu0 0.0
  %1255 = vmatprep.subr.mxu0 0.0
  %1256 = vmatpush1.msra.mxu0 0.0
  %1257 = vmatprep.subr.mxu0 0.0
  %1258 = vmatpush1.msra.mxu0 0.0
  %1259 = vmatprep.subr.mxu0 0.0
  %1260 = vmatpush1.msra.mxu0 0.0
  %1261 = vmatprep.subr.mxu0 0.0
  %1262 = vmatpush1.msra.mxu0 0.0
  %1263 = vmatprep.subr.mxu0 0.0
  %1264 = vmatpush1.msra.mxu0 0.0
  %1265 = vmatprep.subr.mxu0 0.0
  %1266 = vmatpush1.msra.mxu0 0.0
  %1267 = vmatprep.subr.mxu0 0.0
  %1268 = vmatpush1.msra.mxu0 0.0
  %1269 = vmatprep.subr.mxu0 0.0
  %1270 = vmatpush1.msra.mxu0 0.0
  %1271 = vmatprep.subr.mxu0 0.0
  %1272 = vmatpush1.msra.mxu0 0.0
  %1273 = vmatprep.subr.mxu0 0.0
  %1274 = vmatpush1.msra.mxu0 0.0
  %1275 = vmatprep.subr.mxu0 0.0
  %1276 = vmatpush1.msra.mxu0 0.0
  %1277 = vmatprep.subr.mxu0 0.0
  %1278 = vmatpush1.msra.mxu0 0.0
  %1279 = vmatprep.subr.mxu0 0.0
  %1280 = vmatpush1.msra.mxu0 0.0
  %1281 = vmatprep.subr.mxu0 0.0
  %1282 = vmatpush1.msra.mxu0 0.0
  %1283 = vmatprep.subr.mxu0 0.0
  %1284 = vmatpush1.msra.mxu0 0.0
  %1285 = vmatprep.subr.mxu0 0.0
  %1286 = vmatpush1.msra.mxu0 0.0
  %1287 = vmatprep.mubr.f32.mxu0 0.0
  %1288 = vmatmul.mubr.f32.gmra.mrb[0].mxu0 %v1218
  %v1289 = vpop.f32.mrb[0].mxu0
  %v1290 = vadd.f32 0.0, %v1289
  %v1291 = vpop.f32.mrb[0].mxu0
  %1292 = vmatprep.mubr.f32.mxu0 0.0
  %1293 = vmatmul.mubr.f32.gmra.mrb[0].mxu0 %v1221
  %v1294 = vpop.f32.mrb[0].mxu0
  %v1295 = vadd.f32 0.0, %v1294
  %v1296 = vpop.f32.mrb[0].mxu0
  %1297 = vdwg.mxu0
  %v1298 = vadd.f32 %v1011, %v1290
  %v1299 = vadd.f32 %v1012, %v1295
  %v1300 = vld [vmem:[%s6] sm:$0x1]
  %v1302 = vlaneseq
  %v1303 = vshrl.u32 %v1302, 7
  %v1304 = vsub.s32 0, %v1303
  %v1305 = vrot.slane %v1300, %v1304
  %v1307 = vadd.f32 %v1298, %v1305
  %v1308 = vadd.f32 %v1299, %v1305
  %v1309 = vadd.f32 %v52, %v1307
  %v1310 = vadd.f32 %v53, %v1308
  %v1311 = vld [vmem:[%s7] sm:$0x1]
  %v1312 = vld [vmem:[%s8] sm:$0x1]
  %v1313 = vsel %vm65, %v1309, 0.0
  %1314 = vadd.xlane.f32.xlu0 %v1313
  %v1315 = vpop.xlane.xlu0 %1314
  %v1316 = vsel %vm65, %v1310, 0.0
  %1317 = vadd.xlane.f32.xlu0 %v1316
  %v1318 = vpop.xlane.xlu0 %1317
  %v1319 = vrcp.pop 32.0
  %v1320 = vmul.f32 %v1315, %v1319
  %v1321 = vmul.f32 %v1318, %v1319
  %v1322 = vsub.f32 %v1309, %v1320
  %v1323 = vsub.f32 %v1310, %v1321
  %v1324 = vmul.f32 %v1322, %v1322
  %v1325 = vmul.f32 %v1323, %v1323
  %v1326 = vsel %vm65, %v1324, 0.0
  %1327 = vadd.xlane.f32.xlu0 %v1326
  %v1328 = vpop.xlane.xlu0 %1327
  %v1329 = vsel %vm65, %v1325, 0.0
  %1330 = vadd.xlane.f32.xlu0 %v1329
  %v1331 = vpop.xlane.xlu0 %1330
  %v1332 = vmul.f32 %v1328, %v1319
  %v1333 = vmul.f32 %v1331, %v1319
  %v1334 = vadd.f32 %v1332, 1e-05
  %v1335 = vadd.f32 %v1333, 1e-05
  %v1336 = vrsqrt.pop %v1334
  %v1337 = vrsqrt.pop %v1335
  %v1338 = vmul.f32 %v1322, %v1336
  %v1339 = vmul.f32 %v1323, %v1337
  %v1341 = vlaneseq
  %v1342 = vshrl.u32 %v1341, 7
  %v1343 = vsub.s32 0, %v1342
  %v1344 = vrot.slane %v1311, %v1343
  %v1346 = vmul.f32 %v1338, %v1344
  %v1347 = vmul.f32 %v1339, %v1344
  %v1349 = vlaneseq
  %v1350 = vshrl.u32 %v1349, 7
  %v1351 = vsub.s32 0, %v1350
  %v1352 = vrot.slane %v1312, %v1351
  %v1354 = vadd.f32 %v1346, %v1352
  %v1355 = vadd.f32 %v1347, %v1352
  %v1356 = vld [vmem:[%s9] sm:$0xff]
  %v1357 = vld [vmem:[%s9 + $0x8] sm:$0xff]
  %v1358 = vld [vmem:[%s9 + $0x10] sm:$0xff]
  %v1359 = vld [vmem:[%s9 + $0x18] sm:$0xff]
  %v1360 = vld [vmem:[%s10] sm:$0x1]
  %v1362 = vlaneseq
  %v1363 = vshrl.u32 %v1362, 7
  %v1364 = vsub.s32 0, %v1363
  %v1365 = vrot.slane %v1360, %v1364
  %v1368 = vsel %vm65, %v1354, 0
  %v1371 = vsel %vm65, %v1355, 0
  %1373 = vmatprep.subr.mxu0 0.0
  %1374 = vmatpush1.msra.mxu0 %v1356
  %1375 = vmatprep.subr.mxu0 0.0
  %1376 = vmatpush1.msra.mxu0 %v1357
  %1377 = vmatprep.subr.mxu0 0.0
  %1378 = vmatpush1.msra.mxu0 %v1358
  %1379 = vmatprep.subr.mxu0 0.0
  %1380 = vmatpush1.msra.mxu0 %v1359
  %1381 = vmatprep.subr.mxu0 0.0
  %1382 = vmatpush1.msra.mxu0 0.0
  %1383 = vmatprep.subr.mxu0 0.0
  %1384 = vmatpush1.msra.mxu0 0.0
  %1385 = vmatprep.subr.mxu0 0.0
  %1386 = vmatpush1.msra.mxu0 0.0
  %1387 = vmatprep.subr.mxu0 0.0
  %1388 = vmatpush1.msra.mxu0 0.0
  %1389 = vmatprep.subr.mxu0 0.0
  %1390 = vmatpush1.msra.mxu0 0.0
  %1391 = vmatprep.subr.mxu0 0.0
  %1392 = vmatpush1.msra.mxu0 0.0
  %1393 = vmatprep.subr.mxu0 0.0
  %1394 = vmatpush1.msra.mxu0 0.0
  %1395 = vmatprep.subr.mxu0 0.0
  %1396 = vmatpush1.msra.mxu0 0.0
  %1397 = vmatprep.subr.mxu0 0.0
  %1398 = vmatpush1.msra.mxu0 0.0
  %1399 = vmatprep.subr.mxu0 0.0
  %1400 = vmatpush1.msra.mxu0 0.0
  %1401 = vmatprep.subr.mxu0 0.0
  %1402 = vmatpush1.msra.mxu0 0.0
  %1403 = vmatprep.subr.mxu0 0.0
  %1404 = vmatpush1.msra.mxu0 0.0
  %1405 = vmatprep.subr.mxu0 0.0
  %1406 = vmatpush1.msra.mxu0 0.0
  %1407 = vmatprep.subr.mxu0 0.0
  %1408 = vmatpush1.msra.mxu0 0.0
  %1409 = vmatprep.subr.mxu0 0.0
  %1410 = vmatpush1.msra.mxu0 0.0
  %1411 = vmatprep.subr.mxu0 0.0
  %1412 = vmatpush1.msra.mxu0 0.0
  %1413 = vmatprep.subr.mxu0 0.0
  %1414 = vmatpush1.msra.mxu0 0.0
  %1415 = vmatprep.subr.mxu0 0.0
  %1416 = vmatpush1.msra.mxu0 0.0
  %1417 = vmatprep.subr.mxu0 0.0
  %1418 = vmatpush1.msra.mxu0 0.0
  %1419 = vmatprep.subr.mxu0 0.0
  %1420 = vmatpush1.msra.mxu0 0.0
  %1421 = vmatprep.subr.mxu0 0.0
  %1422 = vmatpush1.msra.mxu0 0.0
  %1423 = vmatprep.subr.mxu0 0.0
  %1424 = vmatpush1.msra.mxu0 0.0
  %1425 = vmatprep.subr.mxu0 0.0
  %1426 = vmatpush1.msra.mxu0 0.0
  %1427 = vmatprep.subr.mxu0 0.0
  %1428 = vmatpush1.msra.mxu0 0.0
  %1429 = vmatprep.subr.mxu0 0.0
  %1430 = vmatpush1.msra.mxu0 0.0
  %1431 = vmatprep.subr.mxu0 0.0
  %1432 = vmatpush1.msra.mxu0 0.0
  %1433 = vmatprep.subr.mxu0 0.0
  %1434 = vmatpush1.msra.mxu0 0.0
  %1435 = vmatprep.subr.mxu0 0.0
  %1436 = vmatpush1.msra.mxu0 0.0
  %1437 = vmatprep.mubr.f32.mxu0 0.0
  %1438 = vmatmul.mubr.f32.gmra.mrb[0].mxu0 %v1368
  %v1439 = vpop.f32.mrb[0].mxu0
  %v1440 = vadd.f32 %v1365, %v1439
  %v1441 = vpop.f32.mrb[0].mxu0
  %1442 = vmatprep.mubr.f32.mxu0 0.0
  %1443 = vmatmul.mubr.f32.gmra.mrb[0].mxu0 %v1371
  %v1444 = vpop.f32.mrb[0].mxu0
  %v1445 = vadd.f32 %v1365, %v1444
  %v1446 = vpop.f32.mrb[0].mxu0
  %1447 = vdwg.mxu0
  %v1448 = vmul.f32 %v1440, 0.5
  %v1449 = vmul.f32 %v1445, 0.5
  %v1450 = vmul.f32 %v1440, 0.70710677
  %v1451 = vmul.f32 %v1445, 0.70710677
  %vm1452 = vcmp.ge.f32.partialorder %v1450, 0.0
  %vm1453 = vcmp.ge.f32.partialorder %v1451, 0.0
  %v1454 = vsel %vm1452, 1.0, -1.0
  %v1455 = vsel %vm1453, 1.0, -1.0
  %v1456 = vand.u32 2147483647, %v1450
  %v1457 = vand.u32 2147483647, %v1451
  %v1458 = vmul.f32 %v1456, 0.3275911
  %v1459 = vmul.f32 %v1457, 0.3275911
  %v1460 = vadd.f32 %v1458, 1.0
  %v1461 = vadd.f32 %v1459, 1.0
  %v1462 = vrcp.pop %v1460
  %v1463 = vmul.f32 1.0, %v1462
  %v1464 = vrcp.pop %v1461
  %v1465 = vmul.f32 1.0, %v1464
  %v1466 = vmul.f32 %v1463, 1.0614054
  %v1467 = vmul.f32 %v1465, 1.0614054
  %v1468 = vadd.f32 %v1466, -1.4531521
  %v1469 = vadd.f32 %v1467, -1.4531521
  %v1470 = vmul.f32 %v1468, %v1463
  %v1471 = vmul.f32 %v1469, %v1465
  %v1472 = vadd.f32 %v1470, 1.4214138
  %v1473 = vadd.f32 %v1471, 1.4214138
  %v1474 = vmul.f32 %v1472, %v1463
  %v1475 = vmul.f32 %v1473, %v1465
  %v1476 = vadd.f32 %v1474, -0.28449672
  %v1477 = vadd.f32 %v1475, -0.28449672
  %v1478 = vmul.f32 %v1476, %v1463
  %v1479 = vmul.f32 %v1477, %v1465
  %v1480 = vadd.f32 %v1478, 0.2548296
  %v1481 = vadd.f32 %v1479, 0.2548296
  %v1482 = vmul.f32 %v1480, %v1463
  %v1483 = vmul.f32 %v1481, %v1465
  %v1484 = vsub.f32 0.0, %v1456
  %v1485 = vsub.f32 0.0, %v1457
  %v1486 = vmul.f32 %v1484, %v1456
  %v1487 = vmul.f32 %v1485, %v1457
  %v1488 = vmul.f32 %v1486, 1.442695
  %v1489 = vpow.pop %v1488
  %v1490 = vmul.f32 %v1487, 1.442695
  %v1491 = vpow.pop %v1490
  %v1492 = vmul.f32 %v1482, %v1489
  %v1493 = vmul.f32 %v1483, %v1491
  %v1494 = vsub.f32 1.0, %v1492
  %v1495 = vsub.f32 1.0, %v1493
  %v1496 = vmul.f32 %v1454, %v1494
  %v1497 = vmul.f32 %v1455, %v1495
  %v1498 = vadd.f32 %v1496, 1.0
  %v1499 = vadd.f32 %v1497, 1.0
  %v1500 = vmul.f32 %v1448, %v1498
  %v1501 = vmul.f32 %v1449, %v1499
  %v1502 = vld [vmem:[%s11] sm:$0xff]
  %v1503 = vld [vmem:[%s11 + $0x8] sm:$0xff]
  %v1504 = vld [vmem:[%s11 + $0x10] sm:$0xff]
  %v1505 = vld [vmem:[%s11 + $0x18] sm:$0xff]
  %v1506 = vld [vmem:[%s12] sm:$0x1]
  %v1508 = vlaneseq
  %v1509 = vshrl.u32 %v1508, 7
  %v1510 = vsub.s32 0, %v1509
  %v1511 = vrot.slane %v1506, %v1510
  %v1514 = vsel %vm65, %v1500, 0
  %v1517 = vsel %vm65, %v1501, 0
  %1519 = vmatprep.subr.mxu0 0.0
  %1520 = vmatpush1.msra.mxu0 %v1502
  %1521 = vmatprep.subr.mxu0 0.0
  %1522 = vmatpush1.msra.mxu0 %v1503
  %1523 = vmatprep.subr.mxu0 0.0
  %1524 = vmatpush1.msra.mxu0 %v1504
  %1525 = vmatprep.subr.mxu0 0.0
  %1526 = vmatpush1.msra.mxu0 %v1505
  %1527 = vmatprep.subr.mxu0 0.0
  %1528 = vmatpush1.msra.mxu0 0.0
  %1529 = vmatprep.subr.mxu0 0.0
  %1530 = vmatpush1.msra.mxu0 0.0
  %1531 = vmatprep.subr.mxu0 0.0
  %1532 = vmatpush1.msra.mxu0 0.0
  %1533 = vmatprep.subr.mxu0 0.0
  %1534 = vmatpush1.msra.mxu0 0.0
  %1535 = vmatprep.subr.mxu0 0.0
  %1536 = vmatpush1.msra.mxu0 0.0
  %1537 = vmatprep.subr.mxu0 0.0
  %1538 = vmatpush1.msra.mxu0 0.0
  %1539 = vmatprep.subr.mxu0 0.0
  %1540 = vmatpush1.msra.mxu0 0.0
  %1541 = vmatprep.subr.mxu0 0.0
  %1542 = vmatpush1.msra.mxu0 0.0
  %1543 = vmatprep.subr.mxu0 0.0
  %1544 = vmatpush1.msra.mxu0 0.0
  %1545 = vmatprep.subr.mxu0 0.0
  %1546 = vmatpush1.msra.mxu0 0.0
  %1547 = vmatprep.subr.mxu0 0.0
  %1548 = vmatpush1.msra.mxu0 0.0
  %1549 = vmatprep.subr.mxu0 0.0
  %1550 = vmatpush1.msra.mxu0 0.0
  %1551 = vmatprep.subr.mxu0 0.0
  %1552 = vmatpush1.msra.mxu0 0.0
  %1553 = vmatprep.subr.mxu0 0.0
  %1554 = vmatpush1.msra.mxu0 0.0
  %1555 = vmatprep.subr.mxu0 0.0
  %1556 = vmatpush1.msra.mxu0 0.0
  %1557 = vmatprep.subr.mxu0 0.0
  %1558 = vmatpush1.msra.mxu0 0.0
  %1559 = vmatprep.subr.mxu0 0.0
  %1560 = vmatpush1.msra.mxu0 0.0
  %1561 = vmatprep.subr.mxu0 0.0
  %1562 = vmatpush1.msra.mxu0 0.0
  %1563 = vmatprep.subr.mxu0 0.0
  %1564 = vmatpush1.msra.mxu0 0.0
  %1565 = vmatprep.subr.mxu0 0.0
  %1566 = vmatpush1.msra.mxu0 0.0
  %1567 = vmatprep.subr.mxu0 0.0
  %1568 = vmatpush1.msra.mxu0 0.0
  %1569 = vmatprep.subr.mxu0 0.0
  %1570 = vmatpush1.msra.mxu0 0.0
  %1571 = vmatprep.subr.mxu0 0.0
  %1572 = vmatpush1.msra.mxu0 0.0
  %1573 = vmatprep.subr.mxu0 0.0
  %1574 = vmatpush1.msra.mxu0 0.0
  %1575 = vmatprep.subr.mxu0 0.0
  %1576 = vmatpush1.msra.mxu0 0.0
  %1577 = vmatprep.subr.mxu0 0.0
  %1578 = vmatpush1.msra.mxu0 0.0
  %1579 = vmatprep.subr.mxu0 0.0
  %1580 = vmatpush1.msra.mxu0 0.0
  %1581 = vmatprep.subr.mxu0 0.0
  %1582 = vmatpush1.msra.mxu0 0.0
  %1583 = vmatprep.mubr.f32.mxu0 0.0
  %1584 = vmatmul.mubr.f32.gmra.mrb[0].mxu0 %v1514
  %v1585 = vpop.f32.mrb[0].mxu0
  %v1586 = vadd.f32 %v1511, %v1585
  %v1587 = vpop.f32.mrb[0].mxu0
  %1588 = vmatprep.mubr.f32.mxu0 0.0
  %1589 = vmatmul.mubr.f32.gmra.mrb[0].mxu0 %v1517
  %v1590 = vpop.f32.mrb[0].mxu0
  %v1591 = vadd.f32 %v1511, %v1590
  %v1592 = vpop.f32.mrb[0].mxu0
  %1593 = vdwg.mxu0
  %v1594 = vadd.f32 %v1354, %v1586
  %v1595 = vadd.f32 %v1355, %v1591
  %v1596 = vld [vmem:[%s13] sm:$0x1]
  %v1597 = vld [vmem:[%s14] sm:$0x1]
  %v1598 = vsel %vm65, %v1594, 0.0
  %1599 = vadd.xlane.f32.xlu0 %v1598
  %v1600 = vpop.xlane.xlu0 %1599
  %v1601 = vsel %vm65, %v1595, 0.0
  %1602 = vadd.xlane.f32.xlu0 %v1601
  %v1603 = vpop.xlane.xlu0 %1602
  %v1604 = vmul.f32 %v1600, %v1319
  %v1605 = vmul.f32 %v1603, %v1319
  %v1606 = vsub.f32 %v1594, %v1604
  %v1607 = vsub.f32 %v1595, %v1605
  %v1608 = vmul.f32 %v1606, %v1606
  %v1609 = vmul.f32 %v1607, %v1607
  %v1610 = vsel %vm65, %v1608, 0.0
  %1611 = vadd.xlane.f32.xlu0 %v1610
  %v1612 = vpop.xlane.xlu0 %1611
  %v1613 = vsel %vm65, %v1609, 0.0
  %1614 = vadd.xlane.f32.xlu0 %v1613
  %v1615 = vpop.xlane.xlu0 %1614
  %v1616 = vmul.f32 %v1612, %v1319
  %v1617 = vmul.f32 %v1615, %v1319
  %v1618 = vadd.f32 %v1616, 1e-05
  %v1619 = vadd.f32 %v1617, 1e-05
  %v1620 = vrsqrt.pop %v1618
  %v1621 = vrsqrt.pop %v1619
  %v1622 = vmul.f32 %v1606, %v1620
  %v1623 = vmul.f32 %v1607, %v1621
  %v1625 = vlaneseq
  %v1626 = vshrl.u32 %v1625, 7
  %v1627 = vsub.s32 0, %v1626
  %v1628 = vrot.slane %v1596, %v1627
  %v1630 = vmul.f32 %v1622, %v1628
  %v1631 = vmul.f32 %v1623, %v1628
  %v1633 = vlaneseq
  %v1634 = vshrl.u32 %v1633, 7
  %v1635 = vsub.s32 0, %v1634
  %v1636 = vrot.slane %v1597, %v1635
  %v1638 = vadd.f32 %v1630, %v1636
  %v1639 = vadd.f32 %v1631, %v1636
  %1640 = vst.msk [vmem:[%s15] sm:$0xff] %vm65, %v1638
  %1641 = vst.msk [vmem:[%s15 + $0x8] sm:$0xff] %vm65, %v1639
  // Predicated region
  $region62: #{_lambda_.5} parent=0 // pred_check
    _
  $region63: #{_lambda_.5} parent=0 // pred_check_branch
    %1643 = sbr.rel (0) target = $region65
  $region64: #{_lambda_.5} parent=0 // pred_region
    _
  $region65: #{_lambda_.5} parent=0 // pred_fallthru
    _
  // Predicated region
  $region66: #{_lambda_.5} parent=0 // pred_check
    _
  $region67: #{_lambda_.5} parent=0 // pred_check_branch
    %1645 = sbr.rel (0) target = $region69
  $region68: #{_lambda_.5} parent=0 // pred_region
    _
  $region69: #{_lambda_.5} parent=0 // pred_fallthru
    _

</llo_original>
